<compile_context>
chip_gen: v7x
topology: tpu7x:2x2x1
jax: 0.10.0
libtpu: 0.0.40
codegen_flags: <defaults>
</compile_context>

<pallas_src>
import functools

import jax
import jax.numpy as jnp
from jax.experimental import pallas as pl
from jax.experimental.pallas import tpu as pltpu

BN_EPS = 1e-5
_VMEM_LIMIT = 48 * 1024 * 1024     # requested scoped-VMEM ceiling (safe on v5e/v6e/v7x)
_VMEM_BUDGET = 24 * 1024 * 1024    # what we let our tiles use (double-buffer aware)


def _round_up(x, m):
    return (x + m - 1) // m * m


# ----------------------------------------------------------------------------
# Pallas kernels:  y = [tanh]( (X @ W) * scale + shift ),  bf16 in / f32 acc.
# ----------------------------------------------------------------------------
def _mm_epilogue_kernel(x_ref, w_ref, scale_ref, shift_ref, o_ref, *, post_tanh):
    # Single-K-block path: no accumulator scratch, no init/finalize control flow.
    y = jnp.dot(x_ref[...], w_ref[...], preferred_element_type=jnp.float32)
    y = y * scale_ref[...] + shift_ref[...]
    if post_tanh:
        y = jnp.tanh(y)
    o_ref[...] = y.astype(o_ref.dtype)


def _mm_accum_kernel(x_ref, w_ref, scale_ref, shift_ref, o_ref, acc_ref, *, post_tanh):
    # Fallback for very large K: reduction grid axis + f32 VMEM accumulator.
    k = pl.program_id(1)

    @pl.when(k == 0)
    def _():
        acc_ref[...] = jnp.zeros_like(acc_ref)

    acc_ref[...] += jnp.dot(x_ref[...], w_ref[...],
                            preferred_element_type=jnp.float32)

    @pl.when(k == pl.num_programs(1) - 1)
    def _():
        y = acc_ref[...] * scale_ref[...] + shift_ref[...]
        if post_tanh:
            y = jnp.tanh(y)
        o_ref[...] = y.astype(o_ref.dtype)


def _pick_tm(m):
    if m >= 1024:
        return 512
    if m >= 512:
        return 256           # >= 2 M-blocks so both v7x TensorCores get work
    if m >= 128:
        return 128
    return _round_up(max(m, 1), 8)


def fused_matmul(x, w, scale, shift, *, post_tanh=False):
    """(M, K) @ (K, N) on the MXU with fused per-column affine (+ optional tanh).

    x / w are cast to bf16 (f32 accumulation); scale/shift/output stay f32.
    """
    M, K = x.shape
    K2, N = w.shape
    assert K == K2
    Np = _round_up(N, 128)           # single lane-dense output block; N never tiled
    tm = _pick_tm(M)
    Mp = _round_up(M, tm)

    def vmem_est(tk_):               # 2x for double buffering, f32 out + acc
        return (2 * tm * tk_ * 2 + 2 * tk_ * Np * 2
                + 3 * tm * Np * 4 + 4 * Np * 4)

    if vmem_est(K) <= _VMEM_BUDGET:
        tk, Kp = K, K                # full-K block: no K padding, no reduction grid
    else:
        tk = 1024
        while tk > 128 and vmem_est(tk) > _VMEM_BUDGET:
            tk //= 2
        Kp = _round_up(K, tk)

    xb = x.astype(jnp.bfloat16)
    wb = w.astype(jnp.bfloat16)
    if (Mp, Kp) != (M, K):
        xb = jnp.pad(xb, ((0, Mp - M), (0, Kp - K)))
    if (Kp, Np) != (K, N):
        wb = jnp.pad(wb, ((0, Kp - K), (0, Np - N)))
    sc = jnp.pad(scale.astype(jnp.float32).reshape(1, N), ((0, 0), (0, Np - N)))
    sh = jnp.pad(shift.astype(jnp.float32).reshape(1, N), ((0, 0), (0, Np - N)))

    nm, nk = Mp // tm, Kp // tk

    if nk == 1:
        out = pl.pallas_call(
            functools.partial(_mm_epilogue_kernel, post_tanh=post_tanh),
            out_shape=jax.ShapeDtypeStruct((Mp, Np), jnp.float32),
            grid_spec=pltpu.PrefetchScalarGridSpec(
                num_scalar_prefetch=0,
                grid=(nm,),
                in_specs=[
                    pl.BlockSpec((tm, Kp), lambda i: (i, 0)),
                    pl.BlockSpec((Kp, Np), lambda i: (0, 0)),   # weight resident
                    pl.BlockSpec((1, Np), lambda i: (0, 0)),    # scale resident
                    pl.BlockSpec((1, Np), lambda i: (0, 0)),    # shift resident
                ],
                out_specs=pl.BlockSpec((tm, Np), lambda i: (i, 0)),
            ),
            compiler_params=pltpu.CompilerParams(
                dimension_semantics=("parallel",),
                vmem_limit_bytes=_VMEM_LIMIT),
        )(xb, wb, sc, sh)
    else:
        out = pl.pallas_call(
            functools.partial(_mm_accum_kernel, post_tanh=post_tanh),
            out_shape=jax.ShapeDtypeStruct((Mp, Np), jnp.float32),
            grid_spec=pltpu.PrefetchScalarGridSpec(
                num_scalar_prefetch=0,
                grid=(nm, nk),
                in_specs=[
                    pl.BlockSpec((tm, tk), lambda i, k: (i, k)),
                    pl.BlockSpec((tk, Np), lambda i, k: (k, 0)),
                    pl.BlockSpec((1, Np), lambda i, k: (0, 0)),
                    pl.BlockSpec((1, Np), lambda i, k: (0, 0)),
                ],
                out_specs=pl.BlockSpec((tm, Np), lambda i, k: (i, 0)),
                scratch_shapes=[pltpu.VMEM((tm, Np), jnp.float32)],
            ),
            compiler_params=pltpu.CompilerParams(
                dimension_semantics=("parallel", "arbitrary"),
                vmem_limit_bytes=_VMEM_LIMIT),
        )(xb, wb, sc, sh)

    if (Mp, Np) != (M, N):
        out = out[:M, :N]
    return out


# ----------------------------------------------------------------------------
# Conv / Deconv wrappers (bf16 im2col glue + fused Pallas matmul)
# ----------------------------------------------------------------------------
def _affine(out_ch, bias=None, bn=None):
    """Fold conv bias + eval-mode BatchNorm (running mean 0, var 1) into scale/shift."""
    if bn is not None:
        gamma, beta = bn
        scale = gamma / jnp.sqrt(1.0 + BN_EPS)
        shift = beta + (scale * bias if bias is not None else 0.0)
    else:
        scale = jnp.ones((out_ch,), jnp.float32)
        shift = bias if bias is not None else jnp.zeros((out_ch,), jnp.float32)
    return scale, shift


def conv_down(x, w, bias, bn, pre_act):
    """Conv2d(k=4, s=2, p=1).  x: (N,H,W,Cin) NHWC f32, w: (Cout,Cin,4,4) torch layout."""
    n, h, wd, cin = x.shape
    cout = w.shape[0]
    ho, wo = h // 2, wd // 2
    if pre_act == "lrelu":                        # block's LeakyReLU(0.2) on its input
        x = jnp.where(x > 0, x, 0.2 * x)
    xp = jnp.pad(x.astype(jnp.bfloat16), ((0, 0), (1, 1), (1, 1), (0, 0)))
    cols = []
    for ky in range(4):
        for kx in range(4):
            cols.append(xp[:, ky:ky + 2 * ho:2, kx:kx + 2 * wo:2, :])
    patches = jnp.concatenate(cols, axis=-1).reshape(n * ho * wo, 16 * cin)
    w_mat = jnp.transpose(w, (2, 3, 1, 0)).reshape(16 * cin, cout)
    scale, shift = _affine(cout, bias, bn)
    y = fused_matmul(patches, w_mat, scale, shift)
    return y.reshape(n, ho, wo, cout)


def deconv_up(parts, w, bias, bn, post_tanh):
    """ConvTranspose2d(k=4, s=2, p=1) with fused ReLU pre-activation.

    parts: list of NHWC f32 maps whose channel concat is the layer input (the
    skip connection is fused here instead of materializing jnp.concatenate).
    w: (Cin_total, Cout, 4, 4) torch layout.

    Sub-pixel decomposition: output parity (oy%2, ox%2) only receives
    contributions from a 2x2 subset of the 4x4 kernel, so we run 4 small
    matmuls (K = 4*Cin) instead of one 16*Cin matmul over a 75%-zero
    dilated input.
    """
    n, h, wd = parts[0].shape[:3]
    cin = sum(p.shape[-1] for p in parts)
    cout = w.shape[1]
    padded = [jnp.pad(jnp.maximum(p, 0.0).astype(jnp.bfloat16),
                      ((0, 0), (1, 1), (1, 1), (0, 0))) for p in parts]
    scale, shift = _affine(cout, bias, bn)

    phase_outs = []
    for py in range(2):
        for px in range(2):
            cols, wrows = [], []
            for r in range(2):
                for s in range(2):
                    for p in padded:
                        cols.append(p[:, py + r:py + r + h, px + s:px + s + wd, :])
                    ky, kx = 3 - py - 2 * r, 3 - px - 2 * s
                    wrows.append(w[:, :, ky, kx])               # (Cin_total, Cout)
            patches = jnp.concatenate(cols, axis=-1).reshape(n * h * wd, 4 * cin)
            w_mat = jnp.concatenate(wrows, axis=0)              # (4*Cin_total, Cout)
            y = fused_matmul(patches, w_mat, scale, shift, post_tanh=post_tanh)
            phase_outs.append(y.reshape(n, h, wd, cout))

    # out[:, 2*by+py, 2*bx+px, :] = phase(py, px)
    ph = jnp.stack(phase_outs, axis=0).reshape(2, 2, n, h, wd, cout)
    return jnp.transpose(ph, (2, 3, 0, 4, 1, 5)).reshape(n, 2 * h, 2 * wd, cout)


# ----------------------------------------------------------------------------
# UnetGenerator parameters + forward
# ----------------------------------------------------------------------------
def build_params(key, in_channels, out_channels, num_down, base_channels):
    """Deterministic 'normal' init (gain=0.02), mirroring generation_init_weights."""
    b = base_channels
    cfgs = [dict(in_ch=in_channels, inner=b, outer=out_channels,
                 outermost=True, innermost=False),
            dict(in_ch=b, inner=b * 2, outer=b, outermost=False, innermost=False),
            dict(in_ch=b * 2, inner=b * 4, outer=b * 2, outermost=False, innermost=False),
            dict(in_ch=b * 4, inner=b * 8, outer=b * 4, outermost=False, innermost=False)]
    for _ in range(num_down - 5):
        cfgs.append(dict(in_ch=b * 8, inner=b * 8, outer=b * 8,
                         outermost=False, innermost=False))
    cfgs.append(dict(in_ch=b * 8, inner=b * 8, outer=b * 8,
                     outermost=False, innermost=True))

    params = []
    for cfg in cfgs:
        key, k1, k2, k3, k4 = jax.random.split(key, 5)
        inner, outer, in_ch = cfg["inner"], cfg["outer"], cfg["in_ch"]
        down_w = 0.02 * jax.random.normal(k1, (inner, in_ch, 4, 4), jnp.float32)
        down_bn = None
        if not (cfg["outermost"] or cfg["innermost"]):
            down_bn = (1.0 + 0.02 * jax.random.normal(k2, (inner,), jnp.float32),
                       jnp.zeros((inner,), jnp.float32))
        up_in = inner if cfg["innermost"] else inner * 2
        up_w = 0.02 * jax.random.normal(k3, (up_in, outer, 4, 4), jnp.float32)
        up_b = jnp.zeros((outer,), jnp.float32) if cfg["outermost"] else None
        up_bn = None
        if not cfg["outermost"]:
            up_bn = (1.0 + 0.02 * jax.random.normal(k4, (outer,), jnp.float32),
                     jnp.zeros((outer,), jnp.float32))
        params.append(dict(cfg=cfg, down_w=down_w, down_bn=down_bn,
                           up_w=up_w, up_b=up_b, up_bn=up_bn))
    return params


def unet_generator_forward(x_nchw, params):
    """Forward of UnetGenerator.  x_nchw: (N, C, H, W).  Returns (N, out_C, H, W)."""
    h = jnp.transpose(x_nchw, (0, 2, 3, 1)).astype(jnp.float32)   # NHWC

    # Down path (outermost -> innermost).  ConvModule order is (act, conv, norm),
    # so each block's LeakyReLU(0.2) is applied to its input, fused into the
    # patch build (elementwise, so pre-im2col == post-im2col).
    skips = []
    for p in params:
        skips.append(h)
        pre = None if p["cfg"]["outermost"] else "lrelu"
        h = conv_down(h, p["down_w"], None, p["down_bn"], pre)

    # Up path (innermost -> outermost).  The skip concat [x, up(x)] is fused
    # into the next deconv's reduction (no materialized concatenated map).
    parts = [h]
    for p, skip in zip(reversed(params), reversed(skips)):
        outermost = p["cfg"]["outermost"]
        h = deconv_up(parts, p["up_w"], p["up_b"], p["up_bn"], post_tanh=outermost)
        parts = [h] if outermost else [skip, h]

    return jnp.transpose(h, (0, 3, 1, 2))                          # back to NCHW


# ----------------------------------------------------------------------------
if __name__ == "__main__":
    key = jax.random.PRNGKey(0)
    k_param, k_x = jax.random.split(key)

    # Small config consistent with the module: num_down=5 -> a 32x32 input
    # reaches a 1x1 bottleneck; base_channels=8 keeps it tiny.
    in_channels, out_channels, num_down, base_channels = 3, 3, 5, 8
    params = build_params(k_param, in_channels, out_channels, num_down, base_channels)

    x = jax.random.normal(k_x, (2, in_channels, 32, 32), jnp.float32)

    fwd = jax.jit(lambda inp: unet_generator_forward(inp, params))
    y = jax.block_until_ready(fwd(x))

    assert y.shape == (2, out_channels, 32, 32), y.shape
    assert bool(jnp.all(jnp.isfinite(y)))
    print("KERNEL_OK")
</pallas_src>

<mosaic_0001>
module attributes {stable_mosaic.version = 11 : i64} {
  func.func @_mm_epilogue_kernel(%arg0: i32, %arg1: memref<256x48xbf16, #tpu.memory_space<vmem>>, %arg2: memref<48x128xbf16, #tpu.memory_space<vmem>>, %arg3: memref<1x128xf32, #tpu.memory_space<vmem>>, %arg4: memref<1x128xf32, #tpu.memory_space<vmem>>, %arg5: memref<256x128xf32, #tpu.memory_space<vmem>>) attributes {dimension_semantics = [#tpu.dimension_semantics<parallel>], iteration_bounds = array<i64: 2>, scalar_prefetch = 0 : i64, scratch_operands = 0 : i64, tpu.core_type = #tpu.core_type<tc>, window_params = [{transform_indices = @transform_0, window_bounds = array<i64: 256, 48>}, {pipeline_mode = #tpu.pipeline_mode<synchronous>, transform_indices = @transform_1, window_bounds = array<i64: 48, 128>}, {pipeline_mode = #tpu.pipeline_mode<synchronous>, transform_indices = @transform_2, window_bounds = array<i64: 1, 128>}, {pipeline_mode = #tpu.pipeline_mode<synchronous>, transform_indices = @transform_3, window_bounds = array<i64: 1, 128>}, {transform_indices = @transform_4, window_bounds = array<i64: 256, 128>}]} {
    %c0 = arith.constant 0 : index
    %c0_0 = arith.constant 0 : index
    %0 = vector.load %arg1[%c0, %c0_0] : memref<256x48xbf16, #tpu.memory_space<vmem>>, vector<256x48xbf16>
    %c0_1 = arith.constant 0 : index
    %c0_2 = arith.constant 0 : index
    %1 = vector.load %arg2[%c0_1, %c0_2] : memref<48x128xbf16, #tpu.memory_space<vmem>>, vector<48x128xbf16>
    %cst = arith.constant dense<0.000000e+00> : vector<256x128xf32>
    %2 = tpu.matmul %0, %1, %cst {dimension_numbers = #tpu.dot_dimension_numbers<[1], [0], [0], [1], [0, 0, 1, 1], [], []>} : vector<256x48xbf16>, vector<48x128xbf16>, vector<256x128xf32> -> vector<256x128xf32>
    %c0_3 = arith.constant 0 : index
    %c0_4 = arith.constant 0 : index
    %3 = vector.load %arg3[%c0_3, %c0_4] : memref<1x128xf32, #tpu.memory_space<vmem>>, vector<1x128xf32>
    %4 = vector.broadcast %3 : vector<1x128xf32> to vector<256x128xf32>
    %5 = arith.mulf %2, %4 : vector<256x128xf32>
    %c0_5 = arith.constant 0 : index
    %c0_6 = arith.constant 0 : index
    %6 = vector.load %arg4[%c0_5, %c0_6] : memref<1x128xf32, #tpu.memory_space<vmem>>, vector<1x128xf32>
    %7 = vector.broadcast %6 : vector<1x128xf32> to vector<256x128xf32>
    %8 = arith.addf %5, %7 : vector<256x128xf32>
    %c0_7 = arith.constant 0 : index
    %c0_8 = arith.constant 0 : index
    %9 = vector.load %arg5[%c0_7, %c0_8] : memref<256x128xf32, #tpu.memory_space<vmem>>, vector<256x128xf32>
    tpu.vector_store %arg5[%c0_7, %c0_8], %8 {strides = array<i32>} : memref<256x128xf32, #tpu.memory_space<vmem>>, vector<256x128xf32>,
    return
  }
  func.func @transform_0(%arg0: i32) -> (i32, i32) {
    %c0_i32 = arith.constant 0 : i32
    %c0_i32_0 = arith.constant 0 : i32
    return %arg0, %c0_i32 : i32, i32
  }
  func.func @transform_1(%arg0: i32) -> (i32, i32) {
    %c0_i32 = arith.constant 0 : i32
    %c0_i32_0 = arith.constant 0 : i32
    %c0_i32_1 = arith.constant 0 : i32
    return %c0_i32, %c0_i32_0 : i32, i32
  }
  func.func @transform_2(%arg0: i32) -> (i32, i32) {
    %c0_i32 = arith.constant 0 : i32
    %c0_i32_0 = arith.constant 0 : i32
    %c0_i32_1 = arith.constant 0 : i32
    return %c0_i32, %c0_i32_0 : i32, i32
  }
  func.func @transform_3(%arg0: i32) -> (i32, i32) {
    %c0_i32 = arith.constant 0 : i32
    %c0_i32_0 = arith.constant 0 : i32
    %c0_i32_1 = arith.constant 0 : i32
    return %c0_i32, %c0_i32_0 : i32, i32
  }
  func.func @transform_4(%arg0: i32) -> (i32, i32) {
    %c0_i32 = arith.constant 0 : i32
    %c0_i32_0 = arith.constant 0 : i32
    return %arg0, %c0_i32 : i32, i32
  }
}

module attributes {stable_mosaic.version = 11 : i64} {
  func.func @_mm_epilogue_kernel(%arg0: i32, %arg1: memref<128x128xbf16, #tpu.memory_space<vmem>>, %arg2: memref<128x128xbf16, #tpu.memory_space<vmem>>, %arg3: memref<1x128xf32, #tpu.memory_space<vmem>>, %arg4: memref<1x128xf32, #tpu.memory_space<vmem>>, %arg5: memref<128x128xf32, #tpu.memory_space<vmem>>) attributes {dimension_semantics = [#tpu.dimension_semantics<parallel>], iteration_bounds = array<i64: 1>, scalar_prefetch = 0 : i64, scratch_operands = 0 : i64, tpu.core_type = #tpu.core_type<tc>, window_params = [{transform_indices = @transform_0, window_bounds = array<i64: 128, 128>}, {pipeline_mode = #tpu.pipeline_mode<synchronous>, transform_indices = @transform_1, window_bounds = array<i64: 128, 128>}, {pipeline_mode = #tpu.pipeline_mode<synchronous>, transform_indices = @transform_2, window_bounds = array<i64: 1, 128>}, {pipeline_mode = #tpu.pipeline_mode<synchronous>, transform_indices = @transform_3, window_bounds = array<i64: 1, 128>}, {transform_indices = @transform_4, window_bounds = array<i64: 128, 128>}]} {
    %c0 = arith.constant 0 : index
    %c0_0 = arith.constant 0 : index
    %0 = vector.load %arg1[%c0, %c0_0] : memref<128x128xbf16, #tpu.memory_space<vmem>>, vector<128x128xbf16>
    %c0_1 = arith.constant 0 : index
    %c0_2 = arith.constant 0 : index
    %1 = vector.load %arg2[%c0_1, %c0_2] : memref<128x128xbf16, #tpu.memory_space<vmem>>, vector<128x128xbf16>
    %cst = arith.constant dense<0.000000e+00> : vector<128x128xf32>
    %2 = tpu.matmul %0, %1, %cst {dimension_numbers = #tpu.dot_dimension_numbers<[1], [0], [0], [1], [0, 0, 1, 1], [], []>} : vector<128x128xbf16>, vector<128x128xbf16>, vector<128x128xf32> -> vector<128x128xf32>
    %c0_3 = arith.constant 0 : index
    %c0_4 = arith.constant 0 : index
    %3 = vector.load %arg3[%c0_3, %c0_4] : memref<1x128xf32, #tpu.memory_space<vmem>>, vector<1x128xf32>
    %4 = vector.broadcast %3 : vector<1x128xf32> to vector<128x128xf32>
    %5 = arith.mulf %2, %4 : vector<128x128xf32>
    %c0_5 = arith.constant 0 : index
    %c0_6 = arith.constant 0 : index
    %6 = vector.load %arg4[%c0_5, %c0_6] : memref<1x128xf32, #tpu.memory_space<vmem>>, vector<1x128xf32>
    %7 = vector.broadcast %6 : vector<1x128xf32> to vector<128x128xf32>
    %8 = arith.addf %5, %7 : vector<128x128xf32>
    %c0_7 = arith.constant 0 : index
    %c0_8 = arith.constant 0 : index
    %9 = vector.load %arg5[%c0_7, %c0_8] : memref<128x128xf32, #tpu.memory_space<vmem>>, vector<128x128xf32>
    tpu.vector_store %arg5[%c0_7, %c0_8], %8 {strides = array<i32>} : memref<128x128xf32, #tpu.memory_space<vmem>>, vector<128x128xf32>,
    return
  }
  func.func @transform_0(%arg0: i32) -> (i32, i32) {
    %c0_i32 = arith.constant 0 : i32
    %c0_i32_0 = arith.constant 0 : i32
    return %arg0, %c0_i32 : i32, i32
  }
  func.func @transform_1(%arg0: i32) -> (i32, i32) {
    %c0_i32 = arith.constant 0 : i32
    %c0_i32_0 = arith.constant 0 : i32
    %c0_i32_1 = arith.constant 0 : i32
    return %c0_i32, %c0_i32_0 : i32, i32
  }
  func.func @transform_2(%arg0: i32) -> (i32, i32) {
    %c0_i32 = arith.constant 0 : i32
    %c0_i32_0 = arith.constant 0 : i32
    %c0_i32_1 = arith.constant 0 : i32
    return %c0_i32, %c0_i32_0 : i32, i32
  }
  func.func @transform_3(%arg0: i32) -> (i32, i32) {
    %c0_i32 = arith.constant 0 : i32
    %c0_i32_0 = arith.constant 0 : i32
    %c0_i32_1 = arith.constant 0 : i32
    return %c0_i32, %c0_i32_0 : i32, i32
  }
  func.func @transform_4(%arg0: i32) -> (i32, i32) {
    %c0_i32 = arith.constant 0 : i32
    %c0_i32_0 = arith.constant 0 : i32
    return %arg0, %c0_i32 : i32, i32
  }
}

module attributes {stable_mosaic.version = 11 : i64} {
  func.func @_mm_epilogue_kernel(%arg0: i32, %arg1: memref<32x256xbf16, #tpu.memory_space<vmem>>, %arg2: memref<256x128xbf16, #tpu.memory_space<vmem>>, %arg3: memref<1x128xf32, #tpu.memory_space<vmem>>, %arg4: memref<1x128xf32, #tpu.memory_space<vmem>>, %arg5: memref<32x128xf32, #tpu.memory_space<vmem>>) attributes {dimension_semantics = [#tpu.dimension_semantics<parallel>], iteration_bounds = array<i64: 1>, scalar_prefetch = 0 : i64, scratch_operands = 0 : i64, tpu.core_type = #tpu.core_type<tc>, window_params = [{transform_indices = @transform_0, window_bounds = array<i64: 32, 256>}, {pipeline_mode = #tpu.pipeline_mode<synchronous>, transform_indices = @transform_1, window_bounds = array<i64: 256, 128>}, {pipeline_mode = #tpu.pipeline_mode<synchronous>, transform_indices = @transform_2, window_bounds = array<i64: 1, 128>}, {pipeline_mode = #tpu.pipeline_mode<synchronous>, transform_indices = @transform_3, window_bounds = array<i64: 1, 128>}, {transform_indices = @transform_4, window_bounds = array<i64: 32, 128>}]} {
    %c0 = arith.constant 0 : index
    %c0_0 = arith.constant 0 : index
    %0 = vector.load %arg1[%c0, %c0_0] : memref<32x256xbf16, #tpu.memory_space<vmem>>, vector<32x256xbf16>
    %c0_1 = arith.constant 0 : index
    %c0_2 = arith.constant 0 : index
    %1 = vector.load %arg2[%c0_1, %c0_2] : memref<256x128xbf16, #tpu.memory_space<vmem>>, vector<256x128xbf16>
    %cst = arith.constant dense<0.000000e+00> : vector<32x128xf32>
    %2 = tpu.matmul %0, %1, %cst {dimension_numbers = #tpu.dot_dimension_numbers<[1], [0], [0], [1], [0, 0, 1, 1], [], []>} : vector<32x256xbf16>, vector<256x128xbf16>, vector<32x128xf32> -> vector<32x128xf32>
    %c0_3 = arith.constant 0 : index
    %c0_4 = arith.constant 0 : index
    %3 = vector.load %arg3[%c0_3, %c0_4] : memref<1x128xf32, #tpu.memory_space<vmem>>, vector<1x128xf32>
    %4 = vector.broadcast %3 : vector<1x128xf32> to vector<32x128xf32>
    %5 = arith.mulf %2, %4 : vector<32x128xf32>
    %c0_5 = arith.constant 0 : index
    %c0_6 = arith.constant 0 : index
    %6 = vector.load %arg4[%c0_5, %c0_6] : memref<1x128xf32, #tpu.memory_space<vmem>>, vector<1x128xf32>
    %7 = vector.broadcast %6 : vector<1x128xf32> to vector<32x128xf32>
    %8 = arith.addf %5, %7 : vector<32x128xf32>
    %c0_7 = arith.constant 0 : index
    %c0_8 = arith.constant 0 : index
    %9 = vector.load %arg5[%c0_7, %c0_8] : memref<32x128xf32, #tpu.memory_space<vmem>>, vector<32x128xf32>
    tpu.vector_store %arg5[%c0_7, %c0_8], %8 {strides = array<i32>} : memref<32x128xf32, #tpu.memory_space<vmem>>, vector<32x128xf32>,
    return
  }
  func.func @transform_0(%arg0: i32) -> (i32, i32) {
    %c0_i32 = arith.constant 0 : i32
    %c0_i32_0 = arith.constant 0 : i32
    return %arg0, %c0_i32 : i32, i32
  }
  func.func @transform_1(%arg0: i32) -> (i32, i32) {
    %c0_i32 = arith.constant 0 : i32
    %c0_i32_0 = arith.constant 0 : i32
    %c0_i32_1 = arith.constant 0 : i32
    return %c0_i32, %c0_i32_0 : i32, i32
  }
  func.func @transform_2(%arg0: i32) -> (i32, i32) {
    %c0_i32 = arith.constant 0 : i32
    %c0_i32_0 = arith.constant 0 : i32
    %c0_i32_1 = arith.constant 0 : i32
    return %c0_i32, %c0_i32_0 : i32, i32
  }
  func.func @transform_3(%arg0: i32) -> (i32, i32) {
    %c0_i32 = arith.constant 0 : i32
    %c0_i32_0 = arith.constant 0 : i32
    %c0_i32_1 = arith.constant 0 : i32
    return %c0_i32, %c0_i32_0 : i32, i32
  }
  func.func @transform_4(%arg0: i32) -> (i32, i32) {
    %c0_i32 = arith.constant 0 : i32
    %c0_i32_0 = arith.constant 0 : i32
    return %arg0, %c0_i32 : i32, i32
  }
}

module attributes {stable_mosaic.version = 11 : i64} {
  func.func @_mm_epilogue_kernel(%arg0: i32, %arg1: memref<8x512xbf16, #tpu.memory_space<vmem>>, %arg2: memref<512x128xbf16, #tpu.memory_space<vmem>>, %arg3: memref<1x128xf32, #tpu.memory_space<vmem>>, %arg4: memref<1x128xf32, #tpu.memory_space<vmem>>, %arg5: memref<8x128xf32, #tpu.memory_space<vmem>>) attributes {dimension_semantics = [#tpu.dimension_semantics<parallel>], iteration_bounds = array<i64: 1>, scalar_prefetch = 0 : i64, scratch_operands = 0 : i64, tpu.core_type = #tpu.core_type<tc>, window_params = [{transform_indices = @transform_0, window_bounds = array<i64: 8, 512>}, {pipeline_mode = #tpu.pipeline_mode<synchronous>, transform_indices = @transform_1, window_bounds = array<i64: 512, 128>}, {pipeline_mode = #tpu.pipeline_mode<synchronous>, transform_indices = @transform_2, window_bounds = array<i64: 1, 128>}, {pipeline_mode = #tpu.pipeline_mode<synchronous>, transform_indices = @transform_3, window_bounds = array<i64: 1, 128>}, {transform_indices = @transform_4, window_bounds = array<i64: 8, 128>}]} {
    %c0 = arith.constant 0 : index
    %c0_0 = arith.constant 0 : index
    %0 = vector.load %arg1[%c0, %c0_0] : memref<8x512xbf16, #tpu.memory_space<vmem>>, vector<8x512xbf16>
    %c0_1 = arith.constant 0 : index
    %c0_2 = arith.constant 0 : index
    %1 = vector.load %arg2[%c0_1, %c0_2] : memref<512x128xbf16, #tpu.memory_space<vmem>>, vector<512x128xbf16>
    %cst = arith.constant dense<0.000000e+00> : vector<8x128xf32>
    %2 = tpu.matmul %0, %1, %cst {dimension_numbers = #tpu.dot_dimension_numbers<[1], [0], [0], [1], [0, 0, 1, 1], [], []>} : vector<8x512xbf16>, vector<512x128xbf16>, vector<8x128xf32> -> vector<8x128xf32>
    %c0_3 = arith.constant 0 : index
    %c0_4 = arith.constant 0 : index
    %3 = vector.load %arg3[%c0_3, %c0_4] : memref<1x128xf32, #tpu.memory_space<vmem>>, vector<1x128xf32>
    %4 = vector.broadcast %3 : vector<1x128xf32> to vector<8x128xf32>
    %5 = arith.mulf %2, %4 : vector<8x128xf32>
    %c0_5 = arith.constant 0 : index
    %c0_6 = arith.constant 0 : index
    %6 = vector.load %arg4[%c0_5, %c0_6] : memref<1x128xf32, #tpu.memory_space<vmem>>, vector<1x128xf32>
    %7 = vector.broadcast %6 : vector<1x128xf32> to vector<8x128xf32>
    %8 = arith.addf %5, %7 : vector<8x128xf32>
    %c0_7 = arith.constant 0 : index
    %c0_8 = arith.constant 0 : index
    %9 = vector.load %arg5[%c0_7, %c0_8] : memref<8x128xf32, #tpu.memory_space<vmem>>, vector<8x128xf32>
    tpu.vector_store %arg5[%c0_7, %c0_8], %8 {strides = array<i32>} : memref<8x128xf32, #tpu.memory_space<vmem>>, vector<8x128xf32>,
    return
  }
  func.func @transform_0(%arg0: i32) -> (i32, i32) {
    %c0_i32 = arith.constant 0 : i32
    %c0_i32_0 = arith.constant 0 : i32
    return %arg0, %c0_i32 : i32, i32
  }
  func.func @transform_1(%arg0: i32) -> (i32, i32) {
    %c0_i32 = arith.constant 0 : i32
    %c0_i32_0 = arith.constant 0 : i32
    %c0_i32_1 = arith.constant 0 : i32
    return %c0_i32, %c0_i32_0 : i32, i32
  }
  func.func @transform_2(%arg0: i32) -> (i32, i32) {
    %c0_i32 = arith.constant 0 : i32
    %c0_i32_0 = arith.constant 0 : i32
    %c0_i32_1 = arith.constant 0 : i32
    return %c0_i32, %c0_i32_0 : i32, i32
  }
  func.func @transform_3(%arg0: i32) -> (i32, i32) {
    %c0_i32 = arith.constant 0 : i32
    %c0_i32_0 = arith.constant 0 : i32
    %c0_i32_1 = arith.constant 0 : i32
    return %c0_i32, %c0_i32_0 : i32, i32
  }
  func.func @transform_4(%arg0: i32) -> (i32, i32) {
    %c0_i32 = arith.constant 0 : i32
    %c0_i32_0 = arith.constant 0 : i32
    return %arg0, %c0_i32 : i32, i32
  }
}

module attributes {stable_mosaic.version = 11 : i64} {
  func.func @_mm_epilogue_kernel(%arg0: i32, %arg1: memref<8x1024xbf16, #tpu.memory_space<vmem>>, %arg2: memref<1024x128xbf16, #tpu.memory_space<vmem>>, %arg3: memref<1x128xf32, #tpu.memory_space<vmem>>, %arg4: memref<1x128xf32, #tpu.memory_space<vmem>>, %arg5: memref<8x128xf32, #tpu.memory_space<vmem>>) attributes {dimension_semantics = [#tpu.dimension_semantics<parallel>], iteration_bounds = array<i64: 1>, scalar_prefetch = 0 : i64, scratch_operands = 0 : i64, tpu.core_type = #tpu.core_type<tc>, window_params = [{transform_indices = @transform_0, window_bounds = array<i64: 8, 1024>}, {pipeline_mode = #tpu.pipeline_mode<synchronous>, transform_indices = @transform_1, window_bounds = array<i64: 1024, 128>}, {pipeline_mode = #tpu.pipeline_mode<synchronous>, transform_indices = @transform_2, window_bounds = array<i64: 1, 128>}, {pipeline_mode = #tpu.pipeline_mode<synchronous>, transform_indices = @transform_3, window_bounds = array<i64: 1, 128>}, {transform_indices = @transform_4, window_bounds = array<i64: 8, 128>}]} {
    %c0 = arith.constant 0 : index
    %c0_0 = arith.constant 0 : index
    %0 = vector.load %arg1[%c0, %c0_0] : memref<8x1024xbf16, #tpu.memory_space<vmem>>, vector<8x1024xbf16>
    %c0_1 = arith.constant 0 : index
    %c0_2 = arith.constant 0 : index
    %1 = vector.load %arg2[%c0_1, %c0_2] : memref<1024x128xbf16, #tpu.memory_space<vmem>>, vector<1024x128xbf16>
    %cst = arith.constant dense<0.000000e+00> : vector<8x128xf32>
    %2 = tpu.matmul %0, %1, %cst {dimension_numbers = #tpu.dot_dimension_numbers<[1], [0], [0], [1], [0, 0, 1, 1], [], []>} : vector<8x1024xbf16>, vector<1024x128xbf16>, vector<8x128xf32> -> vector<8x128xf32>
    %c0_3 = arith.constant 0 : index
    %c0_4 = arith.constant 0 : index
    %3 = vector.load %arg3[%c0_3, %c0_4] : memref<1x128xf32, #tpu.memory_space<vmem>>, vector<1x128xf32>
    %4 = vector.broadcast %3 : vector<1x128xf32> to vector<8x128xf32>
    %5 = arith.mulf %2, %4 : vector<8x128xf32>
    %c0_5 = arith.constant 0 : index
    %c0_6 = arith.constant 0 : index
    %6 = vector.load %arg4[%c0_5, %c0_6] : memref<1x128xf32, #tpu.memory_space<vmem>>, vector<1x128xf32>
    %7 = vector.broadcast %6 : vector<1x128xf32> to vector<8x128xf32>
    %8 = arith.addf %5, %7 : vector<8x128xf32>
    %c0_7 = arith.constant 0 : index
    %c0_8 = arith.constant 0 : index
    %9 = vector.load %arg5[%c0_7, %c0_8] : memref<8x128xf32, #tpu.memory_space<vmem>>, vector<8x128xf32>
    tpu.vector_store %arg5[%c0_7, %c0_8], %8 {strides = array<i32>} : memref<8x128xf32, #tpu.memory_space<vmem>>, vector<8x128xf32>,
    return
  }
  func.func @transform_0(%arg0: i32) -> (i32, i32) {
    %c0_i32 = arith.constant 0 : i32
    %c0_i32_0 = arith.constant 0 : i32
    return %arg0, %c0_i32 : i32, i32
  }
  func.func @transform_1(%arg0: i32) -> (i32, i32) {
    %c0_i32 = arith.constant 0 : i32
    %c0_i32_0 = arith.constant 0 : i32
    %c0_i32_1 = arith.constant 0 : i32
    return %c0_i32, %c0_i32_0 : i32, i32
  }
  func.func @transform_2(%arg0: i32) -> (i32, i32) {
    %c0_i32 = arith.constant 0 : i32
    %c0_i32_0 = arith.constant 0 : i32
    %c0_i32_1 = arith.constant 0 : i32
    return %c0_i32, %c0_i32_0 : i32, i32
  }
  func.func @transform_3(%arg0: i32) -> (i32, i32) {
    %c0_i32 = arith.constant 0 : i32
    %c0_i32_0 = arith.constant 0 : i32
    %c0_i32_1 = arith.constant 0 : i32
    return %c0_i32, %c0_i32_0 : i32, i32
  }
  func.func @transform_4(%arg0: i32) -> (i32, i32) {
    %c0_i32 = arith.constant 0 : i32
    %c0_i32_0 = arith.constant 0 : i32
    return %arg0, %c0_i32 : i32, i32
  }
}

module attributes {stable_mosaic.version = 11 : i64} {
  func.func @_mm_epilogue_kernel(%arg0: i32, %arg1: memref<8x256xbf16, #tpu.memory_space<vmem>>, %arg2: memref<256x128xbf16, #tpu.memory_space<vmem>>, %arg3: memref<1x128xf32, #tpu.memory_space<vmem>>, %arg4: memref<1x128xf32, #tpu.memory_space<vmem>>, %arg5: memref<8x128xf32, #tpu.memory_space<vmem>>) attributes {dimension_semantics = [#tpu.dimension_semantics<parallel>], iteration_bounds = array<i64: 1>, scalar_prefetch = 0 : i64, scratch_operands = 0 : i64, tpu.core_type = #tpu.core_type<tc>, window_params = [{transform_indices = @transform_0, window_bounds = array<i64: 8, 256>}, {pipeline_mode = #tpu.pipeline_mode<synchronous>, transform_indices = @transform_1, window_bounds = array<i64: 256, 128>}, {pipeline_mode = #tpu.pipeline_mode<synchronous>, transform_indices = @transform_2, window_bounds = array<i64: 1, 128>}, {pipeline_mode = #tpu.pipeline_mode<synchronous>, transform_indices = @transform_3, window_bounds = array<i64: 1, 128>}, {transform_indices = @transform_4, window_bounds = array<i64: 8, 128>}]} {
    %c0 = arith.constant 0 : index
    %c0_0 = arith.constant 0 : index
    %0 = vector.load %arg1[%c0, %c0_0] : memref<8x256xbf16, #tpu.memory_space<vmem>>, vector<8x256xbf16>
    %c0_1 = arith.constant 0 : index
    %c0_2 = arith.constant 0 : index
    %1 = vector.load %arg2[%c0_1, %c0_2] : memref<256x128xbf16, #tpu.memory_space<vmem>>, vector<256x128xbf16>
    %cst = arith.constant dense<0.000000e+00> : vector<8x128xf32>
    %2 = tpu.matmul %0, %1, %cst {dimension_numbers = #tpu.dot_dimension_numbers<[1], [0], [0], [1], [0, 0, 1, 1], [], []>} : vector<8x256xbf16>, vector<256x128xbf16>, vector<8x128xf32> -> vector<8x128xf32>
    %c0_3 = arith.constant 0 : index
    %c0_4 = arith.constant 0 : index
    %3 = vector.load %arg3[%c0_3, %c0_4] : memref<1x128xf32, #tpu.memory_space<vmem>>, vector<1x128xf32>
    %4 = vector.broadcast %3 : vector<1x128xf32> to vector<8x128xf32>
    %5 = arith.mulf %2, %4 : vector<8x128xf32>
    %c0_5 = arith.constant 0 : index
    %c0_6 = arith.constant 0 : index
    %6 = vector.load %arg4[%c0_5, %c0_6] : memref<1x128xf32, #tpu.memory_space<vmem>>, vector<1x128xf32>
    %7 = vector.broadcast %6 : vector<1x128xf32> to vector<8x128xf32>
    %8 = arith.addf %5, %7 : vector<8x128xf32>
    %c0_7 = arith.constant 0 : index
    %c0_8 = arith.constant 0 : index
    %9 = vector.load %arg5[%c0_7, %c0_8] : memref<8x128xf32, #tpu.memory_space<vmem>>, vector<8x128xf32>
    tpu.vector_store %arg5[%c0_7, %c0_8], %8 {strides = array<i32>} : memref<8x128xf32, #tpu.memory_space<vmem>>, vector<8x128xf32>,
    return
  }
  func.func @transform_0(%arg0: i32) -> (i32, i32) {
    %c0_i32 = arith.constant 0 : i32
    %c0_i32_0 = arith.constant 0 : i32
    return %arg0, %c0_i32 : i32, i32
  }
  func.func @transform_1(%arg0: i32) -> (i32, i32) {
    %c0_i32 = arith.constant 0 : i32
    %c0_i32_0 = arith.constant 0 : i32
    %c0_i32_1 = arith.constant 0 : i32
    return %c0_i32, %c0_i32_0 : i32, i32
  }
  func.func @transform_2(%arg0: i32) -> (i32, i32) {
    %c0_i32 = arith.constant 0 : i32
    %c0_i32_0 = arith.constant 0 : i32
    %c0_i32_1 = arith.constant 0 : i32
    return %c0_i32, %c0_i32_0 : i32, i32
  }
  func.func @transform_3(%arg0: i32) -> (i32, i32) {
    %c0_i32 = arith.constant 0 : i32
    %c0_i32_0 = arith.constant 0 : i32
    %c0_i32_1 = arith.constant 0 : i32
    return %c0_i32, %c0_i32_0 : i32, i32
  }
  func.func @transform_4(%arg0: i32) -> (i32, i32) {
    %c0_i32 = arith.constant 0 : i32
    %c0_i32_0 = arith.constant 0 : i32
    return %arg0, %c0_i32 : i32, i32
  }
}

module attributes {stable_mosaic.version = 11 : i64} {
  func.func @_mm_epilogue_kernel(%arg0: i32, %arg1: memref<256x64xbf16, #tpu.memory_space<vmem>>, %arg2: memref<64x128xbf16, #tpu.memory_space<vmem>>, %arg3: memref<1x128xf32, #tpu.memory_space<vmem>>, %arg4: memref<1x128xf32, #tpu.memory_space<vmem>>, %arg5: memref<256x128xf32, #tpu.memory_space<vmem>>) attributes {dimension_semantics = [#tpu.dimension_semantics<parallel>], iteration_bounds = array<i64: 2>, scalar_prefetch = 0 : i64, scratch_operands = 0 : i64, tpu.core_type = #tpu.core_type<tc>, window_params = [{transform_indices = @transform_0, window_bounds = array<i64: 256, 64>}, {pipeline_mode = #tpu.pipeline_mode<synchronous>, transform_indices = @transform_1, window_bounds = array<i64: 64, 128>}, {pipeline_mode = #tpu.pipeline_mode<synchronous>, transform_indices = @transform_2, window_bounds = array<i64: 1, 128>}, {pipeline_mode = #tpu.pipeline_mode<synchronous>, transform_indices = @transform_3, window_bounds = array<i64: 1, 128>}, {transform_indices = @transform_4, window_bounds = array<i64: 256, 128>}]} {
    %c0 = arith.constant 0 : index
    %c0_0 = arith.constant 0 : index
    %0 = vector.load %arg1[%c0, %c0_0] : memref<256x64xbf16, #tpu.memory_space<vmem>>, vector<256x64xbf16>
    %c0_1 = arith.constant 0 : index
    %c0_2 = arith.constant 0 : index
    %1 = vector.load %arg2[%c0_1, %c0_2] : memref<64x128xbf16, #tpu.memory_space<vmem>>, vector<64x128xbf16>
    %cst = arith.constant dense<0.000000e+00> : vector<256x128xf32>
    %2 = tpu.matmul %0, %1, %cst {dimension_numbers = #tpu.dot_dimension_numbers<[1], [0], [0], [1], [0, 0, 1, 1], [], []>} : vector<256x64xbf16>, vector<64x128xbf16>, vector<256x128xf32> -> vector<256x128xf32>
    %c0_3 = arith.constant 0 : index
    %c0_4 = arith.constant 0 : index
    %3 = vector.load %arg3[%c0_3, %c0_4] : memref<1x128xf32, #tpu.memory_space<vmem>>, vector<1x128xf32>
    %4 = vector.broadcast %3 : vector<1x128xf32> to vector<256x128xf32>
    %5 = arith.mulf %2, %4 : vector<256x128xf32>
    %c0_5 = arith.constant 0 : index
    %c0_6 = arith.constant 0 : index
    %6 = vector.load %arg4[%c0_5, %c0_6] : memref<1x128xf32, #tpu.memory_space<vmem>>, vector<1x128xf32>
    %7 = vector.broadcast %6 : vector<1x128xf32> to vector<256x128xf32>
    %8 = arith.addf %5, %7 : vector<256x128xf32>
    %9 = math.tanh %8 : vector<256x128xf32>
    %c0_7 = arith.constant 0 : index
    %c0_8 = arith.constant 0 : index
    %10 = vector.load %arg5[%c0_7, %c0_8] : memref<256x128xf32, #tpu.memory_space<vmem>>, vector<256x128xf32>
    tpu.vector_store %arg5[%c0_7, %c0_8], %9 {strides = array<i32>} : memref<256x128xf32, #tpu.memory_space<vmem>>, vector<256x128xf32>,
    return
  }
  func.func @transform_0(%arg0: i32) -> (i32, i32) {
    %c0_i32 = arith.constant 0 : i32
    %c0_i32_0 = arith.constant 0 : i32
    return %arg0, %c0_i32 : i32, i32
  }
  func.func @transform_1(%arg0: i32) -> (i32, i32) {
    %c0_i32 = arith.constant 0 : i32
    %c0_i32_0 = arith.constant 0 : i32
    %c0_i32_1 = arith.constant 0 : i32
    return %c0_i32, %c0_i32_0 : i32, i32
  }
  func.func @transform_2(%arg0: i32) -> (i32, i32) {
    %c0_i32 = arith.constant 0 : i32
    %c0_i32_0 = arith.constant 0 : i32
    %c0_i32_1 = arith.constant 0 : i32
    return %c0_i32, %c0_i32_0 : i32, i32
  }
  func.func @transform_3(%arg0: i32) -> (i32, i32) {
    %c0_i32 = arith.constant 0 : i32
    %c0_i32_0 = arith.constant 0 : i32
    %c0_i32_1 = arith.constant 0 : i32
    return %c0_i32, %c0_i32_0 : i32, i32
  }
  func.func @transform_4(%arg0: i32) -> (i32, i32) {
    %c0_i32 = arith.constant 0 : i32
    %c0_i32_0 = arith.constant 0 : i32
    return %arg0, %c0_i32 : i32, i32
  }
}

</mosaic_0001>

<llo_original>
// kernel: _lambda_.25
$region0: #{_lambda_.25}
  #allocation0 [shape = 'u32[]', space=smem, size = 0x4, offset = 0x4, fixed_abs, tag = 'smem constant byte address 0x4 - core index']
  #allocation1 [shape = 'u32[144,128]{1,0:T(1,128)}', space=vmem, size = 0x12000, scoped, tag = 'internal scratch']
  %s0 = inlined_call_operand.vmem [shape: bf16[512,48], index: 0, kind: input, shape index: {}]
  %s1 = inlined_call_operand.vmem [shape: bf16[48,128], index: 1, kind: input, shape index: {}]
  %s2 = inlined_call_operand.vmem [shape: f32[1,128], index: 2, kind: input, shape index: {}]
  %s3 = inlined_call_operand.vmem [shape: f32[1,128], index: 3, kind: input, shape index: {}]
  %s4 = inlined_call_operand.vmem [shape: f32[512,128], index: 4, kind: output, shape index: {}]
  %s5 = sld [smem:[#allocation0]]
  $region49: #{_lambda_.25} parent=0
    _
  %s7 = ssub.s32 1, %s5
  %s8 = scalar_select 0, %s7, %s5
  loop: start=0, step=1, limit=4
  $region2: #{_lambda_.25} parent=0 // loop_pre_header
    _
  $region3: #{_lambda_.25} parent=0 // loop_header
    %s10 = sphi 0, %s14
    %p11 = scmp.ge.s32.totalorder %s10, 4
    %s20 = sphi 0, %s22
    %s23 = sphi 0, %s20
    %s24 = sphi 0, %s23
    %s40 = sphi 0, %s24
    %s44 = sphi 0, %s44
    %s46 = sphi 0, %s44
    %s47 = sphi 0, %s46
    %s61 = sphi 0, %s47
    %s65 = sphi 0, %s65
    %s67 = sphi 0, %s65
    %s68 = sphi 0, %s67
    %s82 = sphi 0, %s68
    %s86 = sphi 0, %s86
    %s88 = sphi 0, %s86
    %s89 = sphi 0, %s88
    %s103 = sphi 0, %s89
    %s109 = sphi 0, %s111
    %s112 = sphi 0, %s109
    %s113 = sphi 0, %s112
    %s129 = sphi 0, %s113
  $region4: #{_lambda_.25} parent=0 // loop_header_branch
    %13 = sbr.rel (%p11) target = $region8
  $region5: #{_lambda_.25} parent=0 // loop_body
    %s15 = ssub.s32 %s10, 1
    %s16 = ssub.s32 %s10, 2
    %s17 = sadd.s32 %s10, 1
    %s18 = ssub.s32 %s10, %s17
    %p19 = scmp.eq.s32.totalorder %s18, 0
    %s21 = sadd.s32 %s20, 1
    %s22 = scalar_select %p19, %s20, %s21
    %p25 = pneg %p19
    %p26 = scmp.eq.s32.totalorder %s10, 1
    %p27 = por %p25, %p26
    %p28 = scmp.ne.s32.totalorder %s20, %s23
    %p29 = scmp.eq.s32.totalorder %s10, 0
    %p30 = por %p28, %p29
    %p31 = scmp.ne.s32.totalorder %s20, %s23
    %p32 = scmp.eq.s32.totalorder %s15, 1
    %p33 = por %p31, %p32
    %p34 = scmp.ne.s32.totalorder %s23, %s24
    %p35 = scmp.eq.s32.totalorder %s15, 0
    %p36 = por %p34, %p35
    %p37 = scmp.ne.s32.totalorder %s23, %s24
    %p38 = scmp.eq.s32.totalorder %s16, 1
    %p39 = por %p37, %p38
    %p41 = scmp.ne.s32.totalorder %s24, %s40
    %p42 = scmp.eq.s32.totalorder %s16, 0
    %p43 = por %p41, %p42
    %s45 = sadd.s32 %s44, 1
    %p48 = scmp.eq.s32.totalorder %s10, 1
    %p49 = scmp.ne.s32.totalorder %s44, %s46
    %p50 = scmp.eq.s32.totalorder %s10, 0
    %p51 = por %p49, %p50
    %p52 = scmp.ne.s32.totalorder %s44, %s46
    %p53 = scmp.eq.s32.totalorder %s15, 1
    %p54 = por %p52, %p53
    %p55 = scmp.ne.s32.totalorder %s46, %s47
    %p56 = scmp.eq.s32.totalorder %s15, 0
    %p57 = por %p55, %p56
    %p58 = scmp.ne.s32.totalorder %s46, %s47
    %p59 = scmp.eq.s32.totalorder %s16, 1
    %p60 = por %p58, %p59
    %p62 = scmp.ne.s32.totalorder %s47, %s61
    %p63 = scmp.eq.s32.totalorder %s16, 0
    %p64 = por %p62, %p63
    %s66 = sadd.s32 %s65, 1
    %p69 = scmp.eq.s32.totalorder %s10, 1
    %p70 = scmp.ne.s32.totalorder %s65, %s67
    %p71 = scmp.eq.s32.totalorder %s10, 0
    %p72 = por %p70, %p71
    %p73 = scmp.ne.s32.totalorder %s65, %s67
    %p74 = scmp.eq.s32.totalorder %s15, 1
    %p75 = por %p73, %p74
    %p76 = scmp.ne.s32.totalorder %s67, %s68
    %p77 = scmp.eq.s32.totalorder %s15, 0
    %p78 = por %p76, %p77
    %p79 = scmp.ne.s32.totalorder %s67, %s68
    %p80 = scmp.eq.s32.totalorder %s16, 1
    %p81 = por %p79, %p80
    %p83 = scmp.ne.s32.totalorder %s68, %s82
    %p84 = scmp.eq.s32.totalorder %s16, 0
    %p85 = por %p83, %p84
    %s87 = sadd.s32 %s86, 1
    %p90 = scmp.eq.s32.totalorder %s10, 1
    %p91 = scmp.ne.s32.totalorder %s86, %s88
    %p92 = scmp.eq.s32.totalorder %s10, 0
    %p93 = por %p91, %p92
    %p94 = scmp.ne.s32.totalorder %s86, %s88
    %p95 = scmp.eq.s32.totalorder %s15, 1
    %p96 = por %p94, %p95
    %p97 = scmp.ne.s32.totalorder %s88, %s89
    %p98 = scmp.eq.s32.totalorder %s15, 0
    %p99 = por %p97, %p98
    %p100 = scmp.ne.s32.totalorder %s88, %s89
    %p101 = scmp.eq.s32.totalorder %s16, 1
    %p102 = por %p100, %p101
    %p104 = scmp.ne.s32.totalorder %s89, %s103
    %p105 = scmp.eq.s32.totalorder %s16, 0
    %p106 = por %p104, %p105
    %s107 = ssub.s32 %s10, %s17
    %p108 = scmp.eq.s32.totalorder %s107, 0
    %s110 = sadd.s32 %s109, 1
    %s111 = scalar_select %p108, %s109, %s110
    %p114 = pneg %p108
    %p115 = scmp.eq.s32.totalorder %s10, 1
    %p116 = por %p114, %p115
    %p117 = scmp.ne.s32.totalorder %s109, %s112
    %p118 = scmp.eq.s32.totalorder %s10, 0
    %p119 = por %p117, %p118
    %p120 = scmp.ne.s32.totalorder %s109, %s112
    %p121 = scmp.eq.s32.totalorder %s15, 1
    %p122 = por %p120, %p121
    %p123 = scmp.ne.s32.totalorder %s112, %s113
    %p124 = scmp.eq.s32.totalorder %s15, 0
    %p125 = por %p123, %p124
    %p126 = scmp.ne.s32.totalorder %s112, %s113
    %p127 = scmp.eq.s32.totalorder %s16, 1
    %p128 = por %p126, %p127
    %p130 = scmp.ne.s32.totalorder %s113, %s129
    %p131 = scmp.eq.s32.totalorder %s16, 0
    %p132 = por %p130, %p131
    %p133 = scmp.le.s32.totalorder 1, %s10
    %p134 = scmp.lt.s32.totalorder %s10, 3
    %p135 = pnand %p133, %p134
    %p136 = pneg %p135
    // Predicated region
    $region9: #{_lambda_.25} parent=5 // pred_check
      _
    $region10: #{_lambda_.25} parent=5 // pred_check_branch
      %138 = sbr.rel (%p135) target = $region12
    $region11: #{_lambda_.25} parent=5 // pred_region
      %s139 = ssub.s32 %s10, 1
      // Predicated region
      $region13: #{_lambda_.25} parent=11 // pred_check
        %p140 = pneg %p57
      $region14: #{_lambda_.25} parent=11 // pred_check_branch
        %142 = sbr.rel (%p140) target = $region16
      $region15: #{_lambda_.25} parent=11 // pred_region
        _
      $region16: #{_lambda_.25} parent=11 // pred_fallthru
        _
      // Predicated region
      $region17: #{_lambda_.25} parent=11 // pred_check
        %p143 = pneg %p78
      $region18: #{_lambda_.25} parent=11 // pred_check_branch
        %145 = sbr.rel (%p143) target = $region20
      $region19: #{_lambda_.25} parent=11 // pred_region
        _
      $region20: #{_lambda_.25} parent=11 // pred_fallthru
        _
      // Predicated region
      $region21: #{_lambda_.25} parent=11 // pred_check
        %p146 = pneg %p99
      $region22: #{_lambda_.25} parent=11 // pred_check_branch
        %148 = sbr.rel (%p146) target = $region24
      $region23: #{_lambda_.25} parent=11 // pred_region
        _
      $region24: #{_lambda_.25} parent=11 // pred_fallthru
        _
    $region12: #{_lambda_.25} parent=5 // pred_fallthru
      _
    %p149 = scmp.lt.s32.totalorder %s10, 2
    // Predicated region
    $region25: #{_lambda_.25} parent=5 // pred_check
      %p150 = pneg %p149
    $region26: #{_lambda_.25} parent=5 // pred_check_branch
      %152 = sbr.rel (%p150) target = $region28
    $region27: #{_lambda_.25} parent=5 // pred_region
      // Predicated region
      $region29: #{_lambda_.25} parent=27 // pred_check
        %p153 = pneg %p30
      $region30: #{_lambda_.25} parent=27 // pred_check_branch
        %155 = sbr.rel (%p153) target = $region32
      $region31: #{_lambda_.25} parent=27 // pred_region
        %s156 = smul.u32 32, %s10
        %p157 = scmp.lt.s32.totalorder %s156, 63
        %s158 = scalar_select %p157, %s156, 63
        %s159 = smul.addr %s158, 4
        %s160 = scalar_lea.vmem %s0, %s159
        %s161 = smul.u32 32, %s10
      $region32: #{_lambda_.25} parent=27 // pred_fallthru
        _
    $region28: #{_lambda_.25} parent=5 // pred_fallthru
      _
    %p162 = scmp.le.s32.totalorder 1, %s10
    %p163 = scmp.lt.s32.totalorder %s10, 3
    %p164 = pnand %p162, %p163
    %p165 = pneg %p164
    // Predicated region
    $region33: #{_lambda_.25} parent=5 // pred_check
      _
    $region34: #{_lambda_.25} parent=5 // pred_check_branch
      %167 = sbr.rel (%p164) target = $region36
    $region35: #{_lambda_.25} parent=5 // pred_region
      %s168 = ssub.s32 %s10, 1
      %s169 = smul.u32 32, %s15
      %p170 = scmp.lt.s32.totalorder %s169, 63
      %s171 = scalar_select %p170, %s169, 63
      %s172 = smul.addr %s171, 4
      %s173 = scalar_lea.vmem %s0, %s172
      %p174 = pneg %p36
      %p175 = pneg %p33
      %p176 = pneg %p57
      %p177 = pneg %p54
      %p178 = pneg %p78
      %p179 = pneg %p75
      %p180 = pneg %p99
      %p181 = pneg %p96
      %p182 = pneg %p125
      %p183 = pneg %p122
      %s184 = smul.u32 32, %s15
      %p185 = scmp.lt.s32.totalorder %s184, 63
      %s186 = scalar_select %p185, %s184, 63
      %s187 = smul.addr %s186, 8
      %s188 = scalar_lea.vmem %s4, %s187
      %s189 = smul.u32 32, %s15
      %p190 = scmp.lt.s32.totalorder %s189, 63
      %s191 = scalar_select %p190, %s189, 63
      %s192 = smul.addr %s191, 4
      %s193 = scalar_lea.vmem %s0, %s192
      %s194 = smul.u32 32, %s15
      %s195 = smul.u32 32, %s15
      %p196 = scmp.lt.s32.totalorder %s195, 63
      %s197 = scalar_select %p196, %s195, 63
      %s198 = smul.addr %s197, 8
      %s199 = scalar_lea.vmem %s4, %s198
      %s200 = smul.u32 32, %s15
      %v202 = vld [vmem:[%s193] sm:$0xf]
      %v203 = vld [vmem:[%s193 + $0x4] sm:$0xf]
      %v204 = vld [vmem:[%s193 + $0x8] sm:$0xf]
      %v205 = vld [vmem:[%s193 + $0xc] sm:$0xf]
      %v206 = vld [vmem:[%s193 + $0x10] sm:$0xf]
      %v207 = vld [vmem:[%s193 + $0x14] sm:$0xf]
      %v208 = vld [vmem:[%s193 + $0x18] sm:$0xf]
      %v209 = vld [vmem:[%s193 + $0x1c] sm:$0xf]
      %v210 = vld [vmem:[%s193 + $0x20] sm:$0xf]
      %v211 = vld [vmem:[%s193 + $0x24] sm:$0xf]
      %v212 = vld [vmem:[%s193 + $0x28] sm:$0xf]
      %v213 = vld [vmem:[%s193 + $0x2c] sm:$0xf]
      %v214 = vld [vmem:[%s193 + $0x30] sm:$0xf]
      %v215 = vld [vmem:[%s193 + $0x34] sm:$0xf]
      %v216 = vld [vmem:[%s193 + $0x38] sm:$0xf]
      %v217 = vld [vmem:[%s193 + $0x3c] sm:$0xf]
      %v218 = vld [vmem:[%s193 + $0x40] sm:$0xf]
      %v219 = vld [vmem:[%s193 + $0x44] sm:$0xf]
      %v220 = vld [vmem:[%s193 + $0x48] sm:$0xf]
      %v221 = vld [vmem:[%s193 + $0x4c] sm:$0xf]
      %v222 = vld [vmem:[%s193 + $0x50] sm:$0xf]
      %v223 = vld [vmem:[%s193 + $0x54] sm:$0xf]
      %v224 = vld [vmem:[%s193 + $0x58] sm:$0xf]
      %v225 = vld [vmem:[%s193 + $0x5c] sm:$0xf]
      %v226 = vld [vmem:[%s193 + $0x60] sm:$0xf]
      %v227 = vld [vmem:[%s193 + $0x64] sm:$0xf]
      %v228 = vld [vmem:[%s193 + $0x68] sm:$0xf]
      %v229 = vld [vmem:[%s193 + $0x6c] sm:$0xf]
      %v230 = vld [vmem:[%s193 + $0x70] sm:$0xf]
      %v231 = vld [vmem:[%s193 + $0x74] sm:$0xf]
      %v232 = vld [vmem:[%s193 + $0x78] sm:$0xf]
      %v233 = vld [vmem:[%s193 + $0x7c] sm:$0xf]
      %v234 = vld [vmem:[%s1] sm:$0xf]
      %v235 = vld [vmem:[%s1 + $0x4] sm:$0xf]
      %v236 = vld [vmem:[%s1 + $0x8] sm:$0xf]
      %v237 = vld [vmem:[%s1 + $0xc] sm:$0xf]
      %v238 = vld [vmem:[%s1 + $0x10] sm:$0xf]
      %v239 = vld [vmem:[%s1 + $0x14] sm:$0xf]
      %v272 = vunpack.c.l.b16 %v202
      %v273 = vunpack.c.l.b16 %v203
      %v274 = vunpack.c.l.b16 %v204
      %v275 = vunpack.c.l.b16 %v205
      %v276 = vunpack.c.l.b16 %v206
      %v277 = vunpack.c.l.b16 %v207
      %v278 = vunpack.c.l.b16 %v208
      %v279 = vunpack.c.l.b16 %v209
      %v280 = vunpack.c.l.b16 %v210
      %v281 = vunpack.c.l.b16 %v211
      %v282 = vunpack.c.l.b16 %v212
      %v283 = vunpack.c.l.b16 %v213
      %v284 = vunpack.c.l.b16 %v214
      %v285 = vunpack.c.l.b16 %v215
      %v286 = vunpack.c.l.b16 %v216
      %v287 = vunpack.c.l.b16 %v217
      %v288 = vunpack.c.l.b16 %v218
      %v289 = vunpack.c.l.b16 %v219
      %v290 = vunpack.c.l.b16 %v220
      %v291 = vunpack.c.l.b16 %v221
      %v292 = vunpack.c.l.b16 %v222
      %v293 = vunpack.c.l.b16 %v223
      %v294 = vunpack.c.l.b16 %v224
      %v295 = vunpack.c.l.b16 %v225
      %v296 = vunpack.c.l.b16 %v226
      %v297 = vunpack.c.l.b16 %v227
      %v298 = vunpack.c.l.b16 %v228
      %v299 = vunpack.c.l.b16 %v229
      %v300 = vunpack.c.l.b16 %v230
      %v301 = vunpack.c.l.b16 %v231
      %v302 = vunpack.c.l.b16 %v232
      %v303 = vunpack.c.l.b16 %v233
      %v304 = vpack.c.b16 %v273, %v272
      %v305 = vpack.c.b16 %v275, %v274
      %v306 = vpack.c.b16 %v277, %v276
      %v307 = vpack.c.b16 %v279, %v278
      %v308 = vpack.c.b16 %v281, %v280
      %v309 = vpack.c.b16 %v283, %v282
      %v310 = vpack.c.b16 %v285, %v284
      %v311 = vpack.c.b16 %v287, %v286
      %v312 = vpack.c.b16 %v289, %v288
      %v313 = vpack.c.b16 %v291, %v290
      %v314 = vpack.c.b16 %v293, %v292
      %v315 = vpack.c.b16 %v295, %v294
      %v316 = vpack.c.b16 %v297, %v296
      %v317 = vpack.c.b16 %v299, %v298
      %v318 = vpack.c.b16 %v301, %v300
      %v319 = vpack.c.b16 %v303, %v302
      %v326 = vunpack.c.l.b16 %v234
      %v327 = vunpack.c.l.b16 %v235
      %v328 = vunpack.c.l.b16 %v236
      %v329 = vunpack.c.l.b16 %v237
      %v330 = vunpack.c.l.b16 %v238
      %v331 = vunpack.c.l.b16 %v239
      %v332 = vpack.c.b16 %v327, %v326
      %v333 = vpack.c.b16 %v329, %v328
      %v334 = vpack.c.b16 %v331, %v330
      %vm338 = vcmask 392192
      %v340 = vsel %vm338, %v304, 0
      %v343 = vsel %vm338, %v305, 0
      %v346 = vsel %vm338, %v306, 0
      %v349 = vsel %vm338, %v307, 0
      %v352 = vsel %vm338, %v308, 0
      %v355 = vsel %vm338, %v309, 0
      %v358 = vsel %vm338, %v310, 0
      %v361 = vsel %vm338, %v311, 0
      %v364 = vsel %vm338, %v312, 0
      %v367 = vsel %vm338, %v313, 0
      %v370 = vsel %vm338, %v314, 0
      %v373 = vsel %vm338, %v315, 0
      %v376 = vsel %vm338, %v316, 0
      %v379 = vsel %vm338, %v317, 0
      %v382 = vsel %vm338, %v318, 0
      %v385 = vsel %vm338, %v319, 0
      %387 = vmatprep.subr.bf16.mxu0 0
      %388 = vmatpush1.bf16.msra.mxu0 %v332
      %389 = vmatprep.subr.bf16.mxu0 0
      %390 = vmatpush1.bf16.msra.mxu0 %v333
      %391 = vmatprep.subr.bf16.mxu0 0
      %392 = vmatpush1.bf16.msra.mxu0 %v334
      %393 = vmatprep.subr.bf16.mxu0 0
      %394 = vmatpush1.bf16.msra.mxu0 0
      %395 = vmatprep.subr.bf16.mxu0 0
      %396 = vmatpush1.bf16.msra.mxu0 0
      %397 = vmatprep.subr.bf16.mxu0 0
      %398 = vmatpush1.bf16.msra.mxu0 0
      %399 = vmatprep.subr.bf16.mxu0 0
      %400 = vmatpush1.bf16.msra.mxu0 0
      %401 = vmatprep.subr.bf16.mxu0 0
      %402 = vmatpush1.bf16.msra.mxu0 0
      %403 = vmatprep.subr.bf16.mxu0 0
      %404 = vmatpush1.bf16.msra.mxu0 0
      %405 = vmatprep.subr.bf16.mxu0 0
      %406 = vmatpush1.bf16.msra.mxu0 0
      %407 = vmatprep.subr.bf16.mxu0 0
      %408 = vmatpush1.bf16.msra.mxu0 0
      %409 = vmatprep.subr.bf16.mxu0 0
      %410 = vmatpush1.bf16.msra.mxu0 0
      %411 = vmatprep.subr.bf16.mxu0 0
      %412 = vmatpush1.bf16.msra.mxu0 0
      %413 = vmatprep.subr.bf16.mxu0 0
      %414 = vmatpush1.bf16.msra.mxu0 0
      %415 = vmatprep.subr.bf16.mxu0 0
      %416 = vmatpush1.bf16.msra.mxu0 0
      %417 = vmatprep.subr.bf16.mxu0 0
      %418 = vmatpush1.bf16.msra.mxu0 0
      %419 = vmatprep.mubr.bf16.mxu0 0
      %420 = vmatmul.mubr.bf16.gmra.mrb[0].mxu0 %v340
      %v421 = vpop.f32.mrb[0].mxu0
      %v422 = vadd.f32 0.0, %v421
      %v423 = vpop.f32.mrb[0].mxu0
      %v424 = vpop.f32.mrb[0].mxu0
      %v425 = vadd.f32 0.0, %v424
      %v426 = vpop.f32.mrb[0].mxu0
      %427 = vmatprep.mubr.bf16.mxu0 0
      %428 = vmatmul.mubr.bf16.gmra.mrb[0].mxu0 %v343
      %v429 = vpop.f32.mrb[0].mxu0
      %v430 = vadd.f32 0.0, %v429
      %v431 = vpop.f32.mrb[0].mxu0
      %v432 = vpop.f32.mrb[0].mxu0
      %v433 = vadd.f32 0.0, %v432
      %v434 = vpop.f32.mrb[0].mxu0
      %435 = vmatprep.mubr.bf16.mxu0 0
      %436 = vmatmul.mubr.bf16.gmra.mrb[0].mxu0 %v346
      %v437 = vpop.f32.mrb[0].mxu0
      %v438 = vadd.f32 0.0, %v437
      %v439 = vpop.f32.mrb[0].mxu0
      %v440 = vpop.f32.mrb[0].mxu0
      %v441 = vadd.f32 0.0, %v440
      %v442 = vpop.f32.mrb[0].mxu0
      %443 = vmatprep.mubr.bf16.mxu0 0
      %444 = vmatmul.mubr.bf16.gmra.mrb[0].mxu0 %v349
      %v445 = vpop.f32.mrb[0].mxu0
      %v446 = vadd.f32 0.0, %v445
      %v447 = vpop.f32.mrb[0].mxu0
      %v448 = vpop.f32.mrb[0].mxu0
      %v449 = vadd.f32 0.0, %v448
      %v450 = vpop.f32.mrb[0].mxu0
      %451 = vmatprep.mubr.bf16.mxu0 0
      %452 = vmatmul.mubr.bf16.gmra.mrb[0].mxu0 %v352
      %v453 = vpop.f32.mrb[0].mxu0
      %v454 = vadd.f32 0.0, %v453
      %v455 = vpop.f32.mrb[0].mxu0
      %v456 = vpop.f32.mrb[0].mxu0
      %v457 = vadd.f32 0.0, %v456
      %v458 = vpop.f32.mrb[0].mxu0
      %459 = vmatprep.mubr.bf16.mxu0 0
      %460 = vmatmul.mubr.bf16.gmra.mrb[0].mxu0 %v355
      %v461 = vpop.f32.mrb[0].mxu0
      %v462 = vadd.f32 0.0, %v461
      %v463 = vpop.f32.mrb[0].mxu0
      %v464 = vpop.f32.mrb[0].mxu0
      %v465 = vadd.f32 0.0, %v464
      %v466 = vpop.f32.mrb[0].mxu0
      %467 = vmatprep.mubr.bf16.mxu0 0
      %468 = vmatmul.mubr.bf16.gmra.mrb[0].mxu0 %v358
      %v469 = vpop.f32.mrb[0].mxu0
      %v470 = vadd.f32 0.0, %v469
      %v471 = vpop.f32.mrb[0].mxu0
      %v472 = vpop.f32.mrb[0].mxu0
      %v473 = vadd.f32 0.0, %v472
      %v474 = vpop.f32.mrb[0].mxu0
      %475 = vmatprep.mubr.bf16.mxu0 0
      %476 = vmatmul.mubr.bf16.gmra.mrb[0].mxu0 %v361
      %v477 = vpop.f32.mrb[0].mxu0
      %v478 = vadd.f32 0.0, %v477
      %v479 = vpop.f32.mrb[0].mxu0
      %v480 = vpop.f32.mrb[0].mxu0
      %v481 = vadd.f32 0.0, %v480
      %v482 = vpop.f32.mrb[0].mxu0
      %483 = vmatprep.mubr.bf16.mxu0 0
      %484 = vmatmul.mubr.bf16.gmra.mrb[0].mxu0 %v364
      %v485 = vpop.f32.mrb[0].mxu0
      %v486 = vadd.f32 0.0, %v485
      %v487 = vpop.f32.mrb[0].mxu0
      %v488 = vpop.f32.mrb[0].mxu0
      %v489 = vadd.f32 0.0, %v488
      %v490 = vpop.f32.mrb[0].mxu0
      %491 = vmatprep.mubr.bf16.mxu0 0
      %492 = vmatmul.mubr.bf16.gmra.mrb[0].mxu0 %v367
      %v493 = vpop.f32.mrb[0].mxu0
      %v494 = vadd.f32 0.0, %v493
      %v495 = vpop.f32.mrb[0].mxu0
      %v496 = vpop.f32.mrb[0].mxu0
      %v497 = vadd.f32 0.0, %v496
      %v498 = vpop.f32.mrb[0].mxu0
      %499 = vmatprep.mubr.bf16.mxu0 0
      %500 = vmatmul.mubr.bf16.gmra.mrb[0].mxu0 %v370
      %v501 = vpop.f32.mrb[0].mxu0
      %v502 = vadd.f32 0.0, %v501
      %v503 = vpop.f32.mrb[0].mxu0
      %v504 = vpop.f32.mrb[0].mxu0
      %v505 = vadd.f32 0.0, %v504
      %v506 = vpop.f32.mrb[0].mxu0
      %507 = vmatprep.mubr.bf16.mxu0 0
      %508 = vmatmul.mubr.bf16.gmra.mrb[0].mxu0 %v373
      %v509 = vpop.f32.mrb[0].mxu0
      %v510 = vadd.f32 0.0, %v509
      %v511 = vpop.f32.mrb[0].mxu0
      %v512 = vpop.f32.mrb[0].mxu0
      %v513 = vadd.f32 0.0, %v512
      %v514 = vpop.f32.mrb[0].mxu0
      %515 = vmatprep.mubr.bf16.mxu0 0
      %516 = vmatmul.mubr.bf16.gmra.mrb[0].mxu0 %v376
      %v517 = vpop.f32.mrb[0].mxu0
      %v518 = vadd.f32 0.0, %v517
      %v519 = vpop.f32.mrb[0].mxu0
      %v520 = vpop.f32.mrb[0].mxu0
      %v521 = vadd.f32 0.0, %v520
      %v522 = vpop.f32.mrb[0].mxu0
      %523 = vmatprep.mubr.bf16.mxu0 0
      %524 = vmatmul.mubr.bf16.gmra.mrb[0].mxu0 %v379
      %v525 = vpop.f32.mrb[0].mxu0
      %v526 = vadd.f32 0.0, %v525
      %v527 = vpop.f32.mrb[0].mxu0
      %v528 = vpop.f32.mrb[0].mxu0
      %v529 = vadd.f32 0.0, %v528
      %v530 = vpop.f32.mrb[0].mxu0
      %531 = vmatprep.mubr.bf16.mxu0 0
      %532 = vmatmul.mubr.bf16.gmra.mrb[0].mxu0 %v382
      %v533 = vpop.f32.mrb[0].mxu0
      %v534 = vadd.f32 0.0, %v533
      %v535 = vpop.f32.mrb[0].mxu0
      %v536 = vpop.f32.mrb[0].mxu0
      %v537 = vadd.f32 0.0, %v536
      %v538 = vpop.f32.mrb[0].mxu0
      %539 = vmatprep.mubr.bf16.mxu0 0
      %540 = vmatmul.mubr.bf16.gmra.mrb[0].mxu0 %v385
      %v541 = vpop.f32.mrb[0].mxu0
      %v542 = vadd.f32 0.0, %v541
      %v543 = vpop.f32.mrb[0].mxu0
      %v544 = vpop.f32.mrb[0].mxu0
      %v545 = vadd.f32 0.0, %v544
      %v546 = vpop.f32.mrb[0].mxu0
      %547 = vdwg.mxu0
      %v548 = vld [vmem:[%s2] sm:$0x1]
      %v550 = vlaneseq
      %v551 = vshrl.u32 %v550, 7
      %v552 = vsub.s32 0, %v551
      %v553 = vrot.slane %v548, %v552
      %v555 = vmul.f32 %v422, %v553
      %v556 = vmul.f32 %v425, %v553
      %v557 = vmul.f32 %v430, %v553
      %v558 = vmul.f32 %v433, %v553
      %v559 = vmul.f32 %v438, %v553
      %v560 = vmul.f32 %v441, %v553
      %v561 = vmul.f32 %v446, %v553
      %v562 = vmul.f32 %v449, %v553
      %v563 = vmul.f32 %v454, %v553
      %v564 = vmul.f32 %v457, %v553
      %v565 = vmul.f32 %v462, %v553
      %v566 = vmul.f32 %v465, %v553
      %v567 = vmul.f32 %v470, %v553
      %v568 = vmul.f32 %v473, %v553
      %v569 = vmul.f32 %v478, %v553
      %v570 = vmul.f32 %v481, %v553
      %v571 = vmul.f32 %v486, %v553
      %v572 = vmul.f32 %v489, %v553
      %v573 = vmul.f32 %v494, %v553
      %v574 = vmul.f32 %v497, %v553
      %v575 = vmul.f32 %v502, %v553
      %v576 = vmul.f32 %v505, %v553
      %v577 = vmul.f32 %v510, %v553
      %v578 = vmul.f32 %v513, %v553
      %v579 = vmul.f32 %v518, %v553
      %v580 = vmul.f32 %v521, %v553
      %v581 = vmul.f32 %v526, %v553
      %v582 = vmul.f32 %v529, %v553
      %v583 = vmul.f32 %v534, %v553
      %v584 = vmul.f32 %v537, %v553
      %v585 = vmul.f32 %v542, %v553
      %v586 = vmul.f32 %v545, %v553
      %v587 = vld [vmem:[%s3] sm:$0x1]
      %v589 = vlaneseq
      %v590 = vshrl.u32 %v589, 7
      %v591 = vsub.s32 0, %v590
      %v592 = vrot.slane %v587, %v591
      %v594 = vadd.f32 %v555, %v592
      %v595 = vadd.f32 %v556, %v592
      %v596 = vadd.f32 %v557, %v592
      %v597 = vadd.f32 %v558, %v592
      %v598 = vadd.f32 %v559, %v592
      %v599 = vadd.f32 %v560, %v592
      %v600 = vadd.f32 %v561, %v592
      %v601 = vadd.f32 %v562, %v592
      %v602 = vadd.f32 %v563, %v592
      %v603 = vadd.f32 %v564, %v592
      %v604 = vadd.f32 %v565, %v592
      %v605 = vadd.f32 %v566, %v592
      %v606 = vadd.f32 %v567, %v592
      %v607 = vadd.f32 %v568, %v592
      %v608 = vadd.f32 %v569, %v592
      %v609 = vadd.f32 %v570, %v592
      %v610 = vadd.f32 %v571, %v592
      %v611 = vadd.f32 %v572, %v592
      %v612 = vadd.f32 %v573, %v592
      %v613 = vadd.f32 %v574, %v592
      %v614 = vadd.f32 %v575, %v592
      %v615 = vadd.f32 %v576, %v592
      %v616 = vadd.f32 %v577, %v592
      %v617 = vadd.f32 %v578, %v592
      %v618 = vadd.f32 %v579, %v592
      %v619 = vadd.f32 %v580, %v592
      %v620 = vadd.f32 %v581, %v592
      %v621 = vadd.f32 %v582, %v592
      %v622 = vadd.f32 %v583, %v592
      %v623 = vadd.f32 %v584, %v592
      %v624 = vadd.f32 %v585, %v592
      %v625 = vadd.f32 %v586, %v592
      %626 = vst [vmem:[%s199] sm:$0xff] %v594
      %627 = vst [vmem:[%s199 + $0x8] sm:$0xff] %v595
      %628 = vst [vmem:[%s199 + $0x10] sm:$0xff] %v596
      %629 = vst [vmem:[%s199 + $0x18] sm:$0xff] %v597
      %630 = vst [vmem:[%s199 + $0x20] sm:$0xff] %v598
      %631 = vst [vmem:[%s199 + $0x28] sm:$0xff] %v599
      %632 = vst [vmem:[%s199 + $0x30] sm:$0xff] %v600
      %633 = vst [vmem:[%s199 + $0x38] sm:$0xff] %v601
      %634 = vst [vmem:[%s199 + $0x40] sm:$0xff] %v602
      %635 = vst [vmem:[%s199 + $0x48] sm:$0xff] %v603
      %636 = vst [vmem:[%s199 + $0x50] sm:$0xff] %v604
      %637 = vst [vmem:[%s199 + $0x58] sm:$0xff] %v605
      %638 = vst [vmem:[%s199 + $0x60] sm:$0xff] %v606
      %639 = vst [vmem:[%s199 + $0x68] sm:$0xff] %v607
      %640 = vst [vmem:[%s199 + $0x70] sm:$0xff] %v608
      %641 = vst [vmem:[%s199 + $0x78] sm:$0xff] %v609
      %642 = vst [vmem:[%s199 + $0x80] sm:$0xff] %v610
      %643 = vst [vmem:[%s199 + $0x88] sm:$0xff] %v611
      %644 = vst [vmem:[%s199 + $0x90] sm:$0xff] %v612
      %645 = vst [vmem:[%s199 + $0x98] sm:$0xff] %v613
      %646 = vst [vmem:[%s199 + $0xa0] sm:$0xff] %v614
      %647 = vst [vmem:[%s199 + $0xa8] sm:$0xff] %v615
      %648 = vst [vmem:[%s199 + $0xb0] sm:$0xff] %v616
      %649 = vst [vmem:[%s199 + $0xb8] sm:$0xff] %v617
      %650 = vst [vmem:[%s199 + $0xc0] sm:$0xff] %v618
      %651 = vst [vmem:[%s199 + $0xc8] sm:$0xff] %v619
      %652 = vst [vmem:[%s199 + $0xd0] sm:$0xff] %v620
      %653 = vst [vmem:[%s199 + $0xd8] sm:$0xff] %v621
      %654 = vst [vmem:[%s199 + $0xe0] sm:$0xff] %v622
      %655 = vst [vmem:[%s199 + $0xe8] sm:$0xff] %v623
      %656 = vst [vmem:[%s199 + $0xf0] sm:$0xff] %v624
      %657 = vst [vmem:[%s199 + $0xf8] sm:$0xff] %v625
      %s658 = smul.u32 32, %s15
      %p659 = scmp.lt.s32.totalorder %s658, 63
      %s660 = scalar_select %p659, %s658, 63
      %s661 = smul.addr %s660, 8
      %s662 = scalar_lea.vmem %s4, %s661
      // Predicated region
      $region37: #{_lambda_.25} parent=35 // pred_check
        %p663 = pneg %p122
      $region38: #{_lambda_.25} parent=35 // pred_check_branch
        %665 = sbr.rel (%p663) target = $region40
      $region39: #{_lambda_.25} parent=35 // pred_region
        %s666 = smul.u32 32, %s15
      $region40: #{_lambda_.25} parent=35 // pred_fallthru
        _
    $region36: #{_lambda_.25} parent=5 // pred_fallthru
      _
    %p667 = scmp.le.s32.totalorder 2, %s10
    // Predicated region
    $region41: #{_lambda_.25} parent=5 // pred_check
      %p668 = pneg %p667
    $region42: #{_lambda_.25} parent=5 // pred_check_branch
      %670 = sbr.rel (%p668) target = $region44
    $region43: #{_lambda_.25} parent=5 // pred_region
      %s671 = ssub.s32 %s10, 2
      // Predicated region
      $region45: #{_lambda_.25} parent=43 // pred_check
        %p672 = pneg %p128
      $region46: #{_lambda_.25} parent=43 // pred_check_branch
        %674 = sbr.rel (%p672) target = $region48
      $region47: #{_lambda_.25} parent=43 // pred_region
        %s675 = smul.u32 32, %s16
        %p676 = scmp.lt.s32.totalorder %s675, 63
        %s677 = scalar_select %p676, %s675, 63
        %s678 = smul.addr %s677, 8
        %s679 = scalar_lea.vmem %s4, %s678
      $region48: #{_lambda_.25} parent=43 // pred_fallthru
        _
    $region44: #{_lambda_.25} parent=5 // pred_fallthru
      _
  $region6: #{_lambda_.25} parent=0 // loop_footer
    %s14 = sadd.s32 1, %s10
  $region7: #{_lambda_.25} parent=0 // loop_footer_branch
    %9 = sbr.rel target = $region3
  $region8: #{_lambda_.25} parent=0 // loop_exit
    _

// kernel: _lambda_.26
$region0: #{_lambda_.26}
  #allocation0 [shape = 'u32[]', space=smem, size = 0x4, offset = 0x4, fixed_abs, tag = 'smem constant byte address 0x4 - core index']
  #allocation1 [shape = 'u32[144,128]{1,0:T(1,128)}', space=vmem, size = 0x12000, scoped, tag = 'internal scratch']
  %s0 = inlined_call_operand.vmem [shape: bf16[128,128], index: 0, kind: input, shape index: {}]
  %s1 = inlined_call_operand.vmem [shape: bf16[128,128], index: 1, kind: input, shape index: {}]
  %s2 = inlined_call_operand.vmem [shape: f32[1,128], index: 2, kind: input, shape index: {}]
  %s3 = inlined_call_operand.vmem [shape: f32[1,128], index: 3, kind: input, shape index: {}]
  %s4 = inlined_call_operand.vmem [shape: f32[128,128], index: 4, kind: output, shape index: {}]
  %s5 = sld [smem:[#allocation0]]
  $region26: #{_lambda_.26} parent=0
    _
  %s7 = ssub.s32 1, %s5
  %s8 = scalar_select 0, %s7, %s5
  // Predicated region
  $region2: #{_lambda_.26} parent=0 // pred_check
    _
  $region3: #{_lambda_.26} parent=0 // pred_check_branch
    %10 = sbr.rel (0) target = $region5
  $region4: #{_lambda_.26} parent=0 // pred_region
    _
  $region5: #{_lambda_.26} parent=0 // pred_fallthru
    _
  // Predicated region
  $region6: #{_lambda_.26} parent=0 // pred_check
    _
  $region7: #{_lambda_.26} parent=0 // pred_check_branch
    %12 = sbr.rel (0) target = $region9
  $region8: #{_lambda_.26} parent=0 // pred_region
    _
  $region9: #{_lambda_.26} parent=0 // pred_fallthru
    _
  // Predicated region
  $region10: #{_lambda_.26} parent=0 // pred_check
    _
  $region11: #{_lambda_.26} parent=0 // pred_check_branch
    %14 = sbr.rel (0) target = $region13
  $region12: #{_lambda_.26} parent=0 // pred_region
    _
  $region13: #{_lambda_.26} parent=0 // pred_fallthru
    _
  // Predicated region
  $region14: #{_lambda_.26} parent=0 // pred_check
    _
  $region15: #{_lambda_.26} parent=0 // pred_check_branch
    %16 = sbr.rel (0) target = $region17
  $region16: #{_lambda_.26} parent=0 // pred_region
    _
  $region17: #{_lambda_.26} parent=0 // pred_fallthru
    _
  %v18 = vld [vmem:[%s0] sm:$0xf]
  %v19 = vld [vmem:[%s0 + $0x4] sm:$0xf]
  %v20 = vld [vmem:[%s0 + $0x8] sm:$0xf]
  %v21 = vld [vmem:[%s0 + $0xc] sm:$0xf]
  %v22 = vld [vmem:[%s0 + $0x10] sm:$0xf]
  %v23 = vld [vmem:[%s0 + $0x14] sm:$0xf]
  %v24 = vld [vmem:[%s0 + $0x18] sm:$0xf]
  %v25 = vld [vmem:[%s0 + $0x1c] sm:$0xf]
  %v26 = vld [vmem:[%s0 + $0x20] sm:$0xf]
  %v27 = vld [vmem:[%s0 + $0x24] sm:$0xf]
  %v28 = vld [vmem:[%s0 + $0x28] sm:$0xf]
  %v29 = vld [vmem:[%s0 + $0x2c] sm:$0xf]
  %v30 = vld [vmem:[%s0 + $0x30] sm:$0xf]
  %v31 = vld [vmem:[%s0 + $0x34] sm:$0xf]
  %v32 = vld [vmem:[%s0 + $0x38] sm:$0xf]
  %v33 = vld [vmem:[%s0 + $0x3c] sm:$0xf]
  %v34 = vld [vmem:[%s1] sm:$0xf]
  %v35 = vld [vmem:[%s1 + $0x4] sm:$0xf]
  %v36 = vld [vmem:[%s1 + $0x8] sm:$0xf]
  %v37 = vld [vmem:[%s1 + $0xc] sm:$0xf]
  %v38 = vld [vmem:[%s1 + $0x10] sm:$0xf]
  %v39 = vld [vmem:[%s1 + $0x14] sm:$0xf]
  %v40 = vld [vmem:[%s1 + $0x18] sm:$0xf]
  %v41 = vld [vmem:[%s1 + $0x1c] sm:$0xf]
  %v42 = vld [vmem:[%s1 + $0x20] sm:$0xf]
  %v43 = vld [vmem:[%s1 + $0x24] sm:$0xf]
  %v44 = vld [vmem:[%s1 + $0x28] sm:$0xf]
  %v45 = vld [vmem:[%s1 + $0x2c] sm:$0xf]
  %v46 = vld [vmem:[%s1 + $0x30] sm:$0xf]
  %v47 = vld [vmem:[%s1 + $0x34] sm:$0xf]
  %v48 = vld [vmem:[%s1 + $0x38] sm:$0xf]
  %v49 = vld [vmem:[%s1 + $0x3c] sm:$0xf]
  %v66 = vunpack.c.l.b16 %v18
  %v67 = vunpack.c.l.b16 %v19
  %v68 = vunpack.c.l.b16 %v20
  %v69 = vunpack.c.l.b16 %v21
  %v70 = vunpack.c.l.b16 %v22
  %v71 = vunpack.c.l.b16 %v23
  %v72 = vunpack.c.l.b16 %v24
  %v73 = vunpack.c.l.b16 %v25
  %v74 = vunpack.c.l.b16 %v26
  %v75 = vunpack.c.l.b16 %v27
  %v76 = vunpack.c.l.b16 %v28
  %v77 = vunpack.c.l.b16 %v29
  %v78 = vunpack.c.l.b16 %v30
  %v79 = vunpack.c.l.b16 %v31
  %v80 = vunpack.c.l.b16 %v32
  %v81 = vunpack.c.l.b16 %v33
  %v82 = vpack.c.b16 %v67, %v66
  %v83 = vpack.c.b16 %v69, %v68
  %v84 = vpack.c.b16 %v71, %v70
  %v85 = vpack.c.b16 %v73, %v72
  %v86 = vpack.c.b16 %v75, %v74
  %v87 = vpack.c.b16 %v77, %v76
  %v88 = vpack.c.b16 %v79, %v78
  %v89 = vpack.c.b16 %v81, %v80
  %v114 = vunpack.c.l.b16 %v34
  %v115 = vunpack.c.l.b16 %v35
  %v116 = vunpack.c.l.b16 %v36
  %v117 = vunpack.c.l.b16 %v37
  %v118 = vunpack.c.l.b16 %v38
  %v119 = vunpack.c.l.b16 %v39
  %v120 = vunpack.c.l.b16 %v40
  %v121 = vunpack.c.l.b16 %v41
  %v122 = vunpack.c.l.b16 %v42
  %v123 = vunpack.c.l.b16 %v43
  %v124 = vunpack.c.l.b16 %v44
  %v125 = vunpack.c.l.b16 %v45
  %v126 = vunpack.c.l.b16 %v46
  %v127 = vunpack.c.l.b16 %v47
  %v128 = vunpack.c.l.b16 %v48
  %v129 = vunpack.c.l.b16 %v49
  %v130 = vpack.c.b16 %v115, %v114
  %v131 = vpack.c.b16 %v117, %v116
  %v132 = vpack.c.b16 %v119, %v118
  %v133 = vpack.c.b16 %v121, %v120
  %v134 = vpack.c.b16 %v123, %v122
  %v135 = vpack.c.b16 %v125, %v124
  %v136 = vpack.c.b16 %v127, %v126
  %v137 = vpack.c.b16 %v129, %v128
  %146 = vmatprep.subr.bf16.mxu0 0
  %147 = vmatpush1.bf16.msra.mxu0 %v130
  %148 = vmatprep.subr.bf16.mxu0 0
  %149 = vmatpush1.bf16.msra.mxu0 %v131
  %150 = vmatprep.subr.bf16.mxu0 0
  %151 = vmatpush1.bf16.msra.mxu0 %v132
  %152 = vmatprep.subr.bf16.mxu0 0
  %153 = vmatpush1.bf16.msra.mxu0 %v133
  %154 = vmatprep.subr.bf16.mxu0 0
  %155 = vmatpush1.bf16.msra.mxu0 %v134
  %156 = vmatprep.subr.bf16.mxu0 0
  %157 = vmatpush1.bf16.msra.mxu0 %v135
  %158 = vmatprep.subr.bf16.mxu0 0
  %159 = vmatpush1.bf16.msra.mxu0 %v136
  %160 = vmatprep.subr.bf16.mxu0 0
  %161 = vmatpush1.bf16.msra.mxu0 %v137
  %162 = vmatprep.subr.bf16.mxu0 0
  %163 = vmatpush1.bf16.msra.mxu0 0
  %164 = vmatprep.subr.bf16.mxu0 0
  %165 = vmatpush1.bf16.msra.mxu0 0
  %166 = vmatprep.subr.bf16.mxu0 0
  %167 = vmatpush1.bf16.msra.mxu0 0
  %168 = vmatprep.subr.bf16.mxu0 0
  %169 = vmatpush1.bf16.msra.mxu0 0
  %170 = vmatprep.subr.bf16.mxu0 0
  %171 = vmatpush1.bf16.msra.mxu0 0
  %172 = vmatprep.subr.bf16.mxu0 0
  %173 = vmatpush1.bf16.msra.mxu0 0
  %174 = vmatprep.subr.bf16.mxu0 0
  %175 = vmatpush1.bf16.msra.mxu0 0
  %176 = vmatprep.subr.bf16.mxu0 0
  %177 = vmatpush1.bf16.msra.mxu0 0
  %178 = vmatprep.mubr.bf16.mxu0 0
  %179 = vmatmul.mubr.bf16.gmra.mrb[0].mxu0 %v82
  %v180 = vpop.f32.mrb[0].mxu0
  %v181 = vadd.f32 0.0, %v180
  %v182 = vpop.f32.mrb[0].mxu0
  %v183 = vpop.f32.mrb[0].mxu0
  %v184 = vadd.f32 0.0, %v183
  %v185 = vpop.f32.mrb[0].mxu0
  %186 = vmatprep.mubr.bf16.mxu0 0
  %187 = vmatmul.mubr.bf16.gmra.mrb[0].mxu0 %v83
  %v188 = vpop.f32.mrb[0].mxu0
  %v189 = vadd.f32 0.0, %v188
  %v190 = vpop.f32.mrb[0].mxu0
  %v191 = vpop.f32.mrb[0].mxu0
  %v192 = vadd.f32 0.0, %v191
  %v193 = vpop.f32.mrb[0].mxu0
  %194 = vmatprep.mubr.bf16.mxu0 0
  %195 = vmatmul.mubr.bf16.gmra.mrb[0].mxu0 %v84
  %v196 = vpop.f32.mrb[0].mxu0
  %v197 = vadd.f32 0.0, %v196
  %v198 = vpop.f32.mrb[0].mxu0
  %v199 = vpop.f32.mrb[0].mxu0
  %v200 = vadd.f32 0.0, %v199
  %v201 = vpop.f32.mrb[0].mxu0
  %202 = vmatprep.mubr.bf16.mxu0 0
  %203 = vmatmul.mubr.bf16.gmra.mrb[0].mxu0 %v85
  %v204 = vpop.f32.mrb[0].mxu0
  %v205 = vadd.f32 0.0, %v204
  %v206 = vpop.f32.mrb[0].mxu0
  %v207 = vpop.f32.mrb[0].mxu0
  %v208 = vadd.f32 0.0, %v207
  %v209 = vpop.f32.mrb[0].mxu0
  %210 = vmatprep.mubr.bf16.mxu0 0
  %211 = vmatmul.mubr.bf16.gmra.mrb[0].mxu0 %v86
  %v212 = vpop.f32.mrb[0].mxu0
  %v213 = vadd.f32 0.0, %v212
  %v214 = vpop.f32.mrb[0].mxu0
  %v215 = vpop.f32.mrb[0].mxu0
  %v216 = vadd.f32 0.0, %v215
  %v217 = vpop.f32.mrb[0].mxu0
  %218 = vmatprep.mubr.bf16.mxu0 0
  %219 = vmatmul.mubr.bf16.gmra.mrb[0].mxu0 %v87
  %v220 = vpop.f32.mrb[0].mxu0
  %v221 = vadd.f32 0.0, %v220
  %v222 = vpop.f32.mrb[0].mxu0
  %v223 = vpop.f32.mrb[0].mxu0
  %v224 = vadd.f32 0.0, %v223
  %v225 = vpop.f32.mrb[0].mxu0
  %226 = vmatprep.mubr.bf16.mxu0 0
  %227 = vmatmul.mubr.bf16.gmra.mrb[0].mxu0 %v88
  %v228 = vpop.f32.mrb[0].mxu0
  %v229 = vadd.f32 0.0, %v228
  %v230 = vpop.f32.mrb[0].mxu0
  %v231 = vpop.f32.mrb[0].mxu0
  %v232 = vadd.f32 0.0, %v231
  %v233 = vpop.f32.mrb[0].mxu0
  %234 = vmatprep.mubr.bf16.mxu0 0
  %235 = vmatmul.mubr.bf16.gmra.mrb[0].mxu0 %v89
  %v236 = vpop.f32.mrb[0].mxu0
  %v237 = vadd.f32 0.0, %v236
  %v238 = vpop.f32.mrb[0].mxu0
  %v239 = vpop.f32.mrb[0].mxu0
  %v240 = vadd.f32 0.0, %v239
  %v241 = vpop.f32.mrb[0].mxu0
  %242 = vdwg.mxu0
  %v243 = vld [vmem:[%s2] sm:$0x1]
  %v245 = vlaneseq
  %v246 = vshrl.u32 %v245, 7
  %v247 = vsub.s32 0, %v246
  %v248 = vrot.slane %v243, %v247
  %v250 = vmul.f32 %v181, %v248
  %v251 = vmul.f32 %v184, %v248
  %v252 = vmul.f32 %v189, %v248
  %v253 = vmul.f32 %v192, %v248
  %v254 = vmul.f32 %v197, %v248
  %v255 = vmul.f32 %v200, %v248
  %v256 = vmul.f32 %v205, %v248
  %v257 = vmul.f32 %v208, %v248
  %v258 = vmul.f32 %v213, %v248
  %v259 = vmul.f32 %v216, %v248
  %v260 = vmul.f32 %v221, %v248
  %v261 = vmul.f32 %v224, %v248
  %v262 = vmul.f32 %v229, %v248
  %v263 = vmul.f32 %v232, %v248
  %v264 = vmul.f32 %v237, %v248
  %v265 = vmul.f32 %v240, %v248
  %v266 = vld [vmem:[%s3] sm:$0x1]
  %v268 = vlaneseq
  %v269 = vshrl.u32 %v268, 7
  %v270 = vsub.s32 0, %v269
  %v271 = vrot.slane %v266, %v270
  %v273 = vadd.f32 %v250, %v271
  %v274 = vadd.f32 %v251, %v271
  %v275 = vadd.f32 %v252, %v271
  %v276 = vadd.f32 %v253, %v271
  %v277 = vadd.f32 %v254, %v271
  %v278 = vadd.f32 %v255, %v271
  %v279 = vadd.f32 %v256, %v271
  %v280 = vadd.f32 %v257, %v271
  %v281 = vadd.f32 %v258, %v271
  %v282 = vadd.f32 %v259, %v271
  %v283 = vadd.f32 %v260, %v271
  %v284 = vadd.f32 %v261, %v271
  %v285 = vadd.f32 %v262, %v271
  %v286 = vadd.f32 %v263, %v271
  %v287 = vadd.f32 %v264, %v271
  %v288 = vadd.f32 %v265, %v271
  %289 = vst [vmem:[%s4] sm:$0xff] %v273
  %290 = vst [vmem:[%s4 + $0x8] sm:$0xff] %v274
  %291 = vst [vmem:[%s4 + $0x10] sm:$0xff] %v275
  %292 = vst [vmem:[%s4 + $0x18] sm:$0xff] %v276
  %293 = vst [vmem:[%s4 + $0x20] sm:$0xff] %v277
  %294 = vst [vmem:[%s4 + $0x28] sm:$0xff] %v278
  %295 = vst [vmem:[%s4 + $0x30] sm:$0xff] %v279
  %296 = vst [vmem:[%s4 + $0x38] sm:$0xff] %v280
  %297 = vst [vmem:[%s4 + $0x40] sm:$0xff] %v281
  %298 = vst [vmem:[%s4 + $0x48] sm:$0xff] %v282
  %299 = vst [vmem:[%s4 + $0x50] sm:$0xff] %v283
  %300 = vst [vmem:[%s4 + $0x58] sm:$0xff] %v284
  %301 = vst [vmem:[%s4 + $0x60] sm:$0xff] %v285
  %302 = vst [vmem:[%s4 + $0x68] sm:$0xff] %v286
  %303 = vst [vmem:[%s4 + $0x70] sm:$0xff] %v287
  %304 = vst [vmem:[%s4 + $0x78] sm:$0xff] %v288
  // Predicated region
  $region18: #{_lambda_.26} parent=0 // pred_check
    _
  $region19: #{_lambda_.26} parent=0 // pred_check_branch
    %306 = sbr.rel (0) target = $region21
  $region20: #{_lambda_.26} parent=0 // pred_region
    _
  $region21: #{_lambda_.26} parent=0 // pred_fallthru
    _
  // Predicated region
  $region22: #{_lambda_.26} parent=0 // pred_check
    _
  $region23: #{_lambda_.26} parent=0 // pred_check_branch
    %308 = sbr.rel (0) target = $region25
  $region24: #{_lambda_.26} parent=0 // pred_region
    _
  $region25: #{_lambda_.26} parent=0 // pred_fallthru
    _

// kernel: _lambda_.27
$region0: #{_lambda_.27}
  #allocation0 [shape = 'u32[]', space=smem, size = 0x4, offset = 0x4, fixed_abs, tag = 'smem constant byte address 0x4 - core index']
  #allocation1 [shape = 'u32[144,128]{1,0:T(1,128)}', space=vmem, size = 0x12000, scoped, tag = 'internal scratch']
  %s0 = inlined_call_operand.vmem [shape: bf16[32,256], index: 0, kind: input, shape index: {}]
  %s1 = inlined_call_operand.vmem [shape: bf16[256,128], index: 1, kind: input, shape index: {}]
  %s2 = inlined_call_operand.vmem [shape: f32[1,128], index: 2, kind: input, shape index: {}]
  %s3 = inlined_call_operand.vmem [shape: f32[1,128], index: 3, kind: input, shape index: {}]
  %s4 = inlined_call_operand.vmem [shape: f32[32,128], index: 4, kind: output, shape index: {}]
  %s5 = sld [smem:[#allocation0]]
  $region26: #{_lambda_.27} parent=0
    _
  %s7 = ssub.s32 1, %s5
  %s8 = scalar_select 0, %s7, %s5
  // Predicated region
  $region2: #{_lambda_.27} parent=0 // pred_check
    _
  $region3: #{_lambda_.27} parent=0 // pred_check_branch
    %10 = sbr.rel (0) target = $region5
  $region4: #{_lambda_.27} parent=0 // pred_region
    _
  $region5: #{_lambda_.27} parent=0 // pred_fallthru
    _
  // Predicated region
  $region6: #{_lambda_.27} parent=0 // pred_check
    _
  $region7: #{_lambda_.27} parent=0 // pred_check_branch
    %12 = sbr.rel (0) target = $region9
  $region8: #{_lambda_.27} parent=0 // pred_region
    _
  $region9: #{_lambda_.27} parent=0 // pred_fallthru
    _
  // Predicated region
  $region10: #{_lambda_.27} parent=0 // pred_check
    _
  $region11: #{_lambda_.27} parent=0 // pred_check_branch
    %14 = sbr.rel (0) target = $region13
  $region12: #{_lambda_.27} parent=0 // pred_region
    _
  $region13: #{_lambda_.27} parent=0 // pred_fallthru
    _
  // Predicated region
  $region14: #{_lambda_.27} parent=0 // pred_check
    _
  $region15: #{_lambda_.27} parent=0 // pred_check_branch
    %16 = sbr.rel (0) target = $region17
  $region16: #{_lambda_.27} parent=0 // pred_region
    _
  $region17: #{_lambda_.27} parent=0 // pred_fallthru
    _
  %v18 = vld [vmem:[%s0] sm:$0xff]
  %v19 = vld [vmem:[%s0 + $0x8] sm:$0xff]
  %v20 = vld [vmem:[%s0 + $0x10] sm:$0xff]
  %v21 = vld [vmem:[%s0 + $0x18] sm:$0xff]
  %v22 = vld [vmem:[%s1] sm:$0xf]
  %v23 = vld [vmem:[%s1 + $0x4] sm:$0xf]
  %v24 = vld [vmem:[%s1 + $0x8] sm:$0xf]
  %v25 = vld [vmem:[%s1 + $0xc] sm:$0xf]
  %v26 = vld [vmem:[%s1 + $0x10] sm:$0xf]
  %v27 = vld [vmem:[%s1 + $0x14] sm:$0xf]
  %v28 = vld [vmem:[%s1 + $0x18] sm:$0xf]
  %v29 = vld [vmem:[%s1 + $0x1c] sm:$0xf]
  %v30 = vld [vmem:[%s1 + $0x20] sm:$0xf]
  %v31 = vld [vmem:[%s1 + $0x24] sm:$0xf]
  %v32 = vld [vmem:[%s1 + $0x28] sm:$0xf]
  %v33 = vld [vmem:[%s1 + $0x2c] sm:$0xf]
  %v34 = vld [vmem:[%s1 + $0x30] sm:$0xf]
  %v35 = vld [vmem:[%s1 + $0x34] sm:$0xf]
  %v36 = vld [vmem:[%s1 + $0x38] sm:$0xf]
  %v37 = vld [vmem:[%s1 + $0x3c] sm:$0xf]
  %v38 = vld [vmem:[%s1 + $0x40] sm:$0xf]
  %v39 = vld [vmem:[%s1 + $0x44] sm:$0xf]
  %v40 = vld [vmem:[%s1 + $0x48] sm:$0xf]
  %v41 = vld [vmem:[%s1 + $0x4c] sm:$0xf]
  %v42 = vld [vmem:[%s1 + $0x50] sm:$0xf]
  %v43 = vld [vmem:[%s1 + $0x54] sm:$0xf]
  %v44 = vld [vmem:[%s1 + $0x58] sm:$0xf]
  %v45 = vld [vmem:[%s1 + $0x5c] sm:$0xf]
  %v46 = vld [vmem:[%s1 + $0x60] sm:$0xf]
  %v47 = vld [vmem:[%s1 + $0x64] sm:$0xf]
  %v48 = vld [vmem:[%s1 + $0x68] sm:$0xf]
  %v49 = vld [vmem:[%s1 + $0x6c] sm:$0xf]
  %v50 = vld [vmem:[%s1 + $0x70] sm:$0xf]
  %v51 = vld [vmem:[%s1 + $0x74] sm:$0xf]
  %v52 = vld [vmem:[%s1 + $0x78] sm:$0xf]
  %v53 = vld [vmem:[%s1 + $0x7c] sm:$0xf]
  %v58 = vunpack.c.l.b16 %v18
  %v59 = vunpack.c.h.b16 %v18
  %v60 = vunpack.c.l.b16 %v19
  %v61 = vunpack.c.h.b16 %v19
  %v62 = vunpack.c.l.b16 %v20
  %v63 = vunpack.c.h.b16 %v20
  %v64 = vunpack.c.l.b16 %v21
  %v65 = vunpack.c.h.b16 %v21
  %v66 = vpack.c.b16 %v60, %v58
  %v67 = vpack.c.b16 %v61, %v59
  %v68 = vpack.c.b16 %v64, %v62
  %v69 = vpack.c.b16 %v65, %v63
  %v106 = vunpack.c.l.b16 %v22
  %v107 = vunpack.c.l.b16 %v23
  %v108 = vunpack.c.l.b16 %v24
  %v109 = vunpack.c.l.b16 %v25
  %v110 = vunpack.c.l.b16 %v26
  %v111 = vunpack.c.l.b16 %v27
  %v112 = vunpack.c.l.b16 %v28
  %v113 = vunpack.c.l.b16 %v29
  %v114 = vunpack.c.l.b16 %v30
  %v115 = vunpack.c.l.b16 %v31
  %v116 = vunpack.c.l.b16 %v32
  %v117 = vunpack.c.l.b16 %v33
  %v118 = vunpack.c.l.b16 %v34
  %v119 = vunpack.c.l.b16 %v35
  %v120 = vunpack.c.l.b16 %v36
  %v121 = vunpack.c.l.b16 %v37
  %v122 = vunpack.c.l.b16 %v38
  %v123 = vunpack.c.l.b16 %v39
  %v124 = vunpack.c.l.b16 %v40
  %v125 = vunpack.c.l.b16 %v41
  %v126 = vunpack.c.l.b16 %v42
  %v127 = vunpack.c.l.b16 %v43
  %v128 = vunpack.c.l.b16 %v44
  %v129 = vunpack.c.l.b16 %v45
  %v130 = vunpack.c.l.b16 %v46
  %v131 = vunpack.c.l.b16 %v47
  %v132 = vunpack.c.l.b16 %v48
  %v133 = vunpack.c.l.b16 %v49
  %v134 = vunpack.c.l.b16 %v50
  %v135 = vunpack.c.l.b16 %v51
  %v136 = vunpack.c.l.b16 %v52
  %v137 = vunpack.c.l.b16 %v53
  %v138 = vpack.c.b16 %v107, %v106
  %v139 = vpack.c.b16 %v109, %v108
  %v140 = vpack.c.b16 %v111, %v110
  %v141 = vpack.c.b16 %v113, %v112
  %v142 = vpack.c.b16 %v115, %v114
  %v143 = vpack.c.b16 %v117, %v116
  %v144 = vpack.c.b16 %v119, %v118
  %v145 = vpack.c.b16 %v121, %v120
  %v146 = vpack.c.b16 %v123, %v122
  %v147 = vpack.c.b16 %v125, %v124
  %v148 = vpack.c.b16 %v127, %v126
  %v149 = vpack.c.b16 %v129, %v128
  %v150 = vpack.c.b16 %v131, %v130
  %v151 = vpack.c.b16 %v133, %v132
  %v152 = vpack.c.b16 %v135, %v134
  %v153 = vpack.c.b16 %v137, %v136
  %170 = vmatprep.subr.bf16.mxu0 0
  %171 = vmatpush1.bf16.msra.mxu0 %v138
  %172 = vmatprep.subr.bf16.mxu0 0
  %173 = vmatpush1.bf16.msra.mxu0 %v139
  %174 = vmatprep.subr.bf16.mxu0 0
  %175 = vmatpush1.bf16.msra.mxu0 %v140
  %176 = vmatprep.subr.bf16.mxu0 0
  %177 = vmatpush1.bf16.msra.mxu0 %v141
  %178 = vmatprep.subr.bf16.mxu0 0
  %179 = vmatpush1.bf16.msra.mxu0 %v142
  %180 = vmatprep.subr.bf16.mxu0 0
  %181 = vmatpush1.bf16.msra.mxu0 %v143
  %182 = vmatprep.subr.bf16.mxu0 0
  %183 = vmatpush1.bf16.msra.mxu0 %v144
  %184 = vmatprep.subr.bf16.mxu0 0
  %185 = vmatpush1.bf16.msra.mxu0 %v145
  %186 = vmatprep.subr.bf16.mxu0 0
  %187 = vmatpush1.bf16.msra.mxu0 %v146
  %188 = vmatprep.subr.bf16.mxu0 0
  %189 = vmatpush1.bf16.msra.mxu0 %v147
  %190 = vmatprep.subr.bf16.mxu0 0
  %191 = vmatpush1.bf16.msra.mxu0 %v148
  %192 = vmatprep.subr.bf16.mxu0 0
  %193 = vmatpush1.bf16.msra.mxu0 %v149
  %194 = vmatprep.subr.bf16.mxu0 0
  %195 = vmatpush1.bf16.msra.mxu0 %v150
  %196 = vmatprep.subr.bf16.mxu0 0
  %197 = vmatpush1.bf16.msra.mxu0 %v151
  %198 = vmatprep.subr.bf16.mxu0 0
  %199 = vmatpush1.bf16.msra.mxu0 %v152
  %200 = vmatprep.subr.bf16.mxu0 0
  %201 = vmatpush1.bf16.msra.mxu0 %v153
  %202 = vmatprep.mubr.bf16.mxu0 %v67
  %203 = vmatmul.mubr.bf16.gmra.mrb[0].mxu0 %v66
  %v204 = vpop.f32.mrb[0].mxu0
  %v205 = vadd.f32 0.0, %v204
  %v206 = vpop.f32.mrb[0].mxu0
  %v207 = vpop.f32.mrb[0].mxu0
  %v208 = vadd.f32 0.0, %v207
  %v209 = vpop.f32.mrb[0].mxu0
  %210 = vmatprep.mubr.bf16.mxu0 %v69
  %211 = vmatmul.mubr.bf16.gmra.mrb[0].mxu0 %v68
  %v212 = vpop.f32.mrb[0].mxu0
  %v213 = vadd.f32 0.0, %v212
  %v214 = vpop.f32.mrb[0].mxu0
  %v215 = vpop.f32.mrb[0].mxu0
  %v216 = vadd.f32 0.0, %v215
  %v217 = vpop.f32.mrb[0].mxu0
  %218 = vdwg.mxu0
  %v219 = vld [vmem:[%s2] sm:$0x1]
  %v221 = vlaneseq
  %v222 = vshrl.u32 %v221, 7
  %v223 = vsub.s32 0, %v222
  %v224 = vrot.slane %v219, %v223
  %v226 = vmul.f32 %v205, %v224
  %v227 = vmul.f32 %v208, %v224
  %v228 = vmul.f32 %v213, %v224
  %v229 = vmul.f32 %v216, %v224
  %v230 = vld [vmem:[%s3] sm:$0x1]
  %v232 = vlaneseq
  %v233 = vshrl.u32 %v232, 7
  %v234 = vsub.s32 0, %v233
  %v235 = vrot.slane %v230, %v234
  %v237 = vadd.f32 %v226, %v235
  %v238 = vadd.f32 %v227, %v235
  %v239 = vadd.f32 %v228, %v235
  %v240 = vadd.f32 %v229, %v235
  %241 = vst [vmem:[%s4] sm:$0xff] %v237
  %242 = vst [vmem:[%s4 + $0x8] sm:$0xff] %v238
  %243 = vst [vmem:[%s4 + $0x10] sm:$0xff] %v239
  %244 = vst [vmem:[%s4 + $0x18] sm:$0xff] %v240
  // Predicated region
  $region18: #{_lambda_.27} parent=0 // pred_check
    _
  $region19: #{_lambda_.27} parent=0 // pred_check_branch
    %246 = sbr.rel (0) target = $region21
  $region20: #{_lambda_.27} parent=0 // pred_region
    _
  $region21: #{_lambda_.27} parent=0 // pred_fallthru
    _
  // Predicated region
  $region22: #{_lambda_.27} parent=0 // pred_check
    _
  $region23: #{_lambda_.27} parent=0 // pred_check_branch
    %248 = sbr.rel (0) target = $region25
  $region24: #{_lambda_.27} parent=0 // pred_region
    _
  $region25: #{_lambda_.27} parent=0 // pred_fallthru
    _

// kernel: _lambda_.28
$region0: #{_lambda_.28}
  #allocation0 [shape = 'u32[]', space=smem, size = 0x4, offset = 0x4, fixed_abs, tag = 'smem constant byte address 0x4 - core index']
  #allocation1 [shape = 'u32[144,128]{1,0:T(1,128)}', space=vmem, size = 0x12000, scoped, tag = 'internal scratch']
  %s0 = inlined_call_operand.vmem [shape: bf16[8,512], index: 0, kind: input, shape index: {}]
  %s1 = inlined_call_operand.vmem [shape: bf16[512,128], index: 1, kind: input, shape index: {}]
  %s2 = inlined_call_operand.vmem [shape: f32[1,128], index: 2, kind: input, shape index: {}]
  %s3 = inlined_call_operand.vmem [shape: f32[1,128], index: 3, kind: input, shape index: {}]
  %s4 = inlined_call_operand.vmem [shape: f32[8,128], index: 4, kind: output, shape index: {}]
  %s5 = sld [smem:[#allocation0]]
  $region26: #{_lambda_.28} parent=0
    _
  %s7 = ssub.s32 1, %s5
  %s8 = scalar_select 0, %s7, %s5
  // Predicated region
  $region2: #{_lambda_.28} parent=0 // pred_check
    _
  $region3: #{_lambda_.28} parent=0 // pred_check_branch
    %10 = sbr.rel (0) target = $region5
  $region4: #{_lambda_.28} parent=0 // pred_region
    _
  $region5: #{_lambda_.28} parent=0 // pred_fallthru
    _
  // Predicated region
  $region6: #{_lambda_.28} parent=0 // pred_check
    _
  $region7: #{_lambda_.28} parent=0 // pred_check_branch
    %12 = sbr.rel (0) target = $region9
  $region8: #{_lambda_.28} parent=0 // pred_region
    _
  $region9: #{_lambda_.28} parent=0 // pred_fallthru
    _
  // Predicated region
  $region10: #{_lambda_.28} parent=0 // pred_check
    _
  $region11: #{_lambda_.28} parent=0 // pred_check_branch
    %14 = sbr.rel (0) target = $region13
  $region12: #{_lambda_.28} parent=0 // pred_region
    _
  $region13: #{_lambda_.28} parent=0 // pred_fallthru
    _
  // Predicated region
  $region14: #{_lambda_.28} parent=0 // pred_check
    _
  $region15: #{_lambda_.28} parent=0 // pred_check_branch
    %16 = sbr.rel (0) target = $region17
  $region16: #{_lambda_.28} parent=0 // pred_region
    _
  $region17: #{_lambda_.28} parent=0 // pred_fallthru
    _
  %v18 = vld [vmem:[%s0] sm:$0xff]
  %v19 = vld [vmem:[%s0 + $0x8] sm:$0xff]
  %v20 = vld [vmem:[%s1] sm:$0xf]
  %v21 = vld [vmem:[%s1 + $0x4] sm:$0xf]
  %v22 = vld [vmem:[%s1 + $0x8] sm:$0xf]
  %v23 = vld [vmem:[%s1 + $0xc] sm:$0xf]
  %v24 = vld [vmem:[%s1 + $0x10] sm:$0xf]
  %v25 = vld [vmem:[%s1 + $0x14] sm:$0xf]
  %v26 = vld [vmem:[%s1 + $0x18] sm:$0xf]
  %v27 = vld [vmem:[%s1 + $0x1c] sm:$0xf]
  %v28 = vld [vmem:[%s1 + $0x20] sm:$0xf]
  %v29 = vld [vmem:[%s1 + $0x24] sm:$0xf]
  %v30 = vld [vmem:[%s1 + $0x28] sm:$0xf]
  %v31 = vld [vmem:[%s1 + $0x2c] sm:$0xf]
  %v32 = vld [vmem:[%s1 + $0x30] sm:$0xf]
  %v33 = vld [vmem:[%s1 + $0x34] sm:$0xf]
  %v34 = vld [vmem:[%s1 + $0x38] sm:$0xf]
  %v35 = vld [vmem:[%s1 + $0x3c] sm:$0xf]
  %v36 = vld [vmem:[%s1 + $0x40] sm:$0xf]
  %v37 = vld [vmem:[%s1 + $0x44] sm:$0xf]
  %v38 = vld [vmem:[%s1 + $0x48] sm:$0xf]
  %v39 = vld [vmem:[%s1 + $0x4c] sm:$0xf]
  %v40 = vld [vmem:[%s1 + $0x50] sm:$0xf]
  %v41 = vld [vmem:[%s1 + $0x54] sm:$0xf]
  %v42 = vld [vmem:[%s1 + $0x58] sm:$0xf]
  %v43 = vld [vmem:[%s1 + $0x5c] sm:$0xf]
  %v44 = vld [vmem:[%s1 + $0x60] sm:$0xf]
  %v45 = vld [vmem:[%s1 + $0x64] sm:$0xf]
  %v46 = vld [vmem:[%s1 + $0x68] sm:$0xf]
  %v47 = vld [vmem:[%s1 + $0x6c] sm:$0xf]
  %v48 = vld [vmem:[%s1 + $0x70] sm:$0xf]
  %v49 = vld [vmem:[%s1 + $0x74] sm:$0xf]
  %v50 = vld [vmem:[%s1 + $0x78] sm:$0xf]
  %v51 = vld [vmem:[%s1 + $0x7c] sm:$0xf]
  %v52 = vld [vmem:[%s1 + $0x80] sm:$0xf]
  %v53 = vld [vmem:[%s1 + $0x84] sm:$0xf]
  %v54 = vld [vmem:[%s1 + $0x88] sm:$0xf]
  %v55 = vld [vmem:[%s1 + $0x8c] sm:$0xf]
  %v56 = vld [vmem:[%s1 + $0x90] sm:$0xf]
  %v57 = vld [vmem:[%s1 + $0x94] sm:$0xf]
  %v58 = vld [vmem:[%s1 + $0x98] sm:$0xf]
  %v59 = vld [vmem:[%s1 + $0x9c] sm:$0xf]
  %v60 = vld [vmem:[%s1 + $0xa0] sm:$0xf]
  %v61 = vld [vmem:[%s1 + $0xa4] sm:$0xf]
  %v62 = vld [vmem:[%s1 + $0xa8] sm:$0xf]
  %v63 = vld [vmem:[%s1 + $0xac] sm:$0xf]
  %v64 = vld [vmem:[%s1 + $0xb0] sm:$0xf]
  %v65 = vld [vmem:[%s1 + $0xb4] sm:$0xf]
  %v66 = vld [vmem:[%s1 + $0xb8] sm:$0xf]
  %v67 = vld [vmem:[%s1 + $0xbc] sm:$0xf]
  %v68 = vld [vmem:[%s1 + $0xc0] sm:$0xf]
  %v69 = vld [vmem:[%s1 + $0xc4] sm:$0xf]
  %v70 = vld [vmem:[%s1 + $0xc8] sm:$0xf]
  %v71 = vld [vmem:[%s1 + $0xcc] sm:$0xf]
  %v72 = vld [vmem:[%s1 + $0xd0] sm:$0xf]
  %v73 = vld [vmem:[%s1 + $0xd4] sm:$0xf]
  %v74 = vld [vmem:[%s1 + $0xd8] sm:$0xf]
  %v75 = vld [vmem:[%s1 + $0xdc] sm:$0xf]
  %v76 = vld [vmem:[%s1 + $0xe0] sm:$0xf]
  %v77 = vld [vmem:[%s1 + $0xe4] sm:$0xf]
  %v78 = vld [vmem:[%s1 + $0xe8] sm:$0xf]
  %v79 = vld [vmem:[%s1 + $0xec] sm:$0xf]
  %v80 = vld [vmem:[%s1 + $0xf0] sm:$0xf]
  %v81 = vld [vmem:[%s1 + $0xf4] sm:$0xf]
  %v82 = vld [vmem:[%s1 + $0xf8] sm:$0xf]
  %v83 = vld [vmem:[%s1 + $0xfc] sm:$0xf]
  %v86 = vunpack.c.l.b16 %v18
  %v87 = vunpack.c.h.b16 %v18
  %v88 = vunpack.c.l.b16 %v19
  %v89 = vunpack.c.h.b16 %v19
  %v90 = vpack.c.b16 %v86, %v86
  %v91 = vpack.c.b16 %v87, %v87
  %v92 = vpack.c.b16 %v88, %v88
  %v93 = vpack.c.b16 %v89, %v89
  %v162 = vunpack.c.l.b16 %v20
  %v163 = vunpack.c.l.b16 %v21
  %v164 = vunpack.c.l.b16 %v22
  %v165 = vunpack.c.l.b16 %v23
  %v166 = vunpack.c.l.b16 %v24
  %v167 = vunpack.c.l.b16 %v25
  %v168 = vunpack.c.l.b16 %v26
  %v169 = vunpack.c.l.b16 %v27
  %v170 = vunpack.c.l.b16 %v28
  %v171 = vunpack.c.l.b16 %v29
  %v172 = vunpack.c.l.b16 %v30
  %v173 = vunpack.c.l.b16 %v31
  %v174 = vunpack.c.l.b16 %v32
  %v175 = vunpack.c.l.b16 %v33
  %v176 = vunpack.c.l.b16 %v34
  %v177 = vunpack.c.l.b16 %v35
  %v178 = vunpack.c.l.b16 %v36
  %v179 = vunpack.c.l.b16 %v37
  %v180 = vunpack.c.l.b16 %v38
  %v181 = vunpack.c.l.b16 %v39
  %v182 = vunpack.c.l.b16 %v40
  %v183 = vunpack.c.l.b16 %v41
  %v184 = vunpack.c.l.b16 %v42
  %v185 = vunpack.c.l.b16 %v43
  %v186 = vunpack.c.l.b16 %v44
  %v187 = vunpack.c.l.b16 %v45
  %v188 = vunpack.c.l.b16 %v46
  %v189 = vunpack.c.l.b16 %v47
  %v190 = vunpack.c.l.b16 %v48
  %v191 = vunpack.c.l.b16 %v49
  %v192 = vunpack.c.l.b16 %v50
  %v193 = vunpack.c.l.b16 %v51
  %v194 = vunpack.c.l.b16 %v52
  %v195 = vunpack.c.l.b16 %v53
  %v196 = vunpack.c.l.b16 %v54
  %v197 = vunpack.c.l.b16 %v55
  %v198 = vunpack.c.l.b16 %v56
  %v199 = vunpack.c.l.b16 %v57
  %v200 = vunpack.c.l.b16 %v58
  %v201 = vunpack.c.l.b16 %v59
  %v202 = vunpack.c.l.b16 %v60
  %v203 = vunpack.c.l.b16 %v61
  %v204 = vunpack.c.l.b16 %v62
  %v205 = vunpack.c.l.b16 %v63
  %v206 = vunpack.c.l.b16 %v64
  %v207 = vunpack.c.l.b16 %v65
  %v208 = vunpack.c.l.b16 %v66
  %v209 = vunpack.c.l.b16 %v67
  %v210 = vunpack.c.l.b16 %v68
  %v211 = vunpack.c.l.b16 %v69
  %v212 = vunpack.c.l.b16 %v70
  %v213 = vunpack.c.l.b16 %v71
  %v214 = vunpack.c.l.b16 %v72
  %v215 = vunpack.c.l.b16 %v73
  %v216 = vunpack.c.l.b16 %v74
  %v217 = vunpack.c.l.b16 %v75
  %v218 = vunpack.c.l.b16 %v76
  %v219 = vunpack.c.l.b16 %v77
  %v220 = vunpack.c.l.b16 %v78
  %v221 = vunpack.c.l.b16 %v79
  %v222 = vunpack.c.l.b16 %v80
  %v223 = vunpack.c.l.b16 %v81
  %v224 = vunpack.c.l.b16 %v82
  %v225 = vunpack.c.l.b16 %v83
  %v226 = vpack.c.b16 %v163, %v162
  %v227 = vpack.c.b16 %v165, %v164
  %v228 = vpack.c.b16 %v167, %v166
  %v229 = vpack.c.b16 %v169, %v168
  %v230 = vpack.c.b16 %v171, %v170
  %v231 = vpack.c.b16 %v173, %v172
  %v232 = vpack.c.b16 %v175, %v174
  %v233 = vpack.c.b16 %v177, %v176
  %v234 = vpack.c.b16 %v179, %v178
  %v235 = vpack.c.b16 %v181, %v180
  %v236 = vpack.c.b16 %v183, %v182
  %v237 = vpack.c.b16 %v185, %v184
  %v238 = vpack.c.b16 %v187, %v186
  %v239 = vpack.c.b16 %v189, %v188
  %v240 = vpack.c.b16 %v191, %v190
  %v241 = vpack.c.b16 %v193, %v192
  %v242 = vpack.c.b16 %v195, %v194
  %v243 = vpack.c.b16 %v197, %v196
  %v244 = vpack.c.b16 %v199, %v198
  %v245 = vpack.c.b16 %v201, %v200
  %v246 = vpack.c.b16 %v203, %v202
  %v247 = vpack.c.b16 %v205, %v204
  %v248 = vpack.c.b16 %v207, %v206
  %v249 = vpack.c.b16 %v209, %v208
  %v250 = vpack.c.b16 %v211, %v210
  %v251 = vpack.c.b16 %v213, %v212
  %v252 = vpack.c.b16 %v215, %v214
  %v253 = vpack.c.b16 %v217, %v216
  %v254 = vpack.c.b16 %v219, %v218
  %v255 = vpack.c.b16 %v221, %v220
  %v256 = vpack.c.b16 %v223, %v222
  %v257 = vpack.c.b16 %v225, %v224
  %290 = vmatprep.subr.bf16.mxu0 0
  %291 = vmatpush1.bf16.msra.mxu0 %v226
  %292 = vmatprep.subr.bf16.mxu0 0
  %293 = vmatpush1.bf16.msra.mxu0 %v227
  %294 = vmatprep.subr.bf16.mxu0 0
  %295 = vmatpush1.bf16.msra.mxu0 %v228
  %296 = vmatprep.subr.bf16.mxu0 0
  %297 = vmatpush1.bf16.msra.mxu0 %v229
  %298 = vmatprep.subr.bf16.mxu0 0
  %299 = vmatpush1.bf16.msra.mxu0 %v230
  %300 = vmatprep.subr.bf16.mxu0 0
  %301 = vmatpush1.bf16.msra.mxu0 %v231
  %302 = vmatprep.subr.bf16.mxu0 0
  %303 = vmatpush1.bf16.msra.mxu0 %v232
  %304 = vmatprep.subr.bf16.mxu0 0
  %305 = vmatpush1.bf16.msra.mxu0 %v233
  %306 = vmatprep.subr.bf16.mxu0 0
  %307 = vmatpush1.bf16.msra.mxu0 %v234
  %308 = vmatprep.subr.bf16.mxu0 0
  %309 = vmatpush1.bf16.msra.mxu0 %v235
  %310 = vmatprep.subr.bf16.mxu0 0
  %311 = vmatpush1.bf16.msra.mxu0 %v236
  %312 = vmatprep.subr.bf16.mxu0 0
  %313 = vmatpush1.bf16.msra.mxu0 %v237
  %314 = vmatprep.subr.bf16.mxu0 0
  %315 = vmatpush1.bf16.msra.mxu0 %v238
  %316 = vmatprep.subr.bf16.mxu0 0
  %317 = vmatpush1.bf16.msra.mxu0 %v239
  %318 = vmatprep.subr.bf16.mxu0 0
  %319 = vmatpush1.bf16.msra.mxu0 %v240
  %320 = vmatprep.subr.bf16.mxu0 0
  %321 = vmatpush1.bf16.msra.mxu0 %v241
  %322 = vmatprep.mubr.bf16.mxu0 %v91
  %323 = vmatmul.mubr.bf16.gmra.mrb[0].mxu0 %v90
  %v324 = vpop.f32.mrb[0].mxu0
  %v325 = vadd.f32 0.0, %v324
  %v326 = vpop.f32.mrb[0].mxu0
  %v327 = vpop.f32.mrb[0].mxu0
  %v328 = vpop.f32.mrb[0].mxu0
  %329 = vdwg.mxu0
  %330 = vmatprep.subr.bf16.mxu0 0
  %331 = vmatpush1.bf16.msra.mxu0 %v242
  %332 = vmatprep.subr.bf16.mxu0 0
  %333 = vmatpush1.bf16.msra.mxu0 %v243
  %334 = vmatprep.subr.bf16.mxu0 0
  %335 = vmatpush1.bf16.msra.mxu0 %v244
  %336 = vmatprep.subr.bf16.mxu0 0
  %337 = vmatpush1.bf16.msra.mxu0 %v245
  %338 = vmatprep.subr.bf16.mxu0 0
  %339 = vmatpush1.bf16.msra.mxu0 %v246
  %340 = vmatprep.subr.bf16.mxu0 0
  %341 = vmatpush1.bf16.msra.mxu0 %v247
  %342 = vmatprep.subr.bf16.mxu0 0
  %343 = vmatpush1.bf16.msra.mxu0 %v248
  %344 = vmatprep.subr.bf16.mxu0 0
  %345 = vmatpush1.bf16.msra.mxu0 %v249
  %346 = vmatprep.subr.bf16.mxu0 0
  %347 = vmatpush1.bf16.msra.mxu0 %v250
  %348 = vmatprep.subr.bf16.mxu0 0
  %349 = vmatpush1.bf16.msra.mxu0 %v251
  %350 = vmatprep.subr.bf16.mxu0 0
  %351 = vmatpush1.bf16.msra.mxu0 %v252
  %352 = vmatprep.subr.bf16.mxu0 0
  %353 = vmatpush1.bf16.msra.mxu0 %v253
  %354 = vmatprep.subr.bf16.mxu0 0
  %355 = vmatpush1.bf16.msra.mxu0 %v254
  %356 = vmatprep.subr.bf16.mxu0 0
  %357 = vmatpush1.bf16.msra.mxu0 %v255
  %358 = vmatprep.subr.bf16.mxu0 0
  %359 = vmatpush1.bf16.msra.mxu0 %v256
  %360 = vmatprep.subr.bf16.mxu0 0
  %361 = vmatpush1.bf16.msra.mxu0 %v257
  %362 = vmatprep.mubr.bf16.mxu0 %v93
  %363 = vmatmul.mubr.bf16.gmra.mrb[0].mxu0 %v92
  %v364 = vpop.f32.mrb[0].mxu0
  %v365 = vadd.f32 %v325, %v364
  %v366 = vpop.f32.mrb[0].mxu0
  %v367 = vpop.f32.mrb[0].mxu0
  %v368 = vpop.f32.mrb[0].mxu0
  %369 = vdwg.mxu0
  %v370 = vld [vmem:[%s2] sm:$0x1]
  %v372 = vlaneseq
  %v373 = vshrl.u32 %v372, 7
  %v374 = vsub.s32 0, %v373
  %v375 = vrot.slane %v370, %v374
  %v377 = vmul.f32 %v365, %v375
  %v378 = vld [vmem:[%s3] sm:$0x1]
  %v380 = vlaneseq
  %v381 = vshrl.u32 %v380, 7
  %v382 = vsub.s32 0, %v381
  %v383 = vrot.slane %v378, %v382
  %v385 = vadd.f32 %v377, %v383
  %386 = vst [vmem:[%s4] sm:$0xff] %v385
  // Predicated region
  $region18: #{_lambda_.28} parent=0 // pred_check
    _
  $region19: #{_lambda_.28} parent=0 // pred_check_branch
    %388 = sbr.rel (0) target = $region21
  $region20: #{_lambda_.28} parent=0 // pred_region
    _
  $region21: #{_lambda_.28} parent=0 // pred_fallthru
    _
  // Predicated region
  $region22: #{_lambda_.28} parent=0 // pred_check
    _
  $region23: #{_lambda_.28} parent=0 // pred_check_branch
    %390 = sbr.rel (0) target = $region25
  $region24: #{_lambda_.28} parent=0 // pred_region
    _
  $region25: #{_lambda_.28} parent=0 // pred_fallthru
    _

// kernel: _lambda_.29
$region0: #{_lambda_.29}
  #allocation0 [shape = 'u32[]', space=smem, size = 0x4, offset = 0x4, fixed_abs, tag = 'smem constant byte address 0x4 - core index']
  #allocation1 [shape = 'u32[144,128]{1,0:T(1,128)}', space=vmem, size = 0x12000, scoped, tag = 'internal scratch']
  %s0 = inlined_call_operand.vmem [shape: bf16[8,1024], index: 0, kind: input, shape index: {}]
  %s1 = inlined_call_operand.vmem [shape: bf16[1024,128], index: 1, kind: input, shape index: {}]
  %s2 = inlined_call_operand.vmem [shape: f32[1,128], index: 2, kind: input, shape index: {}]
  %s3 = inlined_call_operand.vmem [shape: f32[1,128], index: 3, kind: input, shape index: {}]
  %s4 = inlined_call_operand.vmem [shape: f32[8,128], index: 4, kind: output, shape index: {}]
  %s5 = sld [smem:[#allocation0]]
  $region26: #{_lambda_.29} parent=0
    _
  %s7 = ssub.s32 1, %s5
  %s8 = scalar_select 0, %s7, %s5
  // Predicated region
  $region2: #{_lambda_.29} parent=0 // pred_check
    _
  $region3: #{_lambda_.29} parent=0 // pred_check_branch
    %10 = sbr.rel (0) target = $region5
  $region4: #{_lambda_.29} parent=0 // pred_region
    _
  $region5: #{_lambda_.29} parent=0 // pred_fallthru
    _
  // Predicated region
  $region6: #{_lambda_.29} parent=0 // pred_check
    _
  $region7: #{_lambda_.29} parent=0 // pred_check_branch
    %12 = sbr.rel (0) target = $region9
  $region8: #{_lambda_.29} parent=0 // pred_region
    _
  $region9: #{_lambda_.29} parent=0 // pred_fallthru
    _
  // Predicated region
  $region10: #{_lambda_.29} parent=0 // pred_check
    _
  $region11: #{_lambda_.29} parent=0 // pred_check_branch
    %14 = sbr.rel (0) target = $region13
  $region12: #{_lambda_.29} parent=0 // pred_region
    _
  $region13: #{_lambda_.29} parent=0 // pred_fallthru
    _
  // Predicated region
  $region14: #{_lambda_.29} parent=0 // pred_check
    _
  $region15: #{_lambda_.29} parent=0 // pred_check_branch
    %16 = sbr.rel (0) target = $region17
  $region16: #{_lambda_.29} parent=0 // pred_region
    _
  $region17: #{_lambda_.29} parent=0 // pred_fallthru
    _
  %v18 = vld [vmem:[%s0] sm:$0xff]
  %v19 = vld [vmem:[%s0 + $0x8] sm:$0xff]
  %v20 = vld [vmem:[%s0 + $0x10] sm:$0xff]
  %v21 = vld [vmem:[%s0 + $0x18] sm:$0xff]
  %v22 = vld [vmem:[%s1] sm:$0xf]
  %v23 = vld [vmem:[%s1 + $0x4] sm:$0xf]
  %v24 = vld [vmem:[%s1 + $0x8] sm:$0xf]
  %v25 = vld [vmem:[%s1 + $0xc] sm:$0xf]
  %v26 = vld [vmem:[%s1 + $0x10] sm:$0xf]
  %v27 = vld [vmem:[%s1 + $0x14] sm:$0xf]
  %v28 = vld [vmem:[%s1 + $0x18] sm:$0xf]
  %v29 = vld [vmem:[%s1 + $0x1c] sm:$0xf]
  %v30 = vld [vmem:[%s1 + $0x20] sm:$0xf]
  %v31 = vld [vmem:[%s1 + $0x24] sm:$0xf]
  %v32 = vld [vmem:[%s1 + $0x28] sm:$0xf]
  %v33 = vld [vmem:[%s1 + $0x2c] sm:$0xf]
  %v34 = vld [vmem:[%s1 + $0x30] sm:$0xf]
  %v35 = vld [vmem:[%s1 + $0x34] sm:$0xf]
  %v36 = vld [vmem:[%s1 + $0x38] sm:$0xf]
  %v37 = vld [vmem:[%s1 + $0x3c] sm:$0xf]
  %v38 = vld [vmem:[%s1 + $0x40] sm:$0xf]
  %v39 = vld [vmem:[%s1 + $0x44] sm:$0xf]
  %v40 = vld [vmem:[%s1 + $0x48] sm:$0xf]
  %v41 = vld [vmem:[%s1 + $0x4c] sm:$0xf]
  %v42 = vld [vmem:[%s1 + $0x50] sm:$0xf]
  %v43 = vld [vmem:[%s1 + $0x54] sm:$0xf]
  %v44 = vld [vmem:[%s1 + $0x58] sm:$0xf]
  %v45 = vld [vmem:[%s1 + $0x5c] sm:$0xf]
  %v46 = vld [vmem:[%s1 + $0x60] sm:$0xf]
  %v47 = vld [vmem:[%s1 + $0x64] sm:$0xf]
  %v48 = vld [vmem:[%s1 + $0x68] sm:$0xf]
  %v49 = vld [vmem:[%s1 + $0x6c] sm:$0xf]
  %v50 = vld [vmem:[%s1 + $0x70] sm:$0xf]
  %v51 = vld [vmem:[%s1 + $0x74] sm:$0xf]
  %v52 = vld [vmem:[%s1 + $0x78] sm:$0xf]
  %v53 = vld [vmem:[%s1 + $0x7c] sm:$0xf]
  %v54 = vld [vmem:[%s1 + $0x80] sm:$0xf]
  %v55 = vld [vmem:[%s1 + $0x84] sm:$0xf]
  %v56 = vld [vmem:[%s1 + $0x88] sm:$0xf]
  %v57 = vld [vmem:[%s1 + $0x8c] sm:$0xf]
  %v58 = vld [vmem:[%s1 + $0x90] sm:$0xf]
  %v59 = vld [vmem:[%s1 + $0x94] sm:$0xf]
  %v60 = vld [vmem:[%s1 + $0x98] sm:$0xf]
  %v61 = vld [vmem:[%s1 + $0x9c] sm:$0xf]
  %v62 = vld [vmem:[%s1 + $0xa0] sm:$0xf]
  %v63 = vld [vmem:[%s1 + $0xa4] sm:$0xf]
  %v64 = vld [vmem:[%s1 + $0xa8] sm:$0xf]
  %v65 = vld [vmem:[%s1 + $0xac] sm:$0xf]
  %v66 = vld [vmem:[%s1 + $0xb0] sm:$0xf]
  %v67 = vld [vmem:[%s1 + $0xb4] sm:$0xf]
  %v68 = vld [vmem:[%s1 + $0xb8] sm:$0xf]
  %v69 = vld [vmem:[%s1 + $0xbc] sm:$0xf]
  %v70 = vld [vmem:[%s1 + $0xc0] sm:$0xf]
  %v71 = vld [vmem:[%s1 + $0xc4] sm:$0xf]
  %v72 = vld [vmem:[%s1 + $0xc8] sm:$0xf]
  %v73 = vld [vmem:[%s1 + $0xcc] sm:$0xf]
  %v74 = vld [vmem:[%s1 + $0xd0] sm:$0xf]
  %v75 = vld [vmem:[%s1 + $0xd4] sm:$0xf]
  %v76 = vld [vmem:[%s1 + $0xd8] sm:$0xf]
  %v77 = vld [vmem:[%s1 + $0xdc] sm:$0xf]
  %v78 = vld [vmem:[%s1 + $0xe0] sm:$0xf]
  %v79 = vld [vmem:[%s1 + $0xe4] sm:$0xf]
  %v80 = vld [vmem:[%s1 + $0xe8] sm:$0xf]
  %v81 = vld [vmem:[%s1 + $0xec] sm:$0xf]
  %v82 = vld [vmem:[%s1 + $0xf0] sm:$0xf]
  %v83 = vld [vmem:[%s1 + $0xf4] sm:$0xf]
  %v84 = vld [vmem:[%s1 + $0xf8] sm:$0xf]
  %v85 = vld [vmem:[%s1 + $0xfc] sm:$0xf]
  %v86 = vld [vmem:[%s1 + $0x100] sm:$0xf]
  %v87 = vld [vmem:[%s1 + $0x104] sm:$0xf]
  %v88 = vld [vmem:[%s1 + $0x108] sm:$0xf]
  %v89 = vld [vmem:[%s1 + $0x10c] sm:$0xf]
  %v90 = vld [vmem:[%s1 + $0x110] sm:$0xf]
  %v91 = vld [vmem:[%s1 + $0x114] sm:$0xf]
  %v92 = vld [vmem:[%s1 + $0x118] sm:$0xf]
  %v93 = vld [vmem:[%s1 + $0x11c] sm:$0xf]
  %v94 = vld [vmem:[%s1 + $0x120] sm:$0xf]
  %v95 = vld [vmem:[%s1 + $0x124] sm:$0xf]
  %v96 = vld [vmem:[%s1 + $0x128] sm:$0xf]
  %v97 = vld [vmem:[%s1 + $0x12c] sm:$0xf]
  %v98 = vld [vmem:[%s1 + $0x130] sm:$0xf]
  %v99 = vld [vmem:[%s1 + $0x134] sm:$0xf]
  %v100 = vld [vmem:[%s1 + $0x138] sm:$0xf]
  %v101 = vld [vmem:[%s1 + $0x13c] sm:$0xf]
  %v102 = vld [vmem:[%s1 + $0x140] sm:$0xf]
  %v103 = vld [vmem:[%s1 + $0x144] sm:$0xf]
  %v104 = vld [vmem:[%s1 + $0x148] sm:$0xf]
  %v105 = vld [vmem:[%s1 + $0x14c] sm:$0xf]
  %v106 = vld [vmem:[%s1 + $0x150] sm:$0xf]
  %v107 = vld [vmem:[%s1 + $0x154] sm:$0xf]
  %v108 = vld [vmem:[%s1 + $0x158] sm:$0xf]
  %v109 = vld [vmem:[%s1 + $0x15c] sm:$0xf]
  %v110 = vld [vmem:[%s1 + $0x160] sm:$0xf]
  %v111 = vld [vmem:[%s1 + $0x164] sm:$0xf]
  %v112 = vld [vmem:[%s1 + $0x168] sm:$0xf]
  %v113 = vld [vmem:[%s1 + $0x16c] sm:$0xf]
  %v114 = vld [vmem:[%s1 + $0x170] sm:$0xf]
  %v115 = vld [vmem:[%s1 + $0x174] sm:$0xf]
  %v116 = vld [vmem:[%s1 + $0x178] sm:$0xf]
  %v117 = vld [vmem:[%s1 + $0x17c] sm:$0xf]
  %v118 = vld [vmem:[%s1 + $0x180] sm:$0xf]
  %v119 = vld [vmem:[%s1 + $0x184] sm:$0xf]
  %v120 = vld [vmem:[%s1 + $0x188] sm:$0xf]
  %v121 = vld [vmem:[%s1 + $0x18c] sm:$0xf]
  %v122 = vld [vmem:[%s1 + $0x190] sm:$0xf]
  %v123 = vld [vmem:[%s1 + $0x194] sm:$0xf]
  %v124 = vld [vmem:[%s1 + $0x198] sm:$0xf]
  %v125 = vld [vmem:[%s1 + $0x19c] sm:$0xf]
  %v126 = vld [vmem:[%s1 + $0x1a0] sm:$0xf]
  %v127 = vld [vmem:[%s1 + $0x1a4] sm:$0xf]
  %v128 = vld [vmem:[%s1 + $0x1a8] sm:$0xf]
  %v129 = vld [vmem:[%s1 + $0x1ac] sm:$0xf]
  %v130 = vld [vmem:[%s1 + $0x1b0] sm:$0xf]
  %v131 = vld [vmem:[%s1 + $0x1b4] sm:$0xf]
  %v132 = vld [vmem:[%s1 + $0x1b8] sm:$0xf]
  %v133 = vld [vmem:[%s1 + $0x1bc] sm:$0xf]
  %v134 = vld [vmem:[%s1 + $0x1c0] sm:$0xf]
  %v135 = vld [vmem:[%s1 + $0x1c4] sm:$0xf]
  %v136 = vld [vmem:[%s1 + $0x1c8] sm:$0xf]
  %v137 = vld [vmem:[%s1 + $0x1cc] sm:$0xf]
  %v138 = vld [vmem:[%s1 + $0x1d0] sm:$0xf]
  %v139 = vld [vmem:[%s1 + $0x1d4] sm:$0xf]
  %v140 = vld [vmem:[%s1 + $0x1d8] sm:$0xf]
  %v141 = vld [vmem:[%s1 + $0x1dc] sm:$0xf]
  %v142 = vld [vmem:[%s1 + $0x1e0] sm:$0xf]
  %v143 = vld [vmem:[%s1 + $0x1e4] sm:$0xf]
  %v144 = vld [vmem:[%s1 + $0x1e8] sm:$0xf]
  %v145 = vld [vmem:[%s1 + $0x1ec] sm:$0xf]
  %v146 = vld [vmem:[%s1 + $0x1f0] sm:$0xf]
  %v147 = vld [vmem:[%s1 + $0x1f4] sm:$0xf]
  %v148 = vld [vmem:[%s1 + $0x1f8] sm:$0xf]
  %v149 = vld [vmem:[%s1 + $0x1fc] sm:$0xf]
  %v154 = vunpack.c.l.b16 %v18
  %v155 = vunpack.c.h.b16 %v18
  %v156 = vunpack.c.l.b16 %v19
  %v157 = vunpack.c.h.b16 %v19
  %v158 = vunpack.c.l.b16 %v20
  %v159 = vunpack.c.h.b16 %v20
  %v160 = vunpack.c.l.b16 %v21
  %v161 = vunpack.c.h.b16 %v21
  %v162 = vpack.c.b16 %v154, %v154
  %v163 = vpack.c.b16 %v155, %v155
  %v164 = vpack.c.b16 %v156, %v156
  %v165 = vpack.c.b16 %v157, %v157
  %v166 = vpack.c.b16 %v158, %v158
  %v167 = vpack.c.b16 %v159, %v159
  %v168 = vpack.c.b16 %v160, %v160
  %v169 = vpack.c.b16 %v161, %v161
  %v306 = vunpack.c.l.b16 %v22
  %v307 = vunpack.c.l.b16 %v23
  %v308 = vunpack.c.l.b16 %v24
  %v309 = vunpack.c.l.b16 %v25
  %v310 = vunpack.c.l.b16 %v26
  %v311 = vunpack.c.l.b16 %v27
  %v312 = vunpack.c.l.b16 %v28
  %v313 = vunpack.c.l.b16 %v29
  %v314 = vunpack.c.l.b16 %v30
  %v315 = vunpack.c.l.b16 %v31
  %v316 = vunpack.c.l.b16 %v32
  %v317 = vunpack.c.l.b16 %v33
  %v318 = vunpack.c.l.b16 %v34
  %v319 = vunpack.c.l.b16 %v35
  %v320 = vunpack.c.l.b16 %v36
  %v321 = vunpack.c.l.b16 %v37
  %v322 = vunpack.c.l.b16 %v38
  %v323 = vunpack.c.l.b16 %v39
  %v324 = vunpack.c.l.b16 %v40
  %v325 = vunpack.c.l.b16 %v41
  %v326 = vunpack.c.l.b16 %v42
  %v327 = vunpack.c.l.b16 %v43
  %v328 = vunpack.c.l.b16 %v44
  %v329 = vunpack.c.l.b16 %v45
  %v330 = vunpack.c.l.b16 %v46
  %v331 = vunpack.c.l.b16 %v47
  %v332 = vunpack.c.l.b16 %v48
  %v333 = vunpack.c.l.b16 %v49
  %v334 = vunpack.c.l.b16 %v50
  %v335 = vunpack.c.l.b16 %v51
  %v336 = vunpack.c.l.b16 %v52
  %v337 = vunpack.c.l.b16 %v53
  %v338 = vunpack.c.l.b16 %v54
  %v339 = vunpack.c.l.b16 %v55
  %v340 = vunpack.c.l.b16 %v56
  %v341 = vunpack.c.l.b16 %v57
  %v342 = vunpack.c.l.b16 %v58
  %v343 = vunpack.c.l.b16 %v59
  %v344 = vunpack.c.l.b16 %v60
  %v345 = vunpack.c.l.b16 %v61
  %v346 = vunpack.c.l.b16 %v62
  %v347 = vunpack.c.l.b16 %v63
  %v348 = vunpack.c.l.b16 %v64
  %v349 = vunpack.c.l.b16 %v65
  %v350 = vunpack.c.l.b16 %v66
  %v351 = vunpack.c.l.b16 %v67
  %v352 = vunpack.c.l.b16 %v68
  %v353 = vunpack.c.l.b16 %v69
  %v354 = vunpack.c.l.b16 %v70
  %v355 = vunpack.c.l.b16 %v71
  %v356 = vunpack.c.l.b16 %v72
  %v357 = vunpack.c.l.b16 %v73
  %v358 = vunpack.c.l.b16 %v74
  %v359 = vunpack.c.l.b16 %v75
  %v360 = vunpack.c.l.b16 %v76
  %v361 = vunpack.c.l.b16 %v77
  %v362 = vunpack.c.l.b16 %v78
  %v363 = vunpack.c.l.b16 %v79
  %v364 = vunpack.c.l.b16 %v80
  %v365 = vunpack.c.l.b16 %v81
  %v366 = vunpack.c.l.b16 %v82
  %v367 = vunpack.c.l.b16 %v83
  %v368 = vunpack.c.l.b16 %v84
  %v369 = vunpack.c.l.b16 %v85
  %v370 = vunpack.c.l.b16 %v86
  %v371 = vunpack.c.l.b16 %v87
  %v372 = vunpack.c.l.b16 %v88
  %v373 = vunpack.c.l.b16 %v89
  %v374 = vunpack.c.l.b16 %v90
  %v375 = vunpack.c.l.b16 %v91
  %v376 = vunpack.c.l.b16 %v92
  %v377 = vunpack.c.l.b16 %v93
  %v378 = vunpack.c.l.b16 %v94
  %v379 = vunpack.c.l.b16 %v95
  %v380 = vunpack.c.l.b16 %v96
  %v381 = vunpack.c.l.b16 %v97
  %v382 = vunpack.c.l.b16 %v98
  %v383 = vunpack.c.l.b16 %v99
  %v384 = vunpack.c.l.b16 %v100
  %v385 = vunpack.c.l.b16 %v101
  %v386 = vunpack.c.l.b16 %v102
  %v387 = vunpack.c.l.b16 %v103
  %v388 = vunpack.c.l.b16 %v104
  %v389 = vunpack.c.l.b16 %v105
  %v390 = vunpack.c.l.b16 %v106
  %v391 = vunpack.c.l.b16 %v107
  %v392 = vunpack.c.l.b16 %v108
  %v393 = vunpack.c.l.b16 %v109
  %v394 = vunpack.c.l.b16 %v110
  %v395 = vunpack.c.l.b16 %v111
  %v396 = vunpack.c.l.b16 %v112
  %v397 = vunpack.c.l.b16 %v113
  %v398 = vunpack.c.l.b16 %v114
  %v399 = vunpack.c.l.b16 %v115
  %v400 = vunpack.c.l.b16 %v116
  %v401 = vunpack.c.l.b16 %v117
  %v402 = vunpack.c.l.b16 %v118
  %v403 = vunpack.c.l.b16 %v119
  %v404 = vunpack.c.l.b16 %v120
  %v405 = vunpack.c.l.b16 %v121
  %v406 = vunpack.c.l.b16 %v122
  %v407 = vunpack.c.l.b16 %v123
  %v408 = vunpack.c.l.b16 %v124
  %v409 = vunpack.c.l.b16 %v125
  %v410 = vunpack.c.l.b16 %v126
  %v411 = vunpack.c.l.b16 %v127
  %v412 = vunpack.c.l.b16 %v128
  %v413 = vunpack.c.l.b16 %v129
  %v414 = vunpack.c.l.b16 %v130
  %v415 = vunpack.c.l.b16 %v131
  %v416 = vunpack.c.l.b16 %v132
  %v417 = vunpack.c.l.b16 %v133
  %v418 = vunpack.c.l.b16 %v134
  %v419 = vunpack.c.l.b16 %v135
  %v420 = vunpack.c.l.b16 %v136
  %v421 = vunpack.c.l.b16 %v137
  %v422 = vunpack.c.l.b16 %v138
  %v423 = vunpack.c.l.b16 %v139
  %v424 = vunpack.c.l.b16 %v140
  %v425 = vunpack.c.l.b16 %v141
  %v426 = vunpack.c.l.b16 %v142
  %v427 = vunpack.c.l.b16 %v143
  %v428 = vunpack.c.l.b16 %v144
  %v429 = vunpack.c.l.b16 %v145
  %v430 = vunpack.c.l.b16 %v146
  %v431 = vunpack.c.l.b16 %v147
  %v432 = vunpack.c.l.b16 %v148
  %v433 = vunpack.c.l.b16 %v149
  %v434 = vpack.c.b16 %v307, %v306
  %v435 = vpack.c.b16 %v309, %v308
  %v436 = vpack.c.b16 %v311, %v310
  %v437 = vpack.c.b16 %v313, %v312
  %v438 = vpack.c.b16 %v315, %v314
  %v439 = vpack.c.b16 %v317, %v316
  %v440 = vpack.c.b16 %v319, %v318
  %v441 = vpack.c.b16 %v321, %v320
  %v442 = vpack.c.b16 %v323, %v322
  %v443 = vpack.c.b16 %v325, %v324
  %v444 = vpack.c.b16 %v327, %v326
  %v445 = vpack.c.b16 %v329, %v328
  %v446 = vpack.c.b16 %v331, %v330
  %v447 = vpack.c.b16 %v333, %v332
  %v448 = vpack.c.b16 %v335, %v334
  %v449 = vpack.c.b16 %v337, %v336
  %v450 = vpack.c.b16 %v339, %v338
  %v451 = vpack.c.b16 %v341, %v340
  %v452 = vpack.c.b16 %v343, %v342
  %v453 = vpack.c.b16 %v345, %v344
  %v454 = vpack.c.b16 %v347, %v346
  %v455 = vpack.c.b16 %v349, %v348
  %v456 = vpack.c.b16 %v351, %v350
  %v457 = vpack.c.b16 %v353, %v352
  %v458 = vpack.c.b16 %v355, %v354
  %v459 = vpack.c.b16 %v357, %v356
  %v460 = vpack.c.b16 %v359, %v358
  %v461 = vpack.c.b16 %v361, %v360
  %v462 = vpack.c.b16 %v363, %v362
  %v463 = vpack.c.b16 %v365, %v364
  %v464 = vpack.c.b16 %v367, %v366
  %v465 = vpack.c.b16 %v369, %v368
  %v466 = vpack.c.b16 %v371, %v370
  %v467 = vpack.c.b16 %v373, %v372
  %v468 = vpack.c.b16 %v375, %v374
  %v469 = vpack.c.b16 %v377, %v376
  %v470 = vpack.c.b16 %v379, %v378
  %v471 = vpack.c.b16 %v381, %v380
  %v472 = vpack.c.b16 %v383, %v382
  %v473 = vpack.c.b16 %v385, %v384
  %v474 = vpack.c.b16 %v387, %v386
  %v475 = vpack.c.b16 %v389, %v388
  %v476 = vpack.c.b16 %v391, %v390
  %v477 = vpack.c.b16 %v393, %v392
  %v478 = vpack.c.b16 %v395, %v394
  %v479 = vpack.c.b16 %v397, %v396
  %v480 = vpack.c.b16 %v399, %v398
  %v481 = vpack.c.b16 %v401, %v400
  %v482 = vpack.c.b16 %v403, %v402
  %v483 = vpack.c.b16 %v405, %v404
  %v484 = vpack.c.b16 %v407, %v406
  %v485 = vpack.c.b16 %v409, %v408
  %v486 = vpack.c.b16 %v411, %v410
  %v487 = vpack.c.b16 %v413, %v412
  %v488 = vpack.c.b16 %v415, %v414
  %v489 = vpack.c.b16 %v417, %v416
  %v490 = vpack.c.b16 %v419, %v418
  %v491 = vpack.c.b16 %v421, %v420
  %v492 = vpack.c.b16 %v423, %v422
  %v493 = vpack.c.b16 %v425, %v424
  %v494 = vpack.c.b16 %v427, %v426
  %v495 = vpack.c.b16 %v429, %v428
  %v496 = vpack.c.b16 %v431, %v430
  %v497 = vpack.c.b16 %v433, %v432
  %562 = vmatprep.subr.bf16.mxu0 0
  %563 = vmatpush1.bf16.msra.mxu0 %v434
  %564 = vmatprep.subr.bf16.mxu0 0
  %565 = vmatpush1.bf16.msra.mxu0 %v435
  %566 = vmatprep.subr.bf16.mxu0 0
  %567 = vmatpush1.bf16.msra.mxu0 %v436
  %568 = vmatprep.subr.bf16.mxu0 0
  %569 = vmatpush1.bf16.msra.mxu0 %v437
  %570 = vmatprep.subr.bf16.mxu0 0
  %571 = vmatpush1.bf16.msra.mxu0 %v438
  %572 = vmatprep.subr.bf16.mxu0 0
  %573 = vmatpush1.bf16.msra.mxu0 %v439
  %574 = vmatprep.subr.bf16.mxu0 0
  %575 = vmatpush1.bf16.msra.mxu0 %v440
  %576 = vmatprep.subr.bf16.mxu0 0
  %577 = vmatpush1.bf16.msra.mxu0 %v441
  %578 = vmatprep.subr.bf16.mxu0 0
  %579 = vmatpush1.bf16.msra.mxu0 %v442
  %580 = vmatprep.subr.bf16.mxu0 0
  %581 = vmatpush1.bf16.msra.mxu0 %v443
  %582 = vmatprep.subr.bf16.mxu0 0
  %583 = vmatpush1.bf16.msra.mxu0 %v444
  %584 = vmatprep.subr.bf16.mxu0 0
  %585 = vmatpush1.bf16.msra.mxu0 %v445
  %586 = vmatprep.subr.bf16.mxu0 0
  %587 = vmatpush1.bf16.msra.mxu0 %v446
  %588 = vmatprep.subr.bf16.mxu0 0
  %589 = vmatpush1.bf16.msra.mxu0 %v447
  %590 = vmatprep.subr.bf16.mxu0 0
  %591 = vmatpush1.bf16.msra.mxu0 %v448
  %592 = vmatprep.subr.bf16.mxu0 0
  %593 = vmatpush1.bf16.msra.mxu0 %v449
  %594 = vmatprep.mubr.bf16.mxu0 %v163
  %595 = vmatmul.mubr.bf16.gmra.mrb[0].mxu0 %v162
  %v596 = vpop.f32.mrb[0].mxu0
  %v597 = vadd.f32 0.0, %v596
  %v598 = vpop.f32.mrb[0].mxu0
  %v599 = vpop.f32.mrb[0].mxu0
  %v600 = vpop.f32.mrb[0].mxu0
  %601 = vdwg.mxu0
  %602 = vmatprep.subr.bf16.mxu0 0
  %603 = vmatpush1.bf16.msra.mxu0 %v450
  %604 = vmatprep.subr.bf16.mxu0 0
  %605 = vmatpush1.bf16.msra.mxu0 %v451
  %606 = vmatprep.subr.bf16.mxu0 0
  %607 = vmatpush1.bf16.msra.mxu0 %v452
  %608 = vmatprep.subr.bf16.mxu0 0
  %609 = vmatpush1.bf16.msra.mxu0 %v453
  %610 = vmatprep.subr.bf16.mxu0 0
  %611 = vmatpush1.bf16.msra.mxu0 %v454
  %612 = vmatprep.subr.bf16.mxu0 0
  %613 = vmatpush1.bf16.msra.mxu0 %v455
  %614 = vmatprep.subr.bf16.mxu0 0
  %615 = vmatpush1.bf16.msra.mxu0 %v456
  %616 = vmatprep.subr.bf16.mxu0 0
  %617 = vmatpush1.bf16.msra.mxu0 %v457
  %618 = vmatprep.subr.bf16.mxu0 0
  %619 = vmatpush1.bf16.msra.mxu0 %v458
  %620 = vmatprep.subr.bf16.mxu0 0
  %621 = vmatpush1.bf16.msra.mxu0 %v459
  %622 = vmatprep.subr.bf16.mxu0 0
  %623 = vmatpush1.bf16.msra.mxu0 %v460
  %624 = vmatprep.subr.bf16.mxu0 0
  %625 = vmatpush1.bf16.msra.mxu0 %v461
  %626 = vmatprep.subr.bf16.mxu0 0
  %627 = vmatpush1.bf16.msra.mxu0 %v462
  %628 = vmatprep.subr.bf16.mxu0 0
  %629 = vmatpush1.bf16.msra.mxu0 %v463
  %630 = vmatprep.subr.bf16.mxu0 0
  %631 = vmatpush1.bf16.msra.mxu0 %v464
  %632 = vmatprep.subr.bf16.mxu0 0
  %633 = vmatpush1.bf16.msra.mxu0 %v465
  %634 = vmatprep.mubr.bf16.mxu0 %v165
  %635 = vmatmul.mubr.bf16.gmra.mrb[0].mxu0 %v164
  %v636 = vpop.f32.mrb[0].mxu0
  %v637 = vadd.f32 %v597, %v636
  %v638 = vpop.f32.mrb[0].mxu0
  %v639 = vpop.f32.mrb[0].mxu0
  %v640 = vpop.f32.mrb[0].mxu0
  %641 = vdwg.mxu0
  %642 = vmatprep.subr.bf16.mxu0 0
  %643 = vmatpush1.bf16.msra.mxu0 %v466
  %644 = vmatprep.subr.bf16.mxu0 0
  %645 = vmatpush1.bf16.msra.mxu0 %v467
  %646 = vmatprep.subr.bf16.mxu0 0
  %647 = vmatpush1.bf16.msra.mxu0 %v468
  %648 = vmatprep.subr.bf16.mxu0 0
  %649 = vmatpush1.bf16.msra.mxu0 %v469
  %650 = vmatprep.subr.bf16.mxu0 0
  %651 = vmatpush1.bf16.msra.mxu0 %v470
  %652 = vmatprep.subr.bf16.mxu0 0
  %653 = vmatpush1.bf16.msra.mxu0 %v471
  %654 = vmatprep.subr.bf16.mxu0 0
  %655 = vmatpush1.bf16.msra.mxu0 %v472
  %656 = vmatprep.subr.bf16.mxu0 0
  %657 = vmatpush1.bf16.msra.mxu0 %v473
  %658 = vmatprep.subr.bf16.mxu0 0
  %659 = vmatpush1.bf16.msra.mxu0 %v474
  %660 = vmatprep.subr.bf16.mxu0 0
  %661 = vmatpush1.bf16.msra.mxu0 %v475
  %662 = vmatprep.subr.bf16.mxu0 0
  %663 = vmatpush1.bf16.msra.mxu0 %v476
  %664 = vmatprep.subr.bf16.mxu0 0
  %665 = vmatpush1.bf16.msra.mxu0 %v477
  %666 = vmatprep.subr.bf16.mxu0 0
  %667 = vmatpush1.bf16.msra.mxu0 %v478
  %668 = vmatprep.subr.bf16.mxu0 0
  %669 = vmatpush1.bf16.msra.mxu0 %v479
  %670 = vmatprep.subr.bf16.mxu0 0
  %671 = vmatpush1.bf16.msra.mxu0 %v480
  %672 = vmatprep.subr.bf16.mxu0 0
  %673 = vmatpush1.bf16.msra.mxu0 %v481
  %674 = vmatprep.mubr.bf16.mxu0 %v167
  %675 = vmatmul.mubr.bf16.gmra.mrb[0].mxu0 %v166
  %v676 = vpop.f32.mrb[0].mxu0
  %v677 = vadd.f32 %v637, %v676
  %v678 = vpop.f32.mrb[0].mxu0
  %v679 = vpop.f32.mrb[0].mxu0
  %v680 = vpop.f32.mrb[0].mxu0
  %681 = vdwg.mxu0
  %682 = vmatprep.subr.bf16.mxu0 0
  %683 = vmatpush1.bf16.msra.mxu0 %v482
  %684 = vmatprep.subr.bf16.mxu0 0
  %685 = vmatpush1.bf16.msra.mxu0 %v483
  %686 = vmatprep.subr.bf16.mxu0 0
  %687 = vmatpush1.bf16.msra.mxu0 %v484
  %688 = vmatprep.subr.bf16.mxu0 0
  %689 = vmatpush1.bf16.msra.mxu0 %v485
  %690 = vmatprep.subr.bf16.mxu0 0
  %691 = vmatpush1.bf16.msra.mxu0 %v486
  %692 = vmatprep.subr.bf16.mxu0 0
  %693 = vmatpush1.bf16.msra.mxu0 %v487
  %694 = vmatprep.subr.bf16.mxu0 0
  %695 = vmatpush1.bf16.msra.mxu0 %v488
  %696 = vmatprep.subr.bf16.mxu0 0
  %697 = vmatpush1.bf16.msra.mxu0 %v489
  %698 = vmatprep.subr.bf16.mxu0 0
  %699 = vmatpush1.bf16.msra.mxu0 %v490
  %700 = vmatprep.subr.bf16.mxu0 0
  %701 = vmatpush1.bf16.msra.mxu0 %v491
  %702 = vmatprep.subr.bf16.mxu0 0
  %703 = vmatpush1.bf16.msra.mxu0 %v492
  %704 = vmatprep.subr.bf16.mxu0 0
  %705 = vmatpush1.bf16.msra.mxu0 %v493
  %706 = vmatprep.subr.bf16.mxu0 0
  %707 = vmatpush1.bf16.msra.mxu0 %v494
  %708 = vmatprep.subr.bf16.mxu0 0
  %709 = vmatpush1.bf16.msra.mxu0 %v495
  %710 = vmatprep.subr.bf16.mxu0 0
  %711 = vmatpush1.bf16.msra.mxu0 %v496
  %712 = vmatprep.subr.bf16.mxu0 0
  %713 = vmatpush1.bf16.msra.mxu0 %v497
  %714 = vmatprep.mubr.bf16.mxu0 %v169
  %715 = vmatmul.mubr.bf16.gmra.mrb[0].mxu0 %v168
  %v716 = vpop.f32.mrb[0].mxu0
  %v717 = vadd.f32 %v677, %v716
  %v718 = vpop.f32.mrb[0].mxu0
  %v719 = vpop.f32.mrb[0].mxu0
  %v720 = vpop.f32.mrb[0].mxu0
  %721 = vdwg.mxu0
  %v722 = vld [vmem:[%s2] sm:$0x1]
  %v724 = vlaneseq
  %v725 = vshrl.u32 %v724, 7
  %v726 = vsub.s32 0, %v725
  %v727 = vrot.slane %v722, %v726
  %v729 = vmul.f32 %v717, %v727
  %v730 = vld [vmem:[%s3] sm:$0x1]
  %v732 = vlaneseq
  %v733 = vshrl.u32 %v732, 7
  %v734 = vsub.s32 0, %v733
  %v735 = vrot.slane %v730, %v734
  %v737 = vadd.f32 %v729, %v735
  %738 = vst [vmem:[%s4] sm:$0xff] %v737
  // Predicated region
  $region18: #{_lambda_.29} parent=0 // pred_check
    _
  $region19: #{_lambda_.29} parent=0 // pred_check_branch
    %740 = sbr.rel (0) target = $region21
  $region20: #{_lambda_.29} parent=0 // pred_region
    _
  $region21: #{_lambda_.29} parent=0 // pred_fallthru
    _
  // Predicated region
  $region22: #{_lambda_.29} parent=0 // pred_check
    _
  $region23: #{_lambda_.29} parent=0 // pred_check_branch
    %742 = sbr.rel (0) target = $region25
  $region24: #{_lambda_.29} parent=0 // pred_region
    _
  $region25: #{_lambda_.29} parent=0 // pred_fallthru
    _

// kernel: _lambda_.32
$region0: #{_lambda_.32}
  #allocation0 [shape = 'u32[]', space=smem, size = 0x4, offset = 0x4, fixed_abs, tag = 'smem constant byte address 0x4 - core index']
  #allocation1 [shape = 'u32[144,128]{1,0:T(1,128)}', space=vmem, size = 0x12000, scoped, tag = 'internal scratch']
  %s0 = inlined_call_operand.vmem [shape: bf16[8,256], index: 0, kind: input, shape index: {}]
  %s1 = inlined_call_operand.vmem [shape: bf16[256,128], index: 1, kind: input, shape index: {}]
  %s2 = inlined_call_operand.vmem [shape: f32[1,128], index: 2, kind: input, shape index: {}]
  %s3 = inlined_call_operand.vmem [shape: f32[1,128], index: 3, kind: input, shape index: {}]
  %s4 = inlined_call_operand.vmem [shape: f32[8,128], index: 4, kind: output, shape index: {}]
  %s5 = sld [smem:[#allocation0]]
  $region26: #{_lambda_.32} parent=0
    _
  %s7 = ssub.s32 1, %s5
  %s8 = scalar_select 0, %s7, %s5
  // Predicated region
  $region2: #{_lambda_.32} parent=0 // pred_check
    _
  $region3: #{_lambda_.32} parent=0 // pred_check_branch
    %10 = sbr.rel (0) target = $region5
  $region4: #{_lambda_.32} parent=0 // pred_region
    _
  $region5: #{_lambda_.32} parent=0 // pred_fallthru
    _
  // Predicated region
  $region6: #{_lambda_.32} parent=0 // pred_check
    _
  $region7: #{_lambda_.32} parent=0 // pred_check_branch
    %12 = sbr.rel (0) target = $region9
  $region8: #{_lambda_.32} parent=0 // pred_region
    _
  $region9: #{_lambda_.32} parent=0 // pred_fallthru
    _
  // Predicated region
  $region10: #{_lambda_.32} parent=0 // pred_check
    _
  $region11: #{_lambda_.32} parent=0 // pred_check_branch
    %14 = sbr.rel (0) target = $region13
  $region12: #{_lambda_.32} parent=0 // pred_region
    _
  $region13: #{_lambda_.32} parent=0 // pred_fallthru
    _
  // Predicated region
  $region14: #{_lambda_.32} parent=0 // pred_check
    _
  $region15: #{_lambda_.32} parent=0 // pred_check_branch
    %16 = sbr.rel (0) target = $region17
  $region16: #{_lambda_.32} parent=0 // pred_region
    _
  $region17: #{_lambda_.32} parent=0 // pred_fallthru
    _
  %v18 = vld [vmem:[%s0] sm:$0xff]
  %v19 = vld [vmem:[%s1] sm:$0xf]
  %v20 = vld [vmem:[%s1 + $0x4] sm:$0xf]
  %v21 = vld [vmem:[%s1 + $0x8] sm:$0xf]
  %v22 = vld [vmem:[%s1 + $0xc] sm:$0xf]
  %v23 = vld [vmem:[%s1 + $0x10] sm:$0xf]
  %v24 = vld [vmem:[%s1 + $0x14] sm:$0xf]
  %v25 = vld [vmem:[%s1 + $0x18] sm:$0xf]
  %v26 = vld [vmem:[%s1 + $0x1c] sm:$0xf]
  %v27 = vld [vmem:[%s1 + $0x20] sm:$0xf]
  %v28 = vld [vmem:[%s1 + $0x24] sm:$0xf]
  %v29 = vld [vmem:[%s1 + $0x28] sm:$0xf]
  %v30 = vld [vmem:[%s1 + $0x2c] sm:$0xf]
  %v31 = vld [vmem:[%s1 + $0x30] sm:$0xf]
  %v32 = vld [vmem:[%s1 + $0x34] sm:$0xf]
  %v33 = vld [vmem:[%s1 + $0x38] sm:$0xf]
  %v34 = vld [vmem:[%s1 + $0x3c] sm:$0xf]
  %v35 = vld [vmem:[%s1 + $0x40] sm:$0xf]
  %v36 = vld [vmem:[%s1 + $0x44] sm:$0xf]
  %v37 = vld [vmem:[%s1 + $0x48] sm:$0xf]
  %v38 = vld [vmem:[%s1 + $0x4c] sm:$0xf]
  %v39 = vld [vmem:[%s1 + $0x50] sm:$0xf]
  %v40 = vld [vmem:[%s1 + $0x54] sm:$0xf]
  %v41 = vld [vmem:[%s1 + $0x58] sm:$0xf]
  %v42 = vld [vmem:[%s1 + $0x5c] sm:$0xf]
  %v43 = vld [vmem:[%s1 + $0x60] sm:$0xf]
  %v44 = vld [vmem:[%s1 + $0x64] sm:$0xf]
  %v45 = vld [vmem:[%s1 + $0x68] sm:$0xf]
  %v46 = vld [vmem:[%s1 + $0x6c] sm:$0xf]
  %v47 = vld [vmem:[%s1 + $0x70] sm:$0xf]
  %v48 = vld [vmem:[%s1 + $0x74] sm:$0xf]
  %v49 = vld [vmem:[%s1 + $0x78] sm:$0xf]
  %v50 = vld [vmem:[%s1 + $0x7c] sm:$0xf]
  %v52 = vunpack.c.l.b16 %v18
  %v53 = vunpack.c.h.b16 %v18
  %v54 = vpack.c.b16 %v52, %v52
  %v55 = vpack.c.b16 %v53, %v53
  %v90 = vunpack.c.l.b16 %v19
  %v91 = vunpack.c.l.b16 %v20
  %v92 = vunpack.c.l.b16 %v21
  %v93 = vunpack.c.l.b16 %v22
  %v94 = vunpack.c.l.b16 %v23
  %v95 = vunpack.c.l.b16 %v24
  %v96 = vunpack.c.l.b16 %v25
  %v97 = vunpack.c.l.b16 %v26
  %v98 = vunpack.c.l.b16 %v27
  %v99 = vunpack.c.l.b16 %v28
  %v100 = vunpack.c.l.b16 %v29
  %v101 = vunpack.c.l.b16 %v30
  %v102 = vunpack.c.l.b16 %v31
  %v103 = vunpack.c.l.b16 %v32
  %v104 = vunpack.c.l.b16 %v33
  %v105 = vunpack.c.l.b16 %v34
  %v106 = vunpack.c.l.b16 %v35
  %v107 = vunpack.c.l.b16 %v36
  %v108 = vunpack.c.l.b16 %v37
  %v109 = vunpack.c.l.b16 %v38
  %v110 = vunpack.c.l.b16 %v39
  %v111 = vunpack.c.l.b16 %v40
  %v112 = vunpack.c.l.b16 %v41
  %v113 = vunpack.c.l.b16 %v42
  %v114 = vunpack.c.l.b16 %v43
  %v115 = vunpack.c.l.b16 %v44
  %v116 = vunpack.c.l.b16 %v45
  %v117 = vunpack.c.l.b16 %v46
  %v118 = vunpack.c.l.b16 %v47
  %v119 = vunpack.c.l.b16 %v48
  %v120 = vunpack.c.l.b16 %v49
  %v121 = vunpack.c.l.b16 %v50
  %v122 = vpack.c.b16 %v91, %v90
  %v123 = vpack.c.b16 %v93, %v92
  %v124 = vpack.c.b16 %v95, %v94
  %v125 = vpack.c.b16 %v97, %v96
  %v126 = vpack.c.b16 %v99, %v98
  %v127 = vpack.c.b16 %v101, %v100
  %v128 = vpack.c.b16 %v103, %v102
  %v129 = vpack.c.b16 %v105, %v104
  %v130 = vpack.c.b16 %v107, %v106
  %v131 = vpack.c.b16 %v109, %v108
  %v132 = vpack.c.b16 %v111, %v110
  %v133 = vpack.c.b16 %v113, %v112
  %v134 = vpack.c.b16 %v115, %v114
  %v135 = vpack.c.b16 %v117, %v116
  %v136 = vpack.c.b16 %v119, %v118
  %v137 = vpack.c.b16 %v121, %v120
  %154 = vmatprep.subr.bf16.mxu0 0
  %155 = vmatpush1.bf16.msra.mxu0 %v122
  %156 = vmatprep.subr.bf16.mxu0 0
  %157 = vmatpush1.bf16.msra.mxu0 %v123
  %158 = vmatprep.subr.bf16.mxu0 0
  %159 = vmatpush1.bf16.msra.mxu0 %v124
  %160 = vmatprep.subr.bf16.mxu0 0
  %161 = vmatpush1.bf16.msra.mxu0 %v125
  %162 = vmatprep.subr.bf16.mxu0 0
  %163 = vmatpush1.bf16.msra.mxu0 %v126
  %164 = vmatprep.subr.bf16.mxu0 0
  %165 = vmatpush1.bf16.msra.mxu0 %v127
  %166 = vmatprep.subr.bf16.mxu0 0
  %167 = vmatpush1.bf16.msra.mxu0 %v128
  %168 = vmatprep.subr.bf16.mxu0 0
  %169 = vmatpush1.bf16.msra.mxu0 %v129
  %170 = vmatprep.subr.bf16.mxu0 0
  %171 = vmatpush1.bf16.msra.mxu0 %v130
  %172 = vmatprep.subr.bf16.mxu0 0
  %173 = vmatpush1.bf16.msra.mxu0 %v131
  %174 = vmatprep.subr.bf16.mxu0 0
  %175 = vmatpush1.bf16.msra.mxu0 %v132
  %176 = vmatprep.subr.bf16.mxu0 0
  %177 = vmatpush1.bf16.msra.mxu0 %v133
  %178 = vmatprep.subr.bf16.mxu0 0
  %179 = vmatpush1.bf16.msra.mxu0 %v134
  %180 = vmatprep.subr.bf16.mxu0 0
  %181 = vmatpush1.bf16.msra.mxu0 %v135
  %182 = vmatprep.subr.bf16.mxu0 0
  %183 = vmatpush1.bf16.msra.mxu0 %v136
  %184 = vmatprep.subr.bf16.mxu0 0
  %185 = vmatpush1.bf16.msra.mxu0 %v137
  %186 = vmatprep.mubr.bf16.mxu0 %v55
  %187 = vmatmul.mubr.bf16.gmra.mrb[0].mxu0 %v54
  %v188 = vpop.f32.mrb[0].mxu0
  %v189 = vadd.f32 0.0, %v188
  %v190 = vpop.f32.mrb[0].mxu0
  %v191 = vpop.f32.mrb[0].mxu0
  %v192 = vpop.f32.mrb[0].mxu0
  %193 = vdwg.mxu0
  %v194 = vld [vmem:[%s2] sm:$0x1]
  %v196 = vlaneseq
  %v197 = vshrl.u32 %v196, 7
  %v198 = vsub.s32 0, %v197
  %v199 = vrot.slane %v194, %v198
  %v201 = vmul.f32 %v189, %v199
  %v202 = vld [vmem:[%s3] sm:$0x1]
  %v204 = vlaneseq
  %v205 = vshrl.u32 %v204, 7
  %v206 = vsub.s32 0, %v205
  %v207 = vrot.slane %v202, %v206
  %v209 = vadd.f32 %v201, %v207
  %210 = vst [vmem:[%s4] sm:$0xff] %v209
  // Predicated region
  $region18: #{_lambda_.32} parent=0 // pred_check
    _
  $region19: #{_lambda_.32} parent=0 // pred_check_branch
    %212 = sbr.rel (0) target = $region21
  $region20: #{_lambda_.32} parent=0 // pred_region
    _
  $region21: #{_lambda_.32} parent=0 // pred_fallthru
    _
  // Predicated region
  $region22: #{_lambda_.32} parent=0 // pred_check
    _
  $region23: #{_lambda_.32} parent=0 // pred_check_branch
    %214 = sbr.rel (0) target = $region25
  $region24: #{_lambda_.32} parent=0 // pred_region
    _
  $region25: #{_lambda_.32} parent=0 // pred_fallthru
    _

// kernel: _lambda_.46
$region0: #{_lambda_.46}
  #allocation0 [shape = 'u32[]', space=smem, size = 0x4, offset = 0x4, fixed_abs, tag = 'smem constant byte address 0x4 - core index']
  #allocation1 [shape = 'u32[144,128]{1,0:T(1,128)}', space=vmem, size = 0x12000, scoped, tag = 'internal scratch']
  %s0 = inlined_call_operand.vmem [shape: bf16[512,64], index: 0, kind: input, shape index: {}]
  %s1 = inlined_call_operand.vmem [shape: bf16[64,128], index: 1, kind: input, shape index: {}]
  %s2 = inlined_call_operand.vmem [shape: f32[1,128], index: 2, kind: input, shape index: {}]
  %s3 = inlined_call_operand.vmem [shape: f32[1,128], index: 3, kind: input, shape index: {}]
  %s4 = inlined_call_operand.vmem [shape: f32[512,128], index: 4, kind: output, shape index: {}]
  %s5 = sld [smem:[#allocation0]]
  $region49: #{_lambda_.46} parent=0
    _
  %s7 = ssub.s32 1, %s5
  %s8 = scalar_select 0, %s7, %s5
  loop: start=0, step=1, limit=4
  $region2: #{_lambda_.46} parent=0 // loop_pre_header
    _
  $region3: #{_lambda_.46} parent=0 // loop_header
    %s10 = sphi 0, %s14
    %p11 = scmp.ge.s32.totalorder %s10, 4
    %s20 = sphi 0, %s22
    %s23 = sphi 0, %s20
    %s24 = sphi 0, %s23
    %s40 = sphi 0, %s24
    %s44 = sphi 0, %s44
    %s46 = sphi 0, %s44
    %s47 = sphi 0, %s46
    %s61 = sphi 0, %s47
    %s65 = sphi 0, %s65
    %s67 = sphi 0, %s65
    %s68 = sphi 0, %s67
    %s82 = sphi 0, %s68
    %s86 = sphi 0, %s86
    %s88 = sphi 0, %s86
    %s89 = sphi 0, %s88
    %s103 = sphi 0, %s89
    %s109 = sphi 0, %s111
    %s112 = sphi 0, %s109
    %s113 = sphi 0, %s112
    %s129 = sphi 0, %s113
  $region4: #{_lambda_.46} parent=0 // loop_header_branch
    %13 = sbr.rel (%p11) target = $region8
  $region5: #{_lambda_.46} parent=0 // loop_body
    %s15 = ssub.s32 %s10, 1
    %s16 = ssub.s32 %s10, 2
    %s17 = sadd.s32 %s10, 1
    %s18 = ssub.s32 %s10, %s17
    %p19 = scmp.eq.s32.totalorder %s18, 0
    %s21 = sadd.s32 %s20, 1
    %s22 = scalar_select %p19, %s20, %s21
    %p25 = pneg %p19
    %p26 = scmp.eq.s32.totalorder %s10, 1
    %p27 = por %p25, %p26
    %p28 = scmp.ne.s32.totalorder %s20, %s23
    %p29 = scmp.eq.s32.totalorder %s10, 0
    %p30 = por %p28, %p29
    %p31 = scmp.ne.s32.totalorder %s20, %s23
    %p32 = scmp.eq.s32.totalorder %s15, 1
    %p33 = por %p31, %p32
    %p34 = scmp.ne.s32.totalorder %s23, %s24
    %p35 = scmp.eq.s32.totalorder %s15, 0
    %p36 = por %p34, %p35
    %p37 = scmp.ne.s32.totalorder %s23, %s24
    %p38 = scmp.eq.s32.totalorder %s16, 1
    %p39 = por %p37, %p38
    %p41 = scmp.ne.s32.totalorder %s24, %s40
    %p42 = scmp.eq.s32.totalorder %s16, 0
    %p43 = por %p41, %p42
    %s45 = sadd.s32 %s44, 1
    %p48 = scmp.eq.s32.totalorder %s10, 1
    %p49 = scmp.ne.s32.totalorder %s44, %s46
    %p50 = scmp.eq.s32.totalorder %s10, 0
    %p51 = por %p49, %p50
    %p52 = scmp.ne.s32.totalorder %s44, %s46
    %p53 = scmp.eq.s32.totalorder %s15, 1
    %p54 = por %p52, %p53
    %p55 = scmp.ne.s32.totalorder %s46, %s47
    %p56 = scmp.eq.s32.totalorder %s15, 0
    %p57 = por %p55, %p56
    %p58 = scmp.ne.s32.totalorder %s46, %s47
    %p59 = scmp.eq.s32.totalorder %s16, 1
    %p60 = por %p58, %p59
    %p62 = scmp.ne.s32.totalorder %s47, %s61
    %p63 = scmp.eq.s32.totalorder %s16, 0
    %p64 = por %p62, %p63
    %s66 = sadd.s32 %s65, 1
    %p69 = scmp.eq.s32.totalorder %s10, 1
    %p70 = scmp.ne.s32.totalorder %s65, %s67
    %p71 = scmp.eq.s32.totalorder %s10, 0
    %p72 = por %p70, %p71
    %p73 = scmp.ne.s32.totalorder %s65, %s67
    %p74 = scmp.eq.s32.totalorder %s15, 1
    %p75 = por %p73, %p74
    %p76 = scmp.ne.s32.totalorder %s67, %s68
    %p77 = scmp.eq.s32.totalorder %s15, 0
    %p78 = por %p76, %p77
    %p79 = scmp.ne.s32.totalorder %s67, %s68
    %p80 = scmp.eq.s32.totalorder %s16, 1
    %p81 = por %p79, %p80
    %p83 = scmp.ne.s32.totalorder %s68, %s82
    %p84 = scmp.eq.s32.totalorder %s16, 0
    %p85 = por %p83, %p84
    %s87 = sadd.s32 %s86, 1
    %p90 = scmp.eq.s32.totalorder %s10, 1
    %p91 = scmp.ne.s32.totalorder %s86, %s88
    %p92 = scmp.eq.s32.totalorder %s10, 0
    %p93 = por %p91, %p92
    %p94 = scmp.ne.s32.totalorder %s86, %s88
    %p95 = scmp.eq.s32.totalorder %s15, 1
    %p96 = por %p94, %p95
    %p97 = scmp.ne.s32.totalorder %s88, %s89
    %p98 = scmp.eq.s32.totalorder %s15, 0
    %p99 = por %p97, %p98
    %p100 = scmp.ne.s32.totalorder %s88, %s89
    %p101 = scmp.eq.s32.totalorder %s16, 1
    %p102 = por %p100, %p101
    %p104 = scmp.ne.s32.totalorder %s89, %s103
    %p105 = scmp.eq.s32.totalorder %s16, 0
    %p106 = por %p104, %p105
    %s107 = ssub.s32 %s10, %s17
    %p108 = scmp.eq.s32.totalorder %s107, 0
    %s110 = sadd.s32 %s109, 1
    %s111 = scalar_select %p108, %s109, %s110
    %p114 = pneg %p108
    %p115 = scmp.eq.s32.totalorder %s10, 1
    %p116 = por %p114, %p115
    %p117 = scmp.ne.s32.totalorder %s109, %s112
    %p118 = scmp.eq.s32.totalorder %s10, 0
    %p119 = por %p117, %p118
    %p120 = scmp.ne.s32.totalorder %s109, %s112
    %p121 = scmp.eq.s32.totalorder %s15, 1
    %p122 = por %p120, %p121
    %p123 = scmp.ne.s32.totalorder %s112, %s113
    %p124 = scmp.eq.s32.totalorder %s15, 0
    %p125 = por %p123, %p124
    %p126 = scmp.ne.s32.totalorder %s112, %s113
    %p127 = scmp.eq.s32.totalorder %s16, 1
    %p128 = por %p126, %p127
    %p130 = scmp.ne.s32.totalorder %s113, %s129
    %p131 = scmp.eq.s32.totalorder %s16, 0
    %p132 = por %p130, %p131
    %p133 = scmp.le.s32.totalorder 1, %s10
    %p134 = scmp.lt.s32.totalorder %s10, 3
    %p135 = pnand %p133, %p134
    %p136 = pneg %p135
    // Predicated region
    $region9: #{_lambda_.46} parent=5 // pred_check
      _
    $region10: #{_lambda_.46} parent=5 // pred_check_branch
      %138 = sbr.rel (%p135) target = $region12
    $region11: #{_lambda_.46} parent=5 // pred_region
      %s139 = ssub.s32 %s10, 1
      // Predicated region
      $region13: #{_lambda_.46} parent=11 // pred_check
        %p140 = pneg %p57
      $region14: #{_lambda_.46} parent=11 // pred_check_branch
        %142 = sbr.rel (%p140) target = $region16
      $region15: #{_lambda_.46} parent=11 // pred_region
        _
      $region16: #{_lambda_.46} parent=11 // pred_fallthru
        _
      // Predicated region
      $region17: #{_lambda_.46} parent=11 // pred_check
        %p143 = pneg %p78
      $region18: #{_lambda_.46} parent=11 // pred_check_branch
        %145 = sbr.rel (%p143) target = $region20
      $region19: #{_lambda_.46} parent=11 // pred_region
        _
      $region20: #{_lambda_.46} parent=11 // pred_fallthru
        _
      // Predicated region
      $region21: #{_lambda_.46} parent=11 // pred_check
        %p146 = pneg %p99
      $region22: #{_lambda_.46} parent=11 // pred_check_branch
        %148 = sbr.rel (%p146) target = $region24
      $region23: #{_lambda_.46} parent=11 // pred_region
        _
      $region24: #{_lambda_.46} parent=11 // pred_fallthru
        _
    $region12: #{_lambda_.46} parent=5 // pred_fallthru
      _
    %p149 = scmp.lt.s32.totalorder %s10, 2
    // Predicated region
    $region25: #{_lambda_.46} parent=5 // pred_check
      %p150 = pneg %p149
    $region26: #{_lambda_.46} parent=5 // pred_check_branch
      %152 = sbr.rel (%p150) target = $region28
    $region27: #{_lambda_.46} parent=5 // pred_region
      // Predicated region
      $region29: #{_lambda_.46} parent=27 // pred_check
        %p153 = pneg %p30
      $region30: #{_lambda_.46} parent=27 // pred_check_branch
        %155 = sbr.rel (%p153) target = $region32
      $region31: #{_lambda_.46} parent=27 // pred_region
        %s156 = smul.u32 32, %s10
        %p157 = scmp.lt.s32.totalorder %s156, 63
        %s158 = scalar_select %p157, %s156, 63
        %s159 = smul.addr %s158, 4
        %s160 = scalar_lea.vmem %s0, %s159
        %s161 = smul.u32 32, %s10
      $region32: #{_lambda_.46} parent=27 // pred_fallthru
        _
    $region28: #{_lambda_.46} parent=5 // pred_fallthru
      _
    %p162 = scmp.le.s32.totalorder 1, %s10
    %p163 = scmp.lt.s32.totalorder %s10, 3
    %p164 = pnand %p162, %p163
    %p165 = pneg %p164
    // Predicated region
    $region33: #{_lambda_.46} parent=5 // pred_check
      _
    $region34: #{_lambda_.46} parent=5 // pred_check_branch
      %167 = sbr.rel (%p164) target = $region36
    $region35: #{_lambda_.46} parent=5 // pred_region
      %s168 = ssub.s32 %s10, 1
      %s169 = smul.u32 32, %s15
      %p170 = scmp.lt.s32.totalorder %s169, 63
      %s171 = scalar_select %p170, %s169, 63
      %s172 = smul.addr %s171, 4
      %s173 = scalar_lea.vmem %s0, %s172
      %p174 = pneg %p36
      %p175 = pneg %p33
      %p176 = pneg %p57
      %p177 = pneg %p54
      %p178 = pneg %p78
      %p179 = pneg %p75
      %p180 = pneg %p99
      %p181 = pneg %p96
      %p182 = pneg %p125
      %p183 = pneg %p122
      %s184 = smul.u32 32, %s15
      %p185 = scmp.lt.s32.totalorder %s184, 63
      %s186 = scalar_select %p185, %s184, 63
      %s187 = smul.addr %s186, 8
      %s188 = scalar_lea.vmem %s4, %s187
      %s189 = smul.u32 32, %s15
      %p190 = scmp.lt.s32.totalorder %s189, 63
      %s191 = scalar_select %p190, %s189, 63
      %s192 = smul.addr %s191, 4
      %s193 = scalar_lea.vmem %s0, %s192
      %s194 = smul.u32 32, %s15
      %s195 = smul.u32 32, %s15
      %p196 = scmp.lt.s32.totalorder %s195, 63
      %s197 = scalar_select %p196, %s195, 63
      %s198 = smul.addr %s197, 8
      %s199 = scalar_lea.vmem %s4, %s198
      %s200 = smul.u32 32, %s15
      %v202 = vld [vmem:[%s193] sm:$0xf]
      %v203 = vld [vmem:[%s193 + $0x4] sm:$0xf]
      %v204 = vld [vmem:[%s193 + $0x8] sm:$0xf]
      %v205 = vld [vmem:[%s193 + $0xc] sm:$0xf]
      %v206 = vld [vmem:[%s193 + $0x10] sm:$0xf]
      %v207 = vld [vmem:[%s193 + $0x14] sm:$0xf]
      %v208 = vld [vmem:[%s193 + $0x18] sm:$0xf]
      %v209 = vld [vmem:[%s193 + $0x1c] sm:$0xf]
      %v210 = vld [vmem:[%s193 + $0x20] sm:$0xf]
      %v211 = vld [vmem:[%s193 + $0x24] sm:$0xf]
      %v212 = vld [vmem:[%s193 + $0x28] sm:$0xf]
      %v213 = vld [vmem:[%s193 + $0x2c] sm:$0xf]
      %v214 = vld [vmem:[%s193 + $0x30] sm:$0xf]
      %v215 = vld [vmem:[%s193 + $0x34] sm:$0xf]
      %v216 = vld [vmem:[%s193 + $0x38] sm:$0xf]
      %v217 = vld [vmem:[%s193 + $0x3c] sm:$0xf]
      %v218 = vld [vmem:[%s193 + $0x40] sm:$0xf]
      %v219 = vld [vmem:[%s193 + $0x44] sm:$0xf]
      %v220 = vld [vmem:[%s193 + $0x48] sm:$0xf]
      %v221 = vld [vmem:[%s193 + $0x4c] sm:$0xf]
      %v222 = vld [vmem:[%s193 + $0x50] sm:$0xf]
      %v223 = vld [vmem:[%s193 + $0x54] sm:$0xf]
      %v224 = vld [vmem:[%s193 + $0x58] sm:$0xf]
      %v225 = vld [vmem:[%s193 + $0x5c] sm:$0xf]
      %v226 = vld [vmem:[%s193 + $0x60] sm:$0xf]
      %v227 = vld [vmem:[%s193 + $0x64] sm:$0xf]
      %v228 = vld [vmem:[%s193 + $0x68] sm:$0xf]
      %v229 = vld [vmem:[%s193 + $0x6c] sm:$0xf]
      %v230 = vld [vmem:[%s193 + $0x70] sm:$0xf]
      %v231 = vld [vmem:[%s193 + $0x74] sm:$0xf]
      %v232 = vld [vmem:[%s193 + $0x78] sm:$0xf]
      %v233 = vld [vmem:[%s193 + $0x7c] sm:$0xf]
      %v234 = vld [vmem:[%s1] sm:$0xf]
      %v235 = vld [vmem:[%s1 + $0x4] sm:$0xf]
      %v236 = vld [vmem:[%s1 + $0x8] sm:$0xf]
      %v237 = vld [vmem:[%s1 + $0xc] sm:$0xf]
      %v238 = vld [vmem:[%s1 + $0x10] sm:$0xf]
      %v239 = vld [vmem:[%s1 + $0x14] sm:$0xf]
      %v240 = vld [vmem:[%s1 + $0x18] sm:$0xf]
      %v241 = vld [vmem:[%s1 + $0x1c] sm:$0xf]
      %v274 = vunpack.c.l.b16 %v202
      %v275 = vunpack.c.l.b16 %v203
      %v276 = vunpack.c.l.b16 %v204
      %v277 = vunpack.c.l.b16 %v205
      %v278 = vunpack.c.l.b16 %v206
      %v279 = vunpack.c.l.b16 %v207
      %v280 = vunpack.c.l.b16 %v208
      %v281 = vunpack.c.l.b16 %v209
      %v282 = vunpack.c.l.b16 %v210
      %v283 = vunpack.c.l.b16 %v211
      %v284 = vunpack.c.l.b16 %v212
      %v285 = vunpack.c.l.b16 %v213
      %v286 = vunpack.c.l.b16 %v214
      %v287 = vunpack.c.l.b16 %v215
      %v288 = vunpack.c.l.b16 %v216
      %v289 = vunpack.c.l.b16 %v217
      %v290 = vunpack.c.l.b16 %v218
      %v291 = vunpack.c.l.b16 %v219
      %v292 = vunpack.c.l.b16 %v220
      %v293 = vunpack.c.l.b16 %v221
      %v294 = vunpack.c.l.b16 %v222
      %v295 = vunpack.c.l.b16 %v223
      %v296 = vunpack.c.l.b16 %v224
      %v297 = vunpack.c.l.b16 %v225
      %v298 = vunpack.c.l.b16 %v226
      %v299 = vunpack.c.l.b16 %v227
      %v300 = vunpack.c.l.b16 %v228
      %v301 = vunpack.c.l.b16 %v229
      %v302 = vunpack.c.l.b16 %v230
      %v303 = vunpack.c.l.b16 %v231
      %v304 = vunpack.c.l.b16 %v232
      %v305 = vunpack.c.l.b16 %v233
      %v306 = vpack.c.b16 %v275, %v274
      %v307 = vpack.c.b16 %v277, %v276
      %v308 = vpack.c.b16 %v279, %v278
      %v309 = vpack.c.b16 %v281, %v280
      %v310 = vpack.c.b16 %v283, %v282
      %v311 = vpack.c.b16 %v285, %v284
      %v312 = vpack.c.b16 %v287, %v286
      %v313 = vpack.c.b16 %v289, %v288
      %v314 = vpack.c.b16 %v291, %v290
      %v315 = vpack.c.b16 %v293, %v292
      %v316 = vpack.c.b16 %v295, %v294
      %v317 = vpack.c.b16 %v297, %v296
      %v318 = vpack.c.b16 %v299, %v298
      %v319 = vpack.c.b16 %v301, %v300
      %v320 = vpack.c.b16 %v303, %v302
      %v321 = vpack.c.b16 %v305, %v304
      %v330 = vunpack.c.l.b16 %v234
      %v331 = vunpack.c.l.b16 %v235
      %v332 = vunpack.c.l.b16 %v236
      %v333 = vunpack.c.l.b16 %v237
      %v334 = vunpack.c.l.b16 %v238
      %v335 = vunpack.c.l.b16 %v239
      %v336 = vunpack.c.l.b16 %v240
      %v337 = vunpack.c.l.b16 %v241
      %v338 = vpack.c.b16 %v331, %v330
      %v339 = vpack.c.b16 %v333, %v332
      %v340 = vpack.c.b16 %v335, %v334
      %v341 = vpack.c.b16 %v337, %v336
      %vm346 = vcmask 523264
      %v348 = vsel %vm346, %v306, 0
      %v351 = vsel %vm346, %v307, 0
      %v354 = vsel %vm346, %v308, 0
      %v357 = vsel %vm346, %v309, 0
      %v360 = vsel %vm346, %v310, 0
      %v363 = vsel %vm346, %v311, 0
      %v366 = vsel %vm346, %v312, 0
      %v369 = vsel %vm346, %v313, 0
      %v372 = vsel %vm346, %v314, 0
      %v375 = vsel %vm346, %v315, 0
      %v378 = vsel %vm346, %v316, 0
      %v381 = vsel %vm346, %v317, 0
      %v384 = vsel %vm346, %v318, 0
      %v387 = vsel %vm346, %v319, 0
      %v390 = vsel %vm346, %v320, 0
      %v393 = vsel %vm346, %v321, 0
      %395 = vmatprep.subr.bf16.mxu0 0
      %396 = vmatpush1.bf16.msra.mxu0 %v338
      %397 = vmatprep.subr.bf16.mxu0 0
      %398 = vmatpush1.bf16.msra.mxu0 %v339
      %399 = vmatprep.subr.bf16.mxu0 0
      %400 = vmatpush1.bf16.msra.mxu0 %v340
      %401 = vmatprep.subr.bf16.mxu0 0
      %402 = vmatpush1.bf16.msra.mxu0 %v341
      %403 = vmatprep.subr.bf16.mxu0 0
      %404 = vmatpush1.bf16.msra.mxu0 0
      %405 = vmatprep.subr.bf16.mxu0 0
      %406 = vmatpush1.bf16.msra.mxu0 0
      %407 = vmatprep.subr.bf16.mxu0 0
      %408 = vmatpush1.bf16.msra.mxu0 0
      %409 = vmatprep.subr.bf16.mxu0 0
      %410 = vmatpush1.bf16.msra.mxu0 0
      %411 = vmatprep.subr.bf16.mxu0 0
      %412 = vmatpush1.bf16.msra.mxu0 0
      %413 = vmatprep.subr.bf16.mxu0 0
      %414 = vmatpush1.bf16.msra.mxu0 0
      %415 = vmatprep.subr.bf16.mxu0 0
      %416 = vmatpush1.bf16.msra.mxu0 0
      %417 = vmatprep.subr.bf16.mxu0 0
      %418 = vmatpush1.bf16.msra.mxu0 0
      %419 = vmatprep.subr.bf16.mxu0 0
      %420 = vmatpush1.bf16.msra.mxu0 0
      %421 = vmatprep.subr.bf16.mxu0 0
      %422 = vmatpush1.bf16.msra.mxu0 0
      %423 = vmatprep.subr.bf16.mxu0 0
      %424 = vmatpush1.bf16.msra.mxu0 0
      %425 = vmatprep.subr.bf16.mxu0 0
      %426 = vmatpush1.bf16.msra.mxu0 0
      %427 = vmatprep.mubr.bf16.mxu0 0
      %428 = vmatmul.mubr.bf16.gmra.mrb[0].mxu0 %v348
      %v429 = vpop.f32.mrb[0].mxu0
      %v430 = vadd.f32 0.0, %v429
      %v431 = vpop.f32.mrb[0].mxu0
      %v432 = vpop.f32.mrb[0].mxu0
      %v433 = vadd.f32 0.0, %v432
      %v434 = vpop.f32.mrb[0].mxu0
      %435 = vmatprep.mubr.bf16.mxu0 0
      %436 = vmatmul.mubr.bf16.gmra.mrb[0].mxu0 %v351
      %v437 = vpop.f32.mrb[0].mxu0
      %v438 = vadd.f32 0.0, %v437
      %v439 = vpop.f32.mrb[0].mxu0
      %v440 = vpop.f32.mrb[0].mxu0
      %v441 = vadd.f32 0.0, %v440
      %v442 = vpop.f32.mrb[0].mxu0
      %443 = vmatprep.mubr.bf16.mxu0 0
      %444 = vmatmul.mubr.bf16.gmra.mrb[0].mxu0 %v354
      %v445 = vpop.f32.mrb[0].mxu0
      %v446 = vadd.f32 0.0, %v445
      %v447 = vpop.f32.mrb[0].mxu0
      %v448 = vpop.f32.mrb[0].mxu0
      %v449 = vadd.f32 0.0, %v448
      %v450 = vpop.f32.mrb[0].mxu0
      %451 = vmatprep.mubr.bf16.mxu0 0
      %452 = vmatmul.mubr.bf16.gmra.mrb[0].mxu0 %v357
      %v453 = vpop.f32.mrb[0].mxu0
      %v454 = vadd.f32 0.0, %v453
      %v455 = vpop.f32.mrb[0].mxu0
      %v456 = vpop.f32.mrb[0].mxu0
      %v457 = vadd.f32 0.0, %v456
      %v458 = vpop.f32.mrb[0].mxu0
      %459 = vmatprep.mubr.bf16.mxu0 0
      %460 = vmatmul.mubr.bf16.gmra.mrb[0].mxu0 %v360
      %v461 = vpop.f32.mrb[0].mxu0
      %v462 = vadd.f32 0.0, %v461
      %v463 = vpop.f32.mrb[0].mxu0
      %v464 = vpop.f32.mrb[0].mxu0
      %v465 = vadd.f32 0.0, %v464
      %v466 = vpop.f32.mrb[0].mxu0
      %467 = vmatprep.mubr.bf16.mxu0 0
      %468 = vmatmul.mubr.bf16.gmra.mrb[0].mxu0 %v363
      %v469 = vpop.f32.mrb[0].mxu0
      %v470 = vadd.f32 0.0, %v469
      %v471 = vpop.f32.mrb[0].mxu0
      %v472 = vpop.f32.mrb[0].mxu0
      %v473 = vadd.f32 0.0, %v472
      %v474 = vpop.f32.mrb[0].mxu0
      %475 = vmatprep.mubr.bf16.mxu0 0
      %476 = vmatmul.mubr.bf16.gmra.mrb[0].mxu0 %v366
      %v477 = vpop.f32.mrb[0].mxu0
      %v478 = vadd.f32 0.0, %v477
      %v479 = vpop.f32.mrb[0].mxu0
      %v480 = vpop.f32.mrb[0].mxu0
      %v481 = vadd.f32 0.0, %v480
      %v482 = vpop.f32.mrb[0].mxu0
      %483 = vmatprep.mubr.bf16.mxu0 0
      %484 = vmatmul.mubr.bf16.gmra.mrb[0].mxu0 %v369
      %v485 = vpop.f32.mrb[0].mxu0
      %v486 = vadd.f32 0.0, %v485
      %v487 = vpop.f32.mrb[0].mxu0
      %v488 = vpop.f32.mrb[0].mxu0
      %v489 = vadd.f32 0.0, %v488
      %v490 = vpop.f32.mrb[0].mxu0
      %491 = vmatprep.mubr.bf16.mxu0 0
      %492 = vmatmul.mubr.bf16.gmra.mrb[0].mxu0 %v372
      %v493 = vpop.f32.mrb[0].mxu0
      %v494 = vadd.f32 0.0, %v493
      %v495 = vpop.f32.mrb[0].mxu0
      %v496 = vpop.f32.mrb[0].mxu0
      %v497 = vadd.f32 0.0, %v496
      %v498 = vpop.f32.mrb[0].mxu0
      %499 = vmatprep.mubr.bf16.mxu0 0
      %500 = vmatmul.mubr.bf16.gmra.mrb[0].mxu0 %v375
      %v501 = vpop.f32.mrb[0].mxu0
      %v502 = vadd.f32 0.0, %v501
      %v503 = vpop.f32.mrb[0].mxu0
      %v504 = vpop.f32.mrb[0].mxu0
      %v505 = vadd.f32 0.0, %v504
      %v506 = vpop.f32.mrb[0].mxu0
      %507 = vmatprep.mubr.bf16.mxu0 0
      %508 = vmatmul.mubr.bf16.gmra.mrb[0].mxu0 %v378
      %v509 = vpop.f32.mrb[0].mxu0
      %v510 = vadd.f32 0.0, %v509
      %v511 = vpop.f32.mrb[0].mxu0
      %v512 = vpop.f32.mrb[0].mxu0
      %v513 = vadd.f32 0.0, %v512
      %v514 = vpop.f32.mrb[0].mxu0
      %515 = vmatprep.mubr.bf16.mxu0 0
      %516 = vmatmul.mubr.bf16.gmra.mrb[0].mxu0 %v381
      %v517 = vpop.f32.mrb[0].mxu0
      %v518 = vadd.f32 0.0, %v517
      %v519 = vpop.f32.mrb[0].mxu0
      %v520 = vpop.f32.mrb[0].mxu0
      %v521 = vadd.f32 0.0, %v520
      %v522 = vpop.f32.mrb[0].mxu0
      %523 = vmatprep.mubr.bf16.mxu0 0
      %524 = vmatmul.mubr.bf16.gmra.mrb[0].mxu0 %v384
      %v525 = vpop.f32.mrb[0].mxu0
      %v526 = vadd.f32 0.0, %v525
      %v527 = vpop.f32.mrb[0].mxu0
      %v528 = vpop.f32.mrb[0].mxu0
      %v529 = vadd.f32 0.0, %v528
      %v530 = vpop.f32.mrb[0].mxu0
      %531 = vmatprep.mubr.bf16.mxu0 0
      %532 = vmatmul.mubr.bf16.gmra.mrb[0].mxu0 %v387
      %v533 = vpop.f32.mrb[0].mxu0
      %v534 = vadd.f32 0.0, %v533
      %v535 = vpop.f32.mrb[0].mxu0
      %v536 = vpop.f32.mrb[0].mxu0
      %v537 = vadd.f32 0.0, %v536
      %v538 = vpop.f32.mrb[0].mxu0
      %539 = vmatprep.mubr.bf16.mxu0 0
      %540 = vmatmul.mubr.bf16.gmra.mrb[0].mxu0 %v390
      %v541 = vpop.f32.mrb[0].mxu0
      %v542 = vadd.f32 0.0, %v541
      %v543 = vpop.f32.mrb[0].mxu0
      %v544 = vpop.f32.mrb[0].mxu0
      %v545 = vadd.f32 0.0, %v544
      %v546 = vpop.f32.mrb[0].mxu0
      %547 = vmatprep.mubr.bf16.mxu0 0
      %548 = vmatmul.mubr.bf16.gmra.mrb[0].mxu0 %v393
      %v549 = vpop.f32.mrb[0].mxu0
      %v550 = vadd.f32 0.0, %v549
      %v551 = vpop.f32.mrb[0].mxu0
      %v552 = vpop.f32.mrb[0].mxu0
      %v553 = vadd.f32 0.0, %v552
      %v554 = vpop.f32.mrb[0].mxu0
      %555 = vdwg.mxu0
      %v556 = vld [vmem:[%s2] sm:$0x1]
      %v558 = vlaneseq
      %v559 = vshrl.u32 %v558, 7
      %v560 = vsub.s32 0, %v559
      %v561 = vrot.slane %v556, %v560
      %v563 = vmul.f32 %v430, %v561
      %v564 = vmul.f32 %v433, %v561
      %v565 = vmul.f32 %v438, %v561
      %v566 = vmul.f32 %v441, %v561
      %v567 = vmul.f32 %v446, %v561
      %v568 = vmul.f32 %v449, %v561
      %v569 = vmul.f32 %v454, %v561
      %v570 = vmul.f32 %v457, %v561
      %v571 = vmul.f32 %v462, %v561
      %v572 = vmul.f32 %v465, %v561
      %v573 = vmul.f32 %v470, %v561
      %v574 = vmul.f32 %v473, %v561
      %v575 = vmul.f32 %v478, %v561
      %v576 = vmul.f32 %v481, %v561
      %v577 = vmul.f32 %v486, %v561
      %v578 = vmul.f32 %v489, %v561
      %v579 = vmul.f32 %v494, %v561
      %v580 = vmul.f32 %v497, %v561
      %v581 = vmul.f32 %v502, %v561
      %v582 = vmul.f32 %v505, %v561
      %v583 = vmul.f32 %v510, %v561
      %v584 = vmul.f32 %v513, %v561
      %v585 = vmul.f32 %v518, %v561
      %v586 = vmul.f32 %v521, %v561
      %v587 = vmul.f32 %v526, %v561
      %v588 = vmul.f32 %v529, %v561
      %v589 = vmul.f32 %v534, %v561
      %v590 = vmul.f32 %v537, %v561
      %v591 = vmul.f32 %v542, %v561
      %v592 = vmul.f32 %v545, %v561
      %v593 = vmul.f32 %v550, %v561
      %v594 = vmul.f32 %v553, %v561
      %v595 = vld [vmem:[%s3] sm:$0x1]
      %v597 = vlaneseq
      %v598 = vshrl.u32 %v597, 7
      %v599 = vsub.s32 0, %v598
      %v600 = vrot.slane %v595, %v599
      %v602 = vadd.f32 %v563, %v600
      %v603 = vadd.f32 %v564, %v600
      %v604 = vadd.f32 %v565, %v600
      %v605 = vadd.f32 %v566, %v600
      %v606 = vadd.f32 %v567, %v600
      %v607 = vadd.f32 %v568, %v600
      %v608 = vadd.f32 %v569, %v600
      %v609 = vadd.f32 %v570, %v600
      %v610 = vadd.f32 %v571, %v600
      %v611 = vadd.f32 %v572, %v600
      %v612 = vadd.f32 %v573, %v600
      %v613 = vadd.f32 %v574, %v600
      %v614 = vadd.f32 %v575, %v600
      %v615 = vadd.f32 %v576, %v600
      %v616 = vadd.f32 %v577, %v600
      %v617 = vadd.f32 %v578, %v600
      %v618 = vadd.f32 %v579, %v600
      %v619 = vadd.f32 %v580, %v600
      %v620 = vadd.f32 %v581, %v600
      %v621 = vadd.f32 %v582, %v600
      %v622 = vadd.f32 %v583, %v600
      %v623 = vadd.f32 %v584, %v600
      %v624 = vadd.f32 %v585, %v600
      %v625 = vadd.f32 %v586, %v600
      %v626 = vadd.f32 %v587, %v600
      %v627 = vadd.f32 %v588, %v600
      %v628 = vadd.f32 %v589, %v600
      %v629 = vadd.f32 %v590, %v600
      %v630 = vadd.f32 %v591, %v600
      %v631 = vadd.f32 %v592, %v600
      %v632 = vadd.f32 %v593, %v600
      %v633 = vadd.f32 %v594, %v600
      %v634 = vtanh.pop %v602
      %v635 = vtanh.pop %v603
      %v636 = vtanh.pop %v604
      %v637 = vtanh.pop %v605
      %v638 = vtanh.pop %v606
      %v639 = vtanh.pop %v607
      %v640 = vtanh.pop %v608
      %v641 = vtanh.pop %v609
      %v642 = vtanh.pop %v610
      %v643 = vtanh.pop %v611
      %v644 = vtanh.pop %v612
      %v645 = vtanh.pop %v613
      %v646 = vtanh.pop %v614
      %v647 = vtanh.pop %v615
      %v648 = vtanh.pop %v616
      %v649 = vtanh.pop %v617
      %v650 = vtanh.pop %v618
      %v651 = vtanh.pop %v619
      %v652 = vtanh.pop %v620
      %v653 = vtanh.pop %v621
      %v654 = vtanh.pop %v622
      %v655 = vtanh.pop %v623
      %v656 = vtanh.pop %v624
      %v657 = vtanh.pop %v625
      %v658 = vtanh.pop %v626
      %v659 = vtanh.pop %v627
      %v660 = vtanh.pop %v628
      %v661 = vtanh.pop %v629
      %v662 = vtanh.pop %v630
      %v663 = vtanh.pop %v631
      %v664 = vtanh.pop %v632
      %v665 = vtanh.pop %v633
      %666 = vst [vmem:[%s199] sm:$0xff] %v634
      %667 = vst [vmem:[%s199 + $0x8] sm:$0xff] %v635
      %668 = vst [vmem:[%s199 + $0x10] sm:$0xff] %v636
      %669 = vst [vmem:[%s199 + $0x18] sm:$0xff] %v637
      %670 = vst [vmem:[%s199 + $0x20] sm:$0xff] %v638
      %671 = vst [vmem:[%s199 + $0x28] sm:$0xff] %v639
      %672 = vst [vmem:[%s199 + $0x30] sm:$0xff] %v640
      %673 = vst [vmem:[%s199 + $0x38] sm:$0xff] %v641
      %674 = vst [vmem:[%s199 + $0x40] sm:$0xff] %v642
      %675 = vst [vmem:[%s199 + $0x48] sm:$0xff] %v643
      %676 = vst [vmem:[%s199 + $0x50] sm:$0xff] %v644
      %677 = vst [vmem:[%s199 + $0x58] sm:$0xff] %v645
      %678 = vst [vmem:[%s199 + $0x60] sm:$0xff] %v646
      %679 = vst [vmem:[%s199 + $0x68] sm:$0xff] %v647
      %680 = vst [vmem:[%s199 + $0x70] sm:$0xff] %v648
      %681 = vst [vmem:[%s199 + $0x78] sm:$0xff] %v649
      %682 = vst [vmem:[%s199 + $0x80] sm:$0xff] %v650
      %683 = vst [vmem:[%s199 + $0x88] sm:$0xff] %v651
      %684 = vst [vmem:[%s199 + $0x90] sm:$0xff] %v652
      %685 = vst [vmem:[%s199 + $0x98] sm:$0xff] %v653
      %686 = vst [vmem:[%s199 + $0xa0] sm:$0xff] %v654
      %687 = vst [vmem:[%s199 + $0xa8] sm:$0xff] %v655
      %688 = vst [vmem:[%s199 + $0xb0] sm:$0xff] %v656
      %689 = vst [vmem:[%s199 + $0xb8] sm:$0xff] %v657
      %690 = vst [vmem:[%s199 + $0xc0] sm:$0xff] %v658
      %691 = vst [vmem:[%s199 + $0xc8] sm:$0xff] %v659
      %692 = vst [vmem:[%s199 + $0xd0] sm:$0xff] %v660
      %693 = vst [vmem:[%s199 + $0xd8] sm:$0xff] %v661
      %694 = vst [vmem:[%s199 + $0xe0] sm:$0xff] %v662
      %695 = vst [vmem:[%s199 + $0xe8] sm:$0xff] %v663
      %696 = vst [vmem:[%s199 + $0xf0] sm:$0xff] %v664
      %697 = vst [vmem:[%s199 + $0xf8] sm:$0xff] %v665
      %s698 = smul.u32 32, %s15
      %p699 = scmp.lt.s32.totalorder %s698, 63
      %s700 = scalar_select %p699, %s698, 63
      %s701 = smul.addr %s700, 8
      %s702 = scalar_lea.vmem %s4, %s701
      // Predicated region
      $region37: #{_lambda_.46} parent=35 // pred_check
        %p703 = pneg %p122
      $region38: #{_lambda_.46} parent=35 // pred_check_branch
        %705 = sbr.rel (%p703) target = $region40
      $region39: #{_lambda_.46} parent=35 // pred_region
        %s706 = smul.u32 32, %s15
      $region40: #{_lambda_.46} parent=35 // pred_fallthru
        _
    $region36: #{_lambda_.46} parent=5 // pred_fallthru
      _
    %p707 = scmp.le.s32.totalorder 2, %s10
    // Predicated region
    $region41: #{_lambda_.46} parent=5 // pred_check
      %p708 = pneg %p707
    $region42: #{_lambda_.46} parent=5 // pred_check_branch
      %710 = sbr.rel (%p708) target = $region44
    $region43: #{_lambda_.46} parent=5 // pred_region
      %s711 = ssub.s32 %s10, 2
      // Predicated region
      $region45: #{_lambda_.46} parent=43 // pred_check
        %p712 = pneg %p128
      $region46: #{_lambda_.46} parent=43 // pred_check_branch
        %714 = sbr.rel (%p712) target = $region48
      $region47: #{_lambda_.46} parent=43 // pred_region
        %s715 = smul.u32 32, %s16
        %p716 = scmp.lt.s32.totalorder %s715, 63
        %s717 = scalar_select %p716, %s715, 63
        %s718 = smul.addr %s717, 8
        %s719 = scalar_lea.vmem %s4, %s718
      $region48: #{_lambda_.46} parent=43 // pred_fallthru
        _
    $region44: #{_lambda_.46} parent=5 // pred_fallthru
      _
  $region6: #{_lambda_.46} parent=0 // loop_footer
    %s14 = sadd.s32 1, %s10
  $region7: #{_lambda_.46} parent=0 // loop_footer_branch
    %9 = sbr.rel target = $region3
  $region8: #{_lambda_.46} parent=0 // loop_exit
    _

</llo_original>
